<compile_context>
chip_gen: v5e
topology: v5e:2x2
jax: 0.10.0
libtpu: 0.0.40
codegen_flags: <defaults>
</compile_context>

<pallas_src>
import jax
import jax.numpy as jnp
import numpy as np
from jax.experimental import pallas as pl
from jax.experimental.pallas import tpu as pltpu

# Small compat shim (class name changed across JAX versions).
_CompilerParams = getattr(pltpu, "CompilerParams", None) or getattr(
    pltpu, "TPUCompilerParams")

C = 4            # channels after conv1 / conv2
S = 16           # spatial size implied by Linear(64, n_actions)
H1 = S // 2      # 8 : spatial size after pool1
H2 = H1 // 2     # 4 : spatial size after pool2
WCOL = 2 * H2 - 1  # 7 : width of the not-yet-downsampled pool-2 row


def _make_dqn_kernel(n_actions):
    def kernel(xpe_ref, xpo_ref, w1_ref, b1_ref, w2_ref, b2_ref,
               wl_ref, bl_ref, out_ref):
        f32 = jnp.float32
        Bp = out_ref.shape[-1]

        # ----- Conv1 taps: all contiguous loads.  The stride-2 even/odd column
        # split of the (left-zero-padded) W axis was done on the host, so the
        # kernel never emits a strided / concat-based sublane gather here.
        A0 = xpe_ref[0:S, 0:H1, :]           # padded cols {0,2,...,14}, rows h
        A1 = xpe_ref[1:S + 1, 0:H1, :]       # same cols, rows h+1
        B0 = xpo_ref[0:S, :, :]              # padded cols {1,3,...,15}, rows h
        B1 = xpo_ref[1:S + 1, :, :]
        C0 = xpe_ref[0:S, 1:H1 + 1, :]       # padded cols {2,4,...,16}, rows h
        C1 = xpe_ref[1:S + 1, 1:H1 + 1, :]

        # ----- Conv1 -> MaxPool(2,2) -> ReLU, fused per output channel --------
        p1 = []
        for co in range(C):
            w00 = w1_ref[co * 4 + 0]
            w01 = w1_ref[co * 4 + 1]
            w10 = w1_ref[co * 4 + 2]
            w11 = w1_ref[co * 4 + 3]
            # even / odd conv1 output columns; their max == the W-direction pool.
            c_even = w00 * A0 + w01 * B0 + w10 * A1 + w11 * B1   # (16, 8, Bp)
            c_odd = w00 * B0 + w01 * C0 + w10 * B1 + w11 * C1    # (16, 8, Bp)
            pw = jnp.maximum(c_even, c_odd)                      # pool over W
            r = pw.reshape(H1, 2, H1, Bp)                        # leading regroup
            ph = jnp.maximum(r[:, 0], r[:, 1])                   # pool over H
            p1.append(jnp.maximum(ph + b1_ref[co], 0.0))         # (8, 8, Bp)

        # ----- Conv2 shifted taps built in-register (no VMEM pad scratch) ------
        zrow = jnp.zeros((1, H1, Bp), f32)
        zcol = jnp.zeros((H1, 1, Bp), f32)
        t11 = p1
        t10 = [jnp.concatenate([zcol, p[:, 0:H1 - 1, :]], axis=1) for p in p1]
        t01 = [jnp.concatenate([zrow, p[0:H1 - 1, :, :]], axis=0) for p in p1]
        t00 = [jnp.concatenate([zrow, t[0:H1 - 1, :, :]], axis=0) for t in t10]
        taps2 = (t00, t01, t10, t11)                             # index = kh*2+kw

        # ----- Conv2 -> MaxPool over H, fused per output channel ---------------
        rows = []
        for co in range(C):
            acc = None
            for ci in range(C):
                for t in range(4):
                    term = w2_ref[co * 16 + ci * 4 + t] * taps2[t][ci]
                    acc = term if acc is None else acc + term    # (8, 8, Bp)
            rh = acc.reshape(H2, 2, H1, Bp)
            rows.append(jnp.maximum(rh[:, 0], rh[:, 1]) + b2_ref[co])  # (4,8,Bp)
        ph2 = jnp.concatenate(rows, axis=0)                      # (16,8,Bp) r=c*4+h

        # ----- MaxPool over W + ReLU.  The even-column downsample is folded into
        # the Linear weights (odd columns carry zero weight): no sublane gather.
        pw2 = jnp.maximum(ph2[:, 0:WCOL, :], ph2[:, 1:WCOL + 1, :])   # (16,7,Bp)
        p2 = jnp.maximum(pw2, 0.0)

        # ----- Linear(64 -> n_actions); weights pre-broadcast over lanes -------
        wl = wl_ref[...]                                         # (16, nA, 7, Bp)
        acc = wl[0] * p2[0]
        for r in range(1, 16):
            acc = acc + wl[r] * p2[r]                            # (nA, 7, Bp)
        out_ref[...] = jnp.sum(acc, axis=1) + bl_ref[...]        # (nA, Bp)

    return kernel


def dqn_forward(x, params, *, lane_block=256):
    """x: (B, n_observations) flat observations; returns (B, n_actions)."""
    w1, b1, w2, b2, wl, bl = params
    B = x.shape[0]
    n_actions = wl.shape[1]
    s = int(round(x.shape[1] ** 0.5))
    assert s * s == x.shape[1], "n_observations must be a perfect square"
    assert s == S, "Linear(64, n_actions) requires a 16x16 observation grid"

    # Lane-block selection: big blocks amortise the per-grid-step overhead; for
    # tiny batches drop to 128; for batches > 128 guarantee >= 2 grid steps so
    # v7x can shard the "parallel" grid axis across both TensorCores.
    lb = int(lane_block)
    lb = min(lb, max(128, 128 * pl.cdiv(B, 128)))
    if B > 128 and pl.cdiv(B, lb) < 2:
        lb = max(128, 128 * pl.cdiv(pl.cdiv(B, 2), 128))
    nb = pl.cdiv(B, lb)
    Bp = nb * lb

    f32 = jnp.float32
    # Batch -> lanes: (B, n_obs) -> (H, W, B); pad H with one zero row on top
    # (bottom/right conv outputs are dropped by floor-mode pooling anyway).
    xt = jnp.transpose(x.reshape(B, s, s).astype(f32), (1, 2, 0))
    xh = jnp.pad(xt, ((1, 0), (0, 0), (0, Bp - B)))              # (17, 16, Bp)
    # Host-side even/odd column de-interleave of the left-zero-padded W axis:
    #   padded col 2m   -> xpe[:, m]   (m=0 is the zero left-pad column)
    #   padded col 2m+1 -> xpo[:, m]
    zero_col = jnp.zeros((s + 1, 1, Bp), f32)
    xpe = jnp.concatenate([zero_col, xh[:, 1::2, :]], axis=1)    # (17, 9, Bp)
    xpe = jnp.pad(xpe, ((0, 0), (0, 16 - xpe.shape[1]), (0, 0)))  # sublane pad
    xpo = xh[:, 0::2, :]                                         # (17, 8, Bp)

    # Linear weights regrouped on the host: row r=c*4+h, sublane w'=2j carries
    # wl[r*4+j, a]; odd sublanes are zero so the pool-2 W downsample folds into
    # the weight.  Pre-broadcast over lanes to avoid in-kernel lane splats.
    wl4 = wl.astype(f32).reshape(16, H2, n_actions)              # (r, j, a)
    wlm = jnp.zeros((16, n_actions, WCOL), f32)
    wlm = wlm.at[:, :, 0::2].set(jnp.transpose(wl4, (0, 2, 1)))
    wlm = jnp.broadcast_to(wlm[..., None], (16, n_actions, WCOL, lb))
    blv = jnp.broadcast_to(bl.astype(f32).reshape(n_actions, 1), (n_actions, lb))

    smem = pl.BlockSpec(memory_space=pltpu.MemorySpace.SMEM)
    vmem = pl.BlockSpec(memory_space=pltpu.MemorySpace.VMEM)

    out = pl.pallas_call(
        _make_dqn_kernel(n_actions),
        out_shape=jax.ShapeDtypeStruct((n_actions, Bp), jnp.float32),
        grid=(nb,),
        in_specs=[
            pl.BlockSpec((s + 1, 16, lb), lambda i: (0, 0, i)),   # even cols
            pl.BlockSpec((s + 1, 8, lb), lambda i: (0, 0, i)),    # odd cols
            smem, smem, smem, smem,      # conv weights / biases as SMEM scalars
            vmem, vmem,                  # linear weight / bias (lane-broadcast)
        ],
        out_specs=pl.BlockSpec((n_actions, lb), lambda i: (0, i)),
        compiler_params=_CompilerParams(dimension_semantics=("parallel",)),
    )(xpe, xpo,
      w1.astype(f32).reshape(-1), b1.astype(f32),
      w2.astype(f32).reshape(-1), b2.astype(f32),
      wlm, blv)

    return out[:, :B].T                                          # (B, n_actions)


def init_params(key, n_actions):
    ks = jax.random.split(key, 6)

    def u(k, shape, fan_in):
        bound = 1.0 / np.sqrt(fan_in)
        return jax.random.uniform(k, shape, jnp.float32, -bound, bound)

    w1 = u(ks[0], (4, 1, 2, 2), 1 * 2 * 2)          # Conv2d(1, 4, 2)
    b1 = u(ks[1], (4,), 1 * 2 * 2)
    w2 = u(ks[2], (4, 4, 2, 2), 4 * 2 * 2)          # Conv2d(4, 4, 2)
    b2 = u(ks[3], (4,), 4 * 2 * 2)
    wl = u(ks[4], (64, n_actions), 64)              # Linear(64, nA), transposed
    bl = u(ks[5], (n_actions,), 64)
    return (w1, b1, w2, b2, wl, bl)


def ref_forward(x, params):
    # Pure-JAX reference reproducing the PyTorch module (verification only).
    w1, b1, w2, b2, wl, bl = params
    B = x.shape[0]
    s = int(round(x.shape[1] ** 0.5))
    xr = x.reshape(B, 1, s, s).astype(jnp.float32)

    def conv(a, w, b):
        y = jax.lax.conv_general_dilated(
            a, w, window_strides=(1, 1), padding=((1, 1), (1, 1)),
            dimension_numbers=('NCHW', 'OIHW', 'NCHW'),
            precision=jax.lax.Precision.HIGHEST)
        return y + b[None, :, None, None]

    def pool(a):
        return jax.lax.reduce_window(a, -jnp.inf, jax.lax.max,
                                     (1, 1, 2, 2), (1, 1, 2, 2), 'VALID')

    y = jax.nn.relu(pool(conv(xr, w1, b1)))
    y = jax.nn.relu(pool(conv(y, w2, b2)))
    y = y.reshape(B, -1)
    return jnp.dot(y, wl, precision=jax.lax.Precision.HIGHEST) + bl[None, :]


if __name__ == "__main__":
    key = jax.random.PRNGKey(0)
    kx, kp = jax.random.split(key)

    n_observations, n_actions, batch = 256, 4, 2   # sqrt(256)=16 -> Linear in=64
    x = jax.random.normal(kx, (batch, n_observations), jnp.float32)
    params = init_params(kp, n_actions)

    out = dqn_forward(x, params)
    jax.block_until_ready(out)

    ref = ref_forward(x, params)
    np.testing.assert_allclose(np.asarray(out), np.asarray(ref),
                               rtol=1e-4, atol=1e-4)
    print("KERNEL_OK")
</pallas_src>

<mosaic_0001>
module attributes {stable_mosaic.version = 11 : i64} {
  func.func @kernel(%arg0: i32, %arg1: memref<17x16x128xf32, #tpu.memory_space<vmem>>, %arg2: memref<17x8x128xf32, #tpu.memory_space<vmem>>, %arg3: memref<16xf32, #tpu.memory_space<smem>>, %arg4: memref<4xf32, #tpu.memory_space<smem>>, %arg5: memref<64xf32, #tpu.memory_space<smem>>, %arg6: memref<4xf32, #tpu.memory_space<smem>>, %arg7: memref<16x4x7x128xf32, #tpu.memory_space<vmem>>, %arg8: memref<4x128xf32, #tpu.memory_space<vmem>>, %arg9: memref<4x128xf32, #tpu.memory_space<vmem>>) attributes {dimension_semantics = [#tpu.dimension_semantics<parallel>], iteration_bounds = array<i64: 1>, scalar_prefetch = 0 : i64, scratch_operands = 0 : i64, tpu.core_type = #tpu.core_type<tc>, window_params = [{transform_indices = @transform_0, window_bounds = array<i64: 17, 16, 128>}, {transform_indices = @transform_1, window_bounds = array<i64: 17, 8, 128>}, {transform_indices = @transform_2, window_bounds = array<i64: 16>}, {transform_indices = @transform_3, window_bounds = array<i64: 4>}, {transform_indices = @transform_4, window_bounds = array<i64: 64>}, {transform_indices = @transform_5, window_bounds = array<i64: 4>}, {pipeline_mode = #tpu.pipeline_mode<synchronous>, transform_indices = @transform_6, window_bounds = array<i64: 16, 4, 7, 128>}, {pipeline_mode = #tpu.pipeline_mode<synchronous>, transform_indices = @transform_7, window_bounds = array<i64: 4, 128>}, {transform_indices = @transform_8, window_bounds = array<i64: 4, 128>}]} {
    %c0 = arith.constant 0 : index
    %c0_0 = arith.constant 0 : index
    %c0_1 = arith.constant 0 : index
    %0 = vector.load %arg1[%c0, %c0_0, %c0_1] : memref<17x16x128xf32, #tpu.memory_space<vmem>>, vector<16x8x128xf32>
    %c1 = arith.constant 1 : index
    %c0_2 = arith.constant 0 : index
    %c0_3 = arith.constant 0 : index
    %1 = vector.load %arg1[%c1, %c0_2, %c0_3] : memref<17x16x128xf32, #tpu.memory_space<vmem>>, vector<16x8x128xf32>
    %c0_4 = arith.constant 0 : index
    %c0_5 = arith.constant 0 : index
    %c0_6 = arith.constant 0 : index
    %2 = vector.load %arg2[%c0_4, %c0_5, %c0_6] : memref<17x8x128xf32, #tpu.memory_space<vmem>>, vector<16x8x128xf32>
    %c1_7 = arith.constant 1 : index
    %c0_8 = arith.constant 0 : index
    %c0_9 = arith.constant 0 : index
    %3 = vector.load %arg2[%c1_7, %c0_8, %c0_9] : memref<17x8x128xf32, #tpu.memory_space<vmem>>, vector<16x8x128xf32>
    %c0_10 = arith.constant 0 : index
    %c1_11 = arith.constant 1 : index
    %c0_12 = arith.constant 0 : index
    %4 = vector.load %arg1[%c0_10, %c1_11, %c0_12] : memref<17x16x128xf32, #tpu.memory_space<vmem>>, vector<16x8x128xf32>
    %c1_13 = arith.constant 1 : index
    %c1_14 = arith.constant 1 : index
    %c0_15 = arith.constant 0 : index
    %5 = vector.load %arg1[%c1_13, %c1_14, %c0_15] : memref<17x16x128xf32, #tpu.memory_space<vmem>>, vector<16x8x128xf32>
    %c0_16 = arith.constant 0 : index
    %6 = memref.load %arg3[%c0_16] : memref<16xf32, #tpu.memory_space<smem>>
    %c1_17 = arith.constant 1 : index
    %7 = memref.load %arg3[%c1_17] : memref<16xf32, #tpu.memory_space<smem>>
    %c2 = arith.constant 2 : index
    %8 = memref.load %arg3[%c2] : memref<16xf32, #tpu.memory_space<smem>>
    %c3 = arith.constant 3 : index
    %9 = memref.load %arg3[%c3] : memref<16xf32, #tpu.memory_space<smem>>
    %10 = vector.broadcast %6 : f32 to vector<16x8x128xf32>
    %11 = arith.mulf %10, %0 : vector<16x8x128xf32>
    %12 = vector.broadcast %7 : f32 to vector<16x8x128xf32>
    %13 = arith.mulf %12, %2 : vector<16x8x128xf32>
    %14 = arith.addf %11, %13 : vector<16x8x128xf32>
    %15 = vector.broadcast %8 : f32 to vector<16x8x128xf32>
    %16 = arith.mulf %15, %1 : vector<16x8x128xf32>
    %17 = arith.addf %14, %16 : vector<16x8x128xf32>
    %18 = vector.broadcast %9 : f32 to vector<16x8x128xf32>
    %19 = arith.mulf %18, %3 : vector<16x8x128xf32>
    %20 = arith.addf %17, %19 : vector<16x8x128xf32>
    %21 = vector.broadcast %6 : f32 to vector<16x8x128xf32>
    %22 = arith.mulf %21, %2 : vector<16x8x128xf32>
    %23 = vector.broadcast %7 : f32 to vector<16x8x128xf32>
    %24 = arith.mulf %23, %4 : vector<16x8x128xf32>
    %25 = arith.addf %22, %24 : vector<16x8x128xf32>
    %26 = vector.broadcast %8 : f32 to vector<16x8x128xf32>
    %27 = arith.mulf %26, %3 : vector<16x8x128xf32>
    %28 = arith.addf %25, %27 : vector<16x8x128xf32>
    %29 = vector.broadcast %9 : f32 to vector<16x8x128xf32>
    %30 = arith.mulf %29, %5 : vector<16x8x128xf32>
    %31 = arith.addf %28, %30 : vector<16x8x128xf32>
    %32 = arith.maximumf %20, %31 : vector<16x8x128xf32>
    %33 = vector.shape_cast %32 : vector<16x8x128xf32> to vector<8x2x8x128xf32>
    %34 = vector.extract_strided_slice %33 {offsets = [0, 0, 0, 0], sizes = [8, 1, 8, 128], strides = [1, 1, 1, 1]} : vector<8x2x8x128xf32> to vector<8x1x8x128xf32>
    %35 = vector.shape_cast %34 : vector<8x1x8x128xf32> to vector<8x8x128xf32>
    %36 = vector.extract_strided_slice %33 {offsets = [0, 1, 0, 0], sizes = [8, 1, 8, 128], strides = [1, 1, 1, 1]} : vector<8x2x8x128xf32> to vector<8x1x8x128xf32>
    %37 = vector.shape_cast %36 : vector<8x1x8x128xf32> to vector<8x8x128xf32>
    %38 = arith.maximumf %35, %37 : vector<8x8x128xf32>
    %c0_18 = arith.constant 0 : index
    %39 = memref.load %arg4[%c0_18] : memref<4xf32, #tpu.memory_space<smem>>
    %40 = vector.broadcast %39 : f32 to vector<8x8x128xf32>
    %41 = arith.addf %38, %40 : vector<8x8x128xf32>
    %cst = arith.constant 0.000000e+00 : f32
    %42 = vector.broadcast %cst : f32 to vector<8x8x128xf32>
    %43 = arith.maximumf %41, %42 : vector<8x8x128xf32>
    %c4 = arith.constant 4 : index
    %44 = memref.load %arg3[%c4] : memref<16xf32, #tpu.memory_space<smem>>
    %c5 = arith.constant 5 : index
    %45 = memref.load %arg3[%c5] : memref<16xf32, #tpu.memory_space<smem>>
    %c6 = arith.constant 6 : index
    %46 = memref.load %arg3[%c6] : memref<16xf32, #tpu.memory_space<smem>>
    %c7 = arith.constant 7 : index
    %47 = memref.load %arg3[%c7] : memref<16xf32, #tpu.memory_space<smem>>
    %48 = vector.broadcast %44 : f32 to vector<16x8x128xf32>
    %49 = arith.mulf %48, %0 : vector<16x8x128xf32>
    %50 = vector.broadcast %45 : f32 to vector<16x8x128xf32>
    %51 = arith.mulf %50, %2 : vector<16x8x128xf32>
    %52 = arith.addf %49, %51 : vector<16x8x128xf32>
    %53 = vector.broadcast %46 : f32 to vector<16x8x128xf32>
    %54 = arith.mulf %53, %1 : vector<16x8x128xf32>
    %55 = arith.addf %52, %54 : vector<16x8x128xf32>
    %56 = vector.broadcast %47 : f32 to vector<16x8x128xf32>
    %57 = arith.mulf %56, %3 : vector<16x8x128xf32>
    %58 = arith.addf %55, %57 : vector<16x8x128xf32>
    %59 = vector.broadcast %44 : f32 to vector<16x8x128xf32>
    %60 = arith.mulf %59, %2 : vector<16x8x128xf32>
    %61 = vector.broadcast %45 : f32 to vector<16x8x128xf32>
    %62 = arith.mulf %61, %4 : vector<16x8x128xf32>
    %63 = arith.addf %60, %62 : vector<16x8x128xf32>
    %64 = vector.broadcast %46 : f32 to vector<16x8x128xf32>
    %65 = arith.mulf %64, %3 : vector<16x8x128xf32>
    %66 = arith.addf %63, %65 : vector<16x8x128xf32>
    %67 = vector.broadcast %47 : f32 to vector<16x8x128xf32>
    %68 = arith.mulf %67, %5 : vector<16x8x128xf32>
    %69 = arith.addf %66, %68 : vector<16x8x128xf32>
    %70 = arith.maximumf %58, %69 : vector<16x8x128xf32>
    %71 = vector.shape_cast %70 : vector<16x8x128xf32> to vector<8x2x8x128xf32>
    %72 = vector.extract_strided_slice %71 {offsets = [0, 0, 0, 0], sizes = [8, 1, 8, 128], strides = [1, 1, 1, 1]} : vector<8x2x8x128xf32> to vector<8x1x8x128xf32>
    %73 = vector.shape_cast %72 : vector<8x1x8x128xf32> to vector<8x8x128xf32>
    %74 = vector.extract_strided_slice %71 {offsets = [0, 1, 0, 0], sizes = [8, 1, 8, 128], strides = [1, 1, 1, 1]} : vector<8x2x8x128xf32> to vector<8x1x8x128xf32>
    %75 = vector.shape_cast %74 : vector<8x1x8x128xf32> to vector<8x8x128xf32>
    %76 = arith.maximumf %73, %75 : vector<8x8x128xf32>
    %c1_19 = arith.constant 1 : index
    %77 = memref.load %arg4[%c1_19] : memref<4xf32, #tpu.memory_space<smem>>
    %78 = vector.broadcast %77 : f32 to vector<8x8x128xf32>
    %79 = arith.addf %76, %78 : vector<8x8x128xf32>
    %cst_20 = arith.constant 0.000000e+00 : f32
    %80 = vector.broadcast %cst_20 : f32 to vector<8x8x128xf32>
    %81 = arith.maximumf %79, %80 : vector<8x8x128xf32>
    %c8 = arith.constant 8 : index
    %82 = memref.load %arg3[%c8] : memref<16xf32, #tpu.memory_space<smem>>
    %c9 = arith.constant 9 : index
    %83 = memref.load %arg3[%c9] : memref<16xf32, #tpu.memory_space<smem>>
    %c10 = arith.constant 10 : index
    %84 = memref.load %arg3[%c10] : memref<16xf32, #tpu.memory_space<smem>>
    %c11 = arith.constant 11 : index
    %85 = memref.load %arg3[%c11] : memref<16xf32, #tpu.memory_space<smem>>
    %86 = vector.broadcast %82 : f32 to vector<16x8x128xf32>
    %87 = arith.mulf %86, %0 : vector<16x8x128xf32>
    %88 = vector.broadcast %83 : f32 to vector<16x8x128xf32>
    %89 = arith.mulf %88, %2 : vector<16x8x128xf32>
    %90 = arith.addf %87, %89 : vector<16x8x128xf32>
    %91 = vector.broadcast %84 : f32 to vector<16x8x128xf32>
    %92 = arith.mulf %91, %1 : vector<16x8x128xf32>
    %93 = arith.addf %90, %92 : vector<16x8x128xf32>
    %94 = vector.broadcast %85 : f32 to vector<16x8x128xf32>
    %95 = arith.mulf %94, %3 : vector<16x8x128xf32>
    %96 = arith.addf %93, %95 : vector<16x8x128xf32>
    %97 = vector.broadcast %82 : f32 to vector<16x8x128xf32>
    %98 = arith.mulf %97, %2 : vector<16x8x128xf32>
    %99 = vector.broadcast %83 : f32 to vector<16x8x128xf32>
    %100 = arith.mulf %99, %4 : vector<16x8x128xf32>
    %101 = arith.addf %98, %100 : vector<16x8x128xf32>
    %102 = vector.broadcast %84 : f32 to vector<16x8x128xf32>
    %103 = arith.mulf %102, %3 : vector<16x8x128xf32>
    %104 = arith.addf %101, %103 : vector<16x8x128xf32>
    %105 = vector.broadcast %85 : f32 to vector<16x8x128xf32>
    %106 = arith.mulf %105, %5 : vector<16x8x128xf32>
    %107 = arith.addf %104, %106 : vector<16x8x128xf32>
    %108 = arith.maximumf %96, %107 : vector<16x8x128xf32>
    %109 = vector.shape_cast %108 : vector<16x8x128xf32> to vector<8x2x8x128xf32>
    %110 = vector.extract_strided_slice %109 {offsets = [0, 0, 0, 0], sizes = [8, 1, 8, 128], strides = [1, 1, 1, 1]} : vector<8x2x8x128xf32> to vector<8x1x8x128xf32>
    %111 = vector.shape_cast %110 : vector<8x1x8x128xf32> to vector<8x8x128xf32>
    %112 = vector.extract_strided_slice %109 {offsets = [0, 1, 0, 0], sizes = [8, 1, 8, 128], strides = [1, 1, 1, 1]} : vector<8x2x8x128xf32> to vector<8x1x8x128xf32>
    %113 = vector.shape_cast %112 : vector<8x1x8x128xf32> to vector<8x8x128xf32>
    %114 = arith.maximumf %111, %113 : vector<8x8x128xf32>
    %c2_21 = arith.constant 2 : index
    %115 = memref.load %arg4[%c2_21] : memref<4xf32, #tpu.memory_space<smem>>
    %116 = vector.broadcast %115 : f32 to vector<8x8x128xf32>
    %117 = arith.addf %114, %116 : vector<8x8x128xf32>
    %cst_22 = arith.constant 0.000000e+00 : f32
    %118 = vector.broadcast %cst_22 : f32 to vector<8x8x128xf32>
    %119 = arith.maximumf %117, %118 : vector<8x8x128xf32>
    %c12 = arith.constant 12 : index
    %120 = memref.load %arg3[%c12] : memref<16xf32, #tpu.memory_space<smem>>
    %c13 = arith.constant 13 : index
    %121 = memref.load %arg3[%c13] : memref<16xf32, #tpu.memory_space<smem>>
    %c14 = arith.constant 14 : index
    %122 = memref.load %arg3[%c14] : memref<16xf32, #tpu.memory_space<smem>>
    %c15 = arith.constant 15 : index
    %123 = memref.load %arg3[%c15] : memref<16xf32, #tpu.memory_space<smem>>
    %124 = vector.broadcast %120 : f32 to vector<16x8x128xf32>
    %125 = arith.mulf %124, %0 : vector<16x8x128xf32>
    %126 = vector.broadcast %121 : f32 to vector<16x8x128xf32>
    %127 = arith.mulf %126, %2 : vector<16x8x128xf32>
    %128 = arith.addf %125, %127 : vector<16x8x128xf32>
    %129 = vector.broadcast %122 : f32 to vector<16x8x128xf32>
    %130 = arith.mulf %129, %1 : vector<16x8x128xf32>
    %131 = arith.addf %128, %130 : vector<16x8x128xf32>
    %132 = vector.broadcast %123 : f32 to vector<16x8x128xf32>
    %133 = arith.mulf %132, %3 : vector<16x8x128xf32>
    %134 = arith.addf %131, %133 : vector<16x8x128xf32>
    %135 = vector.broadcast %120 : f32 to vector<16x8x128xf32>
    %136 = arith.mulf %135, %2 : vector<16x8x128xf32>
    %137 = vector.broadcast %121 : f32 to vector<16x8x128xf32>
    %138 = arith.mulf %137, %4 : vector<16x8x128xf32>
    %139 = arith.addf %136, %138 : vector<16x8x128xf32>
    %140 = vector.broadcast %122 : f32 to vector<16x8x128xf32>
    %141 = arith.mulf %140, %3 : vector<16x8x128xf32>
    %142 = arith.addf %139, %141 : vector<16x8x128xf32>
    %143 = vector.broadcast %123 : f32 to vector<16x8x128xf32>
    %144 = arith.mulf %143, %5 : vector<16x8x128xf32>
    %145 = arith.addf %142, %144 : vector<16x8x128xf32>
    %146 = arith.maximumf %134, %145 : vector<16x8x128xf32>
    %147 = vector.shape_cast %146 : vector<16x8x128xf32> to vector<8x2x8x128xf32>
    %148 = vector.extract_strided_slice %147 {offsets = [0, 0, 0, 0], sizes = [8, 1, 8, 128], strides = [1, 1, 1, 1]} : vector<8x2x8x128xf32> to vector<8x1x8x128xf32>
    %149 = vector.shape_cast %148 : vector<8x1x8x128xf32> to vector<8x8x128xf32>
    %150 = vector.extract_strided_slice %147 {offsets = [0, 1, 0, 0], sizes = [8, 1, 8, 128], strides = [1, 1, 1, 1]} : vector<8x2x8x128xf32> to vector<8x1x8x128xf32>
    %151 = vector.shape_cast %150 : vector<8x1x8x128xf32> to vector<8x8x128xf32>
    %152 = arith.maximumf %149, %151 : vector<8x8x128xf32>
    %c3_23 = arith.constant 3 : index
    %153 = memref.load %arg4[%c3_23] : memref<4xf32, #tpu.memory_space<smem>>
    %154 = vector.broadcast %153 : f32 to vector<8x8x128xf32>
    %155 = arith.addf %152, %154 : vector<8x8x128xf32>
    %cst_24 = arith.constant 0.000000e+00 : f32
    %156 = vector.broadcast %cst_24 : f32 to vector<8x8x128xf32>
    %157 = arith.maximumf %155, %156 : vector<8x8x128xf32>
    %cst_25 = arith.constant 0.000000e+00 : f32
    %158 = vector.broadcast %cst_25 : f32 to vector<1x8x128xf32>
    %cst_26 = arith.constant 0.000000e+00 : f32
    %159 = vector.broadcast %cst_26 : f32 to vector<8x1x128xf32>
    %160 = vector.extract_strided_slice %43 {offsets = [0, 0, 0], sizes = [8, 7, 128], strides = [1, 1, 1]} : vector<8x8x128xf32> to vector<8x7x128xf32>
    %161 = tpu.concatenate %159, %160 in 1 : vector<8x1x128xf32>, vector<8x7x128xf32> -> vector<8x8x128xf32>
    %162 = vector.extract_strided_slice %81 {offsets = [0, 0, 0], sizes = [8, 7, 128], strides = [1, 1, 1]} : vector<8x8x128xf32> to vector<8x7x128xf32>
    %163 = tpu.concatenate %159, %162 in 1 : vector<8x1x128xf32>, vector<8x7x128xf32> -> vector<8x8x128xf32>
    %164 = vector.extract_strided_slice %119 {offsets = [0, 0, 0], sizes = [8, 7, 128], strides = [1, 1, 1]} : vector<8x8x128xf32> to vector<8x7x128xf32>
    %165 = tpu.concatenate %159, %164 in 1 : vector<8x1x128xf32>, vector<8x7x128xf32> -> vector<8x8x128xf32>
    %166 = vector.extract_strided_slice %157 {offsets = [0, 0, 0], sizes = [8, 7, 128], strides = [1, 1, 1]} : vector<8x8x128xf32> to vector<8x7x128xf32>
    %167 = tpu.concatenate %159, %166 in 1 : vector<8x1x128xf32>, vector<8x7x128xf32> -> vector<8x8x128xf32>
    %168 = vector.extract_strided_slice %43 {offsets = [0, 0, 0], sizes = [7, 8, 128], strides = [1, 1, 1]} : vector<8x8x128xf32> to vector<7x8x128xf32>
    %169 = tpu.concatenate %158, %168 in 0 : vector<1x8x128xf32>, vector<7x8x128xf32> -> vector<8x8x128xf32>
    %170 = vector.extract_strided_slice %81 {offsets = [0, 0, 0], sizes = [7, 8, 128], strides = [1, 1, 1]} : vector<8x8x128xf32> to vector<7x8x128xf32>
    %171 = tpu.concatenate %158, %170 in 0 : vector<1x8x128xf32>, vector<7x8x128xf32> -> vector<8x8x128xf32>
    %172 = vector.extract_strided_slice %119 {offsets = [0, 0, 0], sizes = [7, 8, 128], strides = [1, 1, 1]} : vector<8x8x128xf32> to vector<7x8x128xf32>
    %173 = tpu.concatenate %158, %172 in 0 : vector<1x8x128xf32>, vector<7x8x128xf32> -> vector<8x8x128xf32>
    %174 = vector.extract_strided_slice %157 {offsets = [0, 0, 0], sizes = [7, 8, 128], strides = [1, 1, 1]} : vector<8x8x128xf32> to vector<7x8x128xf32>
    %175 = tpu.concatenate %158, %174 in 0 : vector<1x8x128xf32>, vector<7x8x128xf32> -> vector<8x8x128xf32>
    %176 = vector.extract_strided_slice %161 {offsets = [0, 0, 0], sizes = [7, 8, 128], strides = [1, 1, 1]} : vector<8x8x128xf32> to vector<7x8x128xf32>
    %177 = tpu.concatenate %158, %176 in 0 : vector<1x8x128xf32>, vector<7x8x128xf32> -> vector<8x8x128xf32>
    %178 = vector.extract_strided_slice %163 {offsets = [0, 0, 0], sizes = [7, 8, 128], strides = [1, 1, 1]} : vector<8x8x128xf32> to vector<7x8x128xf32>
    %179 = tpu.concatenate %158, %178 in 0 : vector<1x8x128xf32>, vector<7x8x128xf32> -> vector<8x8x128xf32>
    %180 = vector.extract_strided_slice %165 {offsets = [0, 0, 0], sizes = [7, 8, 128], strides = [1, 1, 1]} : vector<8x8x128xf32> to vector<7x8x128xf32>
    %181 = tpu.concatenate %158, %180 in 0 : vector<1x8x128xf32>, vector<7x8x128xf32> -> vector<8x8x128xf32>
    %182 = vector.extract_strided_slice %167 {offsets = [0, 0, 0], sizes = [7, 8, 128], strides = [1, 1, 1]} : vector<8x8x128xf32> to vector<7x8x128xf32>
    %183 = tpu.concatenate %158, %182 in 0 : vector<1x8x128xf32>, vector<7x8x128xf32> -> vector<8x8x128xf32>
    %c0_27 = arith.constant 0 : index
    %184 = memref.load %arg5[%c0_27] : memref<64xf32, #tpu.memory_space<smem>>
    %185 = vector.broadcast %184 : f32 to vector<8x8x128xf32>
    %186 = arith.mulf %185, %177 : vector<8x8x128xf32>
    %c1_28 = arith.constant 1 : index
    %187 = memref.load %arg5[%c1_28] : memref<64xf32, #tpu.memory_space<smem>>
    %188 = vector.broadcast %187 : f32 to vector<8x8x128xf32>
    %189 = arith.mulf %188, %169 : vector<8x8x128xf32>
    %190 = arith.addf %186, %189 : vector<8x8x128xf32>
    %c2_29 = arith.constant 2 : index
    %191 = memref.load %arg5[%c2_29] : memref<64xf32, #tpu.memory_space<smem>>
    %192 = vector.broadcast %191 : f32 to vector<8x8x128xf32>
    %193 = arith.mulf %192, %161 : vector<8x8x128xf32>
    %194 = arith.addf %190, %193 : vector<8x8x128xf32>
    %c3_30 = arith.constant 3 : index
    %195 = memref.load %arg5[%c3_30] : memref<64xf32, #tpu.memory_space<smem>>
    %196 = vector.broadcast %195 : f32 to vector<8x8x128xf32>
    %197 = arith.mulf %196, %43 : vector<8x8x128xf32>
    %198 = arith.addf %194, %197 : vector<8x8x128xf32>
    %c4_31 = arith.constant 4 : index
    %199 = memref.load %arg5[%c4_31] : memref<64xf32, #tpu.memory_space<smem>>
    %200 = vector.broadcast %199 : f32 to vector<8x8x128xf32>
    %201 = arith.mulf %200, %179 : vector<8x8x128xf32>
    %202 = arith.addf %198, %201 : vector<8x8x128xf32>
    %c5_32 = arith.constant 5 : index
    %203 = memref.load %arg5[%c5_32] : memref<64xf32, #tpu.memory_space<smem>>
    %204 = vector.broadcast %203 : f32 to vector<8x8x128xf32>
    %205 = arith.mulf %204, %171 : vector<8x8x128xf32>
    %206 = arith.addf %202, %205 : vector<8x8x128xf32>
    %c6_33 = arith.constant 6 : index
    %207 = memref.load %arg5[%c6_33] : memref<64xf32, #tpu.memory_space<smem>>
    %208 = vector.broadcast %207 : f32 to vector<8x8x128xf32>
    %209 = arith.mulf %208, %163 : vector<8x8x128xf32>
    %210 = arith.addf %206, %209 : vector<8x8x128xf32>
    %c7_34 = arith.constant 7 : index
    %211 = memref.load %arg5[%c7_34] : memref<64xf32, #tpu.memory_space<smem>>
    %212 = vector.broadcast %211 : f32 to vector<8x8x128xf32>
    %213 = arith.mulf %212, %81 : vector<8x8x128xf32>
    %214 = arith.addf %210, %213 : vector<8x8x128xf32>
    %c8_35 = arith.constant 8 : index
    %215 = memref.load %arg5[%c8_35] : memref<64xf32, #tpu.memory_space<smem>>
    %216 = vector.broadcast %215 : f32 to vector<8x8x128xf32>
    %217 = arith.mulf %216, %181 : vector<8x8x128xf32>
    %218 = arith.addf %214, %217 : vector<8x8x128xf32>
    %c9_36 = arith.constant 9 : index
    %219 = memref.load %arg5[%c9_36] : memref<64xf32, #tpu.memory_space<smem>>
    %220 = vector.broadcast %219 : f32 to vector<8x8x128xf32>
    %221 = arith.mulf %220, %173 : vector<8x8x128xf32>
    %222 = arith.addf %218, %221 : vector<8x8x128xf32>
    %c10_37 = arith.constant 10 : index
    %223 = memref.load %arg5[%c10_37] : memref<64xf32, #tpu.memory_space<smem>>
    %224 = vector.broadcast %223 : f32 to vector<8x8x128xf32>
    %225 = arith.mulf %224, %165 : vector<8x8x128xf32>
    %226 = arith.addf %222, %225 : vector<8x8x128xf32>
    %c11_38 = arith.constant 11 : index
    %227 = memref.load %arg5[%c11_38] : memref<64xf32, #tpu.memory_space<smem>>
    %228 = vector.broadcast %227 : f32 to vector<8x8x128xf32>
    %229 = arith.mulf %228, %119 : vector<8x8x128xf32>
    %230 = arith.addf %226, %229 : vector<8x8x128xf32>
    %c12_39 = arith.constant 12 : index
    %231 = memref.load %arg5[%c12_39] : memref<64xf32, #tpu.memory_space<smem>>
    %232 = vector.broadcast %231 : f32 to vector<8x8x128xf32>
    %233 = arith.mulf %232, %183 : vector<8x8x128xf32>
    %234 = arith.addf %230, %233 : vector<8x8x128xf32>
    %c13_40 = arith.constant 13 : index
    %235 = memref.load %arg5[%c13_40] : memref<64xf32, #tpu.memory_space<smem>>
    %236 = vector.broadcast %235 : f32 to vector<8x8x128xf32>
    %237 = arith.mulf %236, %175 : vector<8x8x128xf32>
    %238 = arith.addf %234, %237 : vector<8x8x128xf32>
    %c14_41 = arith.constant 14 : index
    %239 = memref.load %arg5[%c14_41] : memref<64xf32, #tpu.memory_space<smem>>
    %240 = vector.broadcast %239 : f32 to vector<8x8x128xf32>
    %241 = arith.mulf %240, %167 : vector<8x8x128xf32>
    %242 = arith.addf %238, %241 : vector<8x8x128xf32>
    %c15_42 = arith.constant 15 : index
    %243 = memref.load %arg5[%c15_42] : memref<64xf32, #tpu.memory_space<smem>>
    %244 = vector.broadcast %243 : f32 to vector<8x8x128xf32>
    %245 = arith.mulf %244, %157 : vector<8x8x128xf32>
    %246 = arith.addf %242, %245 : vector<8x8x128xf32>
    %247 = vector.shape_cast %246 : vector<8x8x128xf32> to vector<4x2x8x128xf32>
    %248 = vector.extract_strided_slice %247 {offsets = [0, 0, 0, 0], sizes = [4, 1, 8, 128], strides = [1, 1, 1, 1]} : vector<4x2x8x128xf32> to vector<4x1x8x128xf32>
    %249 = vector.shape_cast %248 : vector<4x1x8x128xf32> to vector<4x8x128xf32>
    %250 = vector.extract_strided_slice %247 {offsets = [0, 1, 0, 0], sizes = [4, 1, 8, 128], strides = [1, 1, 1, 1]} : vector<4x2x8x128xf32> to vector<4x1x8x128xf32>
    %251 = vector.shape_cast %250 : vector<4x1x8x128xf32> to vector<4x8x128xf32>
    %252 = arith.maximumf %249, %251 : vector<4x8x128xf32>
    %c0_43 = arith.constant 0 : index
    %253 = memref.load %arg6[%c0_43] : memref<4xf32, #tpu.memory_space<smem>>
    %254 = vector.broadcast %253 : f32 to vector<4x8x128xf32>
    %255 = arith.addf %252, %254 : vector<4x8x128xf32>
    %c16 = arith.constant 16 : index
    %256 = memref.load %arg5[%c16] : memref<64xf32, #tpu.memory_space<smem>>
    %257 = vector.broadcast %256 : f32 to vector<8x8x128xf32>
    %258 = arith.mulf %257, %177 : vector<8x8x128xf32>
    %c17 = arith.constant 17 : index
    %259 = memref.load %arg5[%c17] : memref<64xf32, #tpu.memory_space<smem>>
    %260 = vector.broadcast %259 : f32 to vector<8x8x128xf32>
    %261 = arith.mulf %260, %169 : vector<8x8x128xf32>
    %262 = arith.addf %258, %261 : vector<8x8x128xf32>
    %c18 = arith.constant 18 : index
    %263 = memref.load %arg5[%c18] : memref<64xf32, #tpu.memory_space<smem>>
    %264 = vector.broadcast %263 : f32 to vector<8x8x128xf32>
    %265 = arith.mulf %264, %161 : vector<8x8x128xf32>
    %266 = arith.addf %262, %265 : vector<8x8x128xf32>
    %c19 = arith.constant 19 : index
    %267 = memref.load %arg5[%c19] : memref<64xf32, #tpu.memory_space<smem>>
    %268 = vector.broadcast %267 : f32 to vector<8x8x128xf32>
    %269 = arith.mulf %268, %43 : vector<8x8x128xf32>
    %270 = arith.addf %266, %269 : vector<8x8x128xf32>
    %c20 = arith.constant 20 : index
    %271 = memref.load %arg5[%c20] : memref<64xf32, #tpu.memory_space<smem>>
    %272 = vector.broadcast %271 : f32 to vector<8x8x128xf32>
    %273 = arith.mulf %272, %179 : vector<8x8x128xf32>
    %274 = arith.addf %270, %273 : vector<8x8x128xf32>
    %c21 = arith.constant 21 : index
    %275 = memref.load %arg5[%c21] : memref<64xf32, #tpu.memory_space<smem>>
    %276 = vector.broadcast %275 : f32 to vector<8x8x128xf32>
    %277 = arith.mulf %276, %171 : vector<8x8x128xf32>
    %278 = arith.addf %274, %277 : vector<8x8x128xf32>
    %c22 = arith.constant 22 : index
    %279 = memref.load %arg5[%c22] : memref<64xf32, #tpu.memory_space<smem>>
    %280 = vector.broadcast %279 : f32 to vector<8x8x128xf32>
    %281 = arith.mulf %280, %163 : vector<8x8x128xf32>
    %282 = arith.addf %278, %281 : vector<8x8x128xf32>
    %c23 = arith.constant 23 : index
    %283 = memref.load %arg5[%c23] : memref<64xf32, #tpu.memory_space<smem>>
    %284 = vector.broadcast %283 : f32 to vector<8x8x128xf32>
    %285 = arith.mulf %284, %81 : vector<8x8x128xf32>
    %286 = arith.addf %282, %285 : vector<8x8x128xf32>
    %c24 = arith.constant 24 : index
    %287 = memref.load %arg5[%c24] : memref<64xf32, #tpu.memory_space<smem>>
    %288 = vector.broadcast %287 : f32 to vector<8x8x128xf32>
    %289 = arith.mulf %288, %181 : vector<8x8x128xf32>
    %290 = arith.addf %286, %289 : vector<8x8x128xf32>
    %c25 = arith.constant 25 : index
    %291 = memref.load %arg5[%c25] : memref<64xf32, #tpu.memory_space<smem>>
    %292 = vector.broadcast %291 : f32 to vector<8x8x128xf32>
    %293 = arith.mulf %292, %173 : vector<8x8x128xf32>
    %294 = arith.addf %290, %293 : vector<8x8x128xf32>
    %c26 = arith.constant 26 : index
    %295 = memref.load %arg5[%c26] : memref<64xf32, #tpu.memory_space<smem>>
    %296 = vector.broadcast %295 : f32 to vector<8x8x128xf32>
    %297 = arith.mulf %296, %165 : vector<8x8x128xf32>
    %298 = arith.addf %294, %297 : vector<8x8x128xf32>
    %c27 = arith.constant 27 : index
    %299 = memref.load %arg5[%c27] : memref<64xf32, #tpu.memory_space<smem>>
    %300 = vector.broadcast %299 : f32 to vector<8x8x128xf32>
    %301 = arith.mulf %300, %119 : vector<8x8x128xf32>
    %302 = arith.addf %298, %301 : vector<8x8x128xf32>
    %c28 = arith.constant 28 : index
    %303 = memref.load %arg5[%c28] : memref<64xf32, #tpu.memory_space<smem>>
    %304 = vector.broadcast %303 : f32 to vector<8x8x128xf32>
    %305 = arith.mulf %304, %183 : vector<8x8x128xf32>
    %306 = arith.addf %302, %305 : vector<8x8x128xf32>
    %c29 = arith.constant 29 : index
    %307 = memref.load %arg5[%c29] : memref<64xf32, #tpu.memory_space<smem>>
    %308 = vector.broadcast %307 : f32 to vector<8x8x128xf32>
    %309 = arith.mulf %308, %175 : vector<8x8x128xf32>
    %310 = arith.addf %306, %309 : vector<8x8x128xf32>
    %c30 = arith.constant 30 : index
    %311 = memref.load %arg5[%c30] : memref<64xf32, #tpu.memory_space<smem>>
    %312 = vector.broadcast %311 : f32 to vector<8x8x128xf32>
    %313 = arith.mulf %312, %167 : vector<8x8x128xf32>
    %314 = arith.addf %310, %313 : vector<8x8x128xf32>
    %c31 = arith.constant 31 : index
    %315 = memref.load %arg5[%c31] : memref<64xf32, #tpu.memory_space<smem>>
    %316 = vector.broadcast %315 : f32 to vector<8x8x128xf32>
    %317 = arith.mulf %316, %157 : vector<8x8x128xf32>
    %318 = arith.addf %314, %317 : vector<8x8x128xf32>
    %319 = vector.shape_cast %318 : vector<8x8x128xf32> to vector<4x2x8x128xf32>
    %320 = vector.extract_strided_slice %319 {offsets = [0, 0, 0, 0], sizes = [4, 1, 8, 128], strides = [1, 1, 1, 1]} : vector<4x2x8x128xf32> to vector<4x1x8x128xf32>
    %321 = vector.shape_cast %320 : vector<4x1x8x128xf32> to vector<4x8x128xf32>
    %322 = vector.extract_strided_slice %319 {offsets = [0, 1, 0, 0], sizes = [4, 1, 8, 128], strides = [1, 1, 1, 1]} : vector<4x2x8x128xf32> to vector<4x1x8x128xf32>
    %323 = vector.shape_cast %322 : vector<4x1x8x128xf32> to vector<4x8x128xf32>
    %324 = arith.maximumf %321, %323 : vector<4x8x128xf32>
    %c1_44 = arith.constant 1 : index
    %325 = memref.load %arg6[%c1_44] : memref<4xf32, #tpu.memory_space<smem>>
    %326 = vector.broadcast %325 : f32 to vector<4x8x128xf32>
    %327 = arith.addf %324, %326 : vector<4x8x128xf32>
    %c32 = arith.constant 32 : index
    %328 = memref.load %arg5[%c32] : memref<64xf32, #tpu.memory_space<smem>>
    %329 = vector.broadcast %328 : f32 to vector<8x8x128xf32>
    %330 = arith.mulf %329, %177 : vector<8x8x128xf32>
    %c33 = arith.constant 33 : index
    %331 = memref.load %arg5[%c33] : memref<64xf32, #tpu.memory_space<smem>>
    %332 = vector.broadcast %331 : f32 to vector<8x8x128xf32>
    %333 = arith.mulf %332, %169 : vector<8x8x128xf32>
    %334 = arith.addf %330, %333 : vector<8x8x128xf32>
    %c34 = arith.constant 34 : index
    %335 = memref.load %arg5[%c34] : memref<64xf32, #tpu.memory_space<smem>>
    %336 = vector.broadcast %335 : f32 to vector<8x8x128xf32>
    %337 = arith.mulf %336, %161 : vector<8x8x128xf32>
    %338 = arith.addf %334, %337 : vector<8x8x128xf32>
    %c35 = arith.constant 35 : index
    %339 = memref.load %arg5[%c35] : memref<64xf32, #tpu.memory_space<smem>>
    %340 = vector.broadcast %339 : f32 to vector<8x8x128xf32>
    %341 = arith.mulf %340, %43 : vector<8x8x128xf32>
    %342 = arith.addf %338, %341 : vector<8x8x128xf32>
    %c36 = arith.constant 36 : index
    %343 = memref.load %arg5[%c36] : memref<64xf32, #tpu.memory_space<smem>>
    %344 = vector.broadcast %343 : f32 to vector<8x8x128xf32>
    %345 = arith.mulf %344, %179 : vector<8x8x128xf32>
    %346 = arith.addf %342, %345 : vector<8x8x128xf32>
    %c37 = arith.constant 37 : index
    %347 = memref.load %arg5[%c37] : memref<64xf32, #tpu.memory_space<smem>>
    %348 = vector.broadcast %347 : f32 to vector<8x8x128xf32>
    %349 = arith.mulf %348, %171 : vector<8x8x128xf32>
    %350 = arith.addf %346, %349 : vector<8x8x128xf32>
    %c38 = arith.constant 38 : index
    %351 = memref.load %arg5[%c38] : memref<64xf32, #tpu.memory_space<smem>>
    %352 = vector.broadcast %351 : f32 to vector<8x8x128xf32>
    %353 = arith.mulf %352, %163 : vector<8x8x128xf32>
    %354 = arith.addf %350, %353 : vector<8x8x128xf32>
    %c39 = arith.constant 39 : index
    %355 = memref.load %arg5[%c39] : memref<64xf32, #tpu.memory_space<smem>>
    %356 = vector.broadcast %355 : f32 to vector<8x8x128xf32>
    %357 = arith.mulf %356, %81 : vector<8x8x128xf32>
    %358 = arith.addf %354, %357 : vector<8x8x128xf32>
    %c40 = arith.constant 40 : index
    %359 = memref.load %arg5[%c40] : memref<64xf32, #tpu.memory_space<smem>>
    %360 = vector.broadcast %359 : f32 to vector<8x8x128xf32>
    %361 = arith.mulf %360, %181 : vector<8x8x128xf32>
    %362 = arith.addf %358, %361 : vector<8x8x128xf32>
    %c41 = arith.constant 41 : index
    %363 = memref.load %arg5[%c41] : memref<64xf32, #tpu.memory_space<smem>>
    %364 = vector.broadcast %363 : f32 to vector<8x8x128xf32>
    %365 = arith.mulf %364, %173 : vector<8x8x128xf32>
    %366 = arith.addf %362, %365 : vector<8x8x128xf32>
    %c42 = arith.constant 42 : index
    %367 = memref.load %arg5[%c42] : memref<64xf32, #tpu.memory_space<smem>>
    %368 = vector.broadcast %367 : f32 to vector<8x8x128xf32>
    %369 = arith.mulf %368, %165 : vector<8x8x128xf32>
    %370 = arith.addf %366, %369 : vector<8x8x128xf32>
    %c43 = arith.constant 43 : index
    %371 = memref.load %arg5[%c43] : memref<64xf32, #tpu.memory_space<smem>>
    %372 = vector.broadcast %371 : f32 to vector<8x8x128xf32>
    %373 = arith.mulf %372, %119 : vector<8x8x128xf32>
    %374 = arith.addf %370, %373 : vector<8x8x128xf32>
    %c44 = arith.constant 44 : index
    %375 = memref.load %arg5[%c44] : memref<64xf32, #tpu.memory_space<smem>>
    %376 = vector.broadcast %375 : f32 to vector<8x8x128xf32>
    %377 = arith.mulf %376, %183 : vector<8x8x128xf32>
    %378 = arith.addf %374, %377 : vector<8x8x128xf32>
    %c45 = arith.constant 45 : index
    %379 = memref.load %arg5[%c45] : memref<64xf32, #tpu.memory_space<smem>>
    %380 = vector.broadcast %379 : f32 to vector<8x8x128xf32>
    %381 = arith.mulf %380, %175 : vector<8x8x128xf32>
    %382 = arith.addf %378, %381 : vector<8x8x128xf32>
    %c46 = arith.constant 46 : index
    %383 = memref.load %arg5[%c46] : memref<64xf32, #tpu.memory_space<smem>>
    %384 = vector.broadcast %383 : f32 to vector<8x8x128xf32>
    %385 = arith.mulf %384, %167 : vector<8x8x128xf32>
    %386 = arith.addf %382, %385 : vector<8x8x128xf32>
    %c47 = arith.constant 47 : index
    %387 = memref.load %arg5[%c47] : memref<64xf32, #tpu.memory_space<smem>>
    %388 = vector.broadcast %387 : f32 to vector<8x8x128xf32>
    %389 = arith.mulf %388, %157 : vector<8x8x128xf32>
    %390 = arith.addf %386, %389 : vector<8x8x128xf32>
    %391 = vector.shape_cast %390 : vector<8x8x128xf32> to vector<4x2x8x128xf32>
    %392 = vector.extract_strided_slice %391 {offsets = [0, 0, 0, 0], sizes = [4, 1, 8, 128], strides = [1, 1, 1, 1]} : vector<4x2x8x128xf32> to vector<4x1x8x128xf32>
    %393 = vector.shape_cast %392 : vector<4x1x8x128xf32> to vector<4x8x128xf32>
    %394 = vector.extract_strided_slice %391 {offsets = [0, 1, 0, 0], sizes = [4, 1, 8, 128], strides = [1, 1, 1, 1]} : vector<4x2x8x128xf32> to vector<4x1x8x128xf32>
    %395 = vector.shape_cast %394 : vector<4x1x8x128xf32> to vector<4x8x128xf32>
    %396 = arith.maximumf %393, %395 : vector<4x8x128xf32>
    %c2_45 = arith.constant 2 : index
    %397 = memref.load %arg6[%c2_45] : memref<4xf32, #tpu.memory_space<smem>>
    %398 = vector.broadcast %397 : f32 to vector<4x8x128xf32>
    %399 = arith.addf %396, %398 : vector<4x8x128xf32>
    %c48 = arith.constant 48 : index
    %400 = memref.load %arg5[%c48] : memref<64xf32, #tpu.memory_space<smem>>
    %401 = vector.broadcast %400 : f32 to vector<8x8x128xf32>
    %402 = arith.mulf %401, %177 : vector<8x8x128xf32>
    %c49 = arith.constant 49 : index
    %403 = memref.load %arg5[%c49] : memref<64xf32, #tpu.memory_space<smem>>
    %404 = vector.broadcast %403 : f32 to vector<8x8x128xf32>
    %405 = arith.mulf %404, %169 : vector<8x8x128xf32>
    %406 = arith.addf %402, %405 : vector<8x8x128xf32>
    %c50 = arith.constant 50 : index
    %407 = memref.load %arg5[%c50] : memref<64xf32, #tpu.memory_space<smem>>
    %408 = vector.broadcast %407 : f32 to vector<8x8x128xf32>
    %409 = arith.mulf %408, %161 : vector<8x8x128xf32>
    %410 = arith.addf %406, %409 : vector<8x8x128xf32>
    %c51 = arith.constant 51 : index
    %411 = memref.load %arg5[%c51] : memref<64xf32, #tpu.memory_space<smem>>
    %412 = vector.broadcast %411 : f32 to vector<8x8x128xf32>
    %413 = arith.mulf %412, %43 : vector<8x8x128xf32>
    %414 = arith.addf %410, %413 : vector<8x8x128xf32>
    %c52 = arith.constant 52 : index
    %415 = memref.load %arg5[%c52] : memref<64xf32, #tpu.memory_space<smem>>
    %416 = vector.broadcast %415 : f32 to vector<8x8x128xf32>
    %417 = arith.mulf %416, %179 : vector<8x8x128xf32>
    %418 = arith.addf %414, %417 : vector<8x8x128xf32>
    %c53 = arith.constant 53 : index
    %419 = memref.load %arg5[%c53] : memref<64xf32, #tpu.memory_space<smem>>
    %420 = vector.broadcast %419 : f32 to vector<8x8x128xf32>
    %421 = arith.mulf %420, %171 : vector<8x8x128xf32>
    %422 = arith.addf %418, %421 : vector<8x8x128xf32>
    %c54 = arith.constant 54 : index
    %423 = memref.load %arg5[%c54] : memref<64xf32, #tpu.memory_space<smem>>
    %424 = vector.broadcast %423 : f32 to vector<8x8x128xf32>
    %425 = arith.mulf %424, %163 : vector<8x8x128xf32>
    %426 = arith.addf %422, %425 : vector<8x8x128xf32>
    %c55 = arith.constant 55 : index
    %427 = memref.load %arg5[%c55] : memref<64xf32, #tpu.memory_space<smem>>
    %428 = vector.broadcast %427 : f32 to vector<8x8x128xf32>
    %429 = arith.mulf %428, %81 : vector<8x8x128xf32>
    %430 = arith.addf %426, %429 : vector<8x8x128xf32>
    %c56 = arith.constant 56 : index
    %431 = memref.load %arg5[%c56] : memref<64xf32, #tpu.memory_space<smem>>
    %432 = vector.broadcast %431 : f32 to vector<8x8x128xf32>
    %433 = arith.mulf %432, %181 : vector<8x8x128xf32>
    %434 = arith.addf %430, %433 : vector<8x8x128xf32>
    %c57 = arith.constant 57 : index
    %435 = memref.load %arg5[%c57] : memref<64xf32, #tpu.memory_space<smem>>
    %436 = vector.broadcast %435 : f32 to vector<8x8x128xf32>
    %437 = arith.mulf %436, %173 : vector<8x8x128xf32>
    %438 = arith.addf %434, %437 : vector<8x8x128xf32>
    %c58 = arith.constant 58 : index
    %439 = memref.load %arg5[%c58] : memref<64xf32, #tpu.memory_space<smem>>
    %440 = vector.broadcast %439 : f32 to vector<8x8x128xf32>
    %441 = arith.mulf %440, %165 : vector<8x8x128xf32>
    %442 = arith.addf %438, %441 : vector<8x8x128xf32>
    %c59 = arith.constant 59 : index
    %443 = memref.load %arg5[%c59] : memref<64xf32, #tpu.memory_space<smem>>
    %444 = vector.broadcast %443 : f32 to vector<8x8x128xf32>
    %445 = arith.mulf %444, %119 : vector<8x8x128xf32>
    %446 = arith.addf %442, %445 : vector<8x8x128xf32>
    %c60 = arith.constant 60 : index
    %447 = memref.load %arg5[%c60] : memref<64xf32, #tpu.memory_space<smem>>
    %448 = vector.broadcast %447 : f32 to vector<8x8x128xf32>
    %449 = arith.mulf %448, %183 : vector<8x8x128xf32>
    %450 = arith.addf %446, %449 : vector<8x8x128xf32>
    %c61 = arith.constant 61 : index
    %451 = memref.load %arg5[%c61] : memref<64xf32, #tpu.memory_space<smem>>
    %452 = vector.broadcast %451 : f32 to vector<8x8x128xf32>
    %453 = arith.mulf %452, %175 : vector<8x8x128xf32>
    %454 = arith.addf %450, %453 : vector<8x8x128xf32>
    %c62 = arith.constant 62 : index
    %455 = memref.load %arg5[%c62] : memref<64xf32, #tpu.memory_space<smem>>
    %456 = vector.broadcast %455 : f32 to vector<8x8x128xf32>
    %457 = arith.mulf %456, %167 : vector<8x8x128xf32>
    %458 = arith.addf %454, %457 : vector<8x8x128xf32>
    %c63 = arith.constant 63 : index
    %459 = memref.load %arg5[%c63] : memref<64xf32, #tpu.memory_space<smem>>
    %460 = vector.broadcast %459 : f32 to vector<8x8x128xf32>
    %461 = arith.mulf %460, %157 : vector<8x8x128xf32>
    %462 = arith.addf %458, %461 : vector<8x8x128xf32>
    %463 = vector.shape_cast %462 : vector<8x8x128xf32> to vector<4x2x8x128xf32>
    %464 = vector.extract_strided_slice %463 {offsets = [0, 0, 0, 0], sizes = [4, 1, 8, 128], strides = [1, 1, 1, 1]} : vector<4x2x8x128xf32> to vector<4x1x8x128xf32>
    %465 = vector.shape_cast %464 : vector<4x1x8x128xf32> to vector<4x8x128xf32>
    %466 = vector.extract_strided_slice %463 {offsets = [0, 1, 0, 0], sizes = [4, 1, 8, 128], strides = [1, 1, 1, 1]} : vector<4x2x8x128xf32> to vector<4x1x8x128xf32>
    %467 = vector.shape_cast %466 : vector<4x1x8x128xf32> to vector<4x8x128xf32>
    %468 = arith.maximumf %465, %467 : vector<4x8x128xf32>
    %c3_46 = arith.constant 3 : index
    %469 = memref.load %arg6[%c3_46] : memref<4xf32, #tpu.memory_space<smem>>
    %470 = vector.broadcast %469 : f32 to vector<4x8x128xf32>
    %471 = arith.addf %468, %470 : vector<4x8x128xf32>
    %472 = tpu.concatenate %255, %327, %399, %471 in 0 : vector<4x8x128xf32>, vector<4x8x128xf32>, vector<4x8x128xf32>, vector<4x8x128xf32> -> vector<16x8x128xf32>
    %473 = vector.extract_strided_slice %472 {offsets = [0, 0, 0], sizes = [16, 7, 128], strides = [1, 1, 1]} : vector<16x8x128xf32> to vector<16x7x128xf32>
    %474 = vector.extract_strided_slice %472 {offsets = [0, 1, 0], sizes = [16, 7, 128], strides = [1, 1, 1]} : vector<16x8x128xf32> to vector<16x7x128xf32>
    %475 = arith.maximumf %473, %474 : vector<16x7x128xf32>
    %cst_47 = arith.constant 0.000000e+00 : f32
    %476 = vector.broadcast %cst_47 : f32 to vector<16x7x128xf32>
    %477 = arith.maximumf %475, %476 : vector<16x7x128xf32>
    %c0_48 = arith.constant 0 : index
    %c0_49 = arith.constant 0 : index
    %c0_50 = arith.constant 0 : index
    %c0_51 = arith.constant 0 : index
    %478 = vector.load %arg7[%c0_48, %c0_49, %c0_50, %c0_51] : memref<16x4x7x128xf32, #tpu.memory_space<vmem>>, vector<16x4x7x128xf32>
    %479 = vector.extract_strided_slice %478 {offsets = [0, 0, 0, 0], sizes = [1, 4, 7, 128], strides = [1, 1, 1, 1]} : vector<16x4x7x128xf32> to vector<1x4x7x128xf32>
    %480 = vector.shape_cast %479 : vector<1x4x7x128xf32> to vector<4x7x128xf32>
    %481 = vector.extract_strided_slice %477 {offsets = [0, 0, 0], sizes = [1, 7, 128], strides = [1, 1, 1]} : vector<16x7x128xf32> to vector<1x7x128xf32>
    %482 = vector.shape_cast %481 : vector<1x7x128xf32> to vector<7x128xf32>
    %483 = vector.shape_cast %482 : vector<7x128xf32> to vector<1x7x128xf32>
    %484 = vector.broadcast %483 : vector<1x7x128xf32> to vector<4x7x128xf32>
    %485 = arith.mulf %480, %484 : vector<4x7x128xf32>
    %486 = vector.extract_strided_slice %478 {offsets = [1, 0, 0, 0], sizes = [1, 4, 7, 128], strides = [1, 1, 1, 1]} : vector<16x4x7x128xf32> to vector<1x4x7x128xf32>
    %487 = vector.shape_cast %486 : vector<1x4x7x128xf32> to vector<4x7x128xf32>
    %488 = vector.extract_strided_slice %477 {offsets = [1, 0, 0], sizes = [1, 7, 128], strides = [1, 1, 1]} : vector<16x7x128xf32> to vector<1x7x128xf32>
    %489 = vector.shape_cast %488 : vector<1x7x128xf32> to vector<7x128xf32>
    %490 = vector.shape_cast %489 : vector<7x128xf32> to vector<1x7x128xf32>
    %491 = vector.broadcast %490 : vector<1x7x128xf32> to vector<4x7x128xf32>
    %492 = arith.mulf %487, %491 : vector<4x7x128xf32>
    %493 = arith.addf %485, %492 : vector<4x7x128xf32>
    %494 = vector.extract_strided_slice %478 {offsets = [2, 0, 0, 0], sizes = [1, 4, 7, 128], strides = [1, 1, 1, 1]} : vector<16x4x7x128xf32> to vector<1x4x7x128xf32>
    %495 = vector.shape_cast %494 : vector<1x4x7x128xf32> to vector<4x7x128xf32>
    %496 = vector.extract_strided_slice %477 {offsets = [2, 0, 0], sizes = [1, 7, 128], strides = [1, 1, 1]} : vector<16x7x128xf32> to vector<1x7x128xf32>
    %497 = vector.shape_cast %496 : vector<1x7x128xf32> to vector<7x128xf32>
    %498 = vector.shape_cast %497 : vector<7x128xf32> to vector<1x7x128xf32>
    %499 = vector.broadcast %498 : vector<1x7x128xf32> to vector<4x7x128xf32>
    %500 = arith.mulf %495, %499 : vector<4x7x128xf32>
    %501 = arith.addf %493, %500 : vector<4x7x128xf32>
    %502 = vector.extract_strided_slice %478 {offsets = [3, 0, 0, 0], sizes = [1, 4, 7, 128], strides = [1, 1, 1, 1]} : vector<16x4x7x128xf32> to vector<1x4x7x128xf32>
    %503 = vector.shape_cast %502 : vector<1x4x7x128xf32> to vector<4x7x128xf32>
    %504 = vector.extract_strided_slice %477 {offsets = [3, 0, 0], sizes = [1, 7, 128], strides = [1, 1, 1]} : vector<16x7x128xf32> to vector<1x7x128xf32>
    %505 = vector.shape_cast %504 : vector<1x7x128xf32> to vector<7x128xf32>
    %506 = vector.shape_cast %505 : vector<7x128xf32> to vector<1x7x128xf32>
    %507 = vector.broadcast %506 : vector<1x7x128xf32> to vector<4x7x128xf32>
    %508 = arith.mulf %503, %507 : vector<4x7x128xf32>
    %509 = arith.addf %501, %508 : vector<4x7x128xf32>
    %510 = vector.extract_strided_slice %478 {offsets = [4, 0, 0, 0], sizes = [1, 4, 7, 128], strides = [1, 1, 1, 1]} : vector<16x4x7x128xf32> to vector<1x4x7x128xf32>
    %511 = vector.shape_cast %510 : vector<1x4x7x128xf32> to vector<4x7x128xf32>
    %512 = vector.extract_strided_slice %477 {offsets = [4, 0, 0], sizes = [1, 7, 128], strides = [1, 1, 1]} : vector<16x7x128xf32> to vector<1x7x128xf32>
    %513 = vector.shape_cast %512 : vector<1x7x128xf32> to vector<7x128xf32>
    %514 = vector.shape_cast %513 : vector<7x128xf32> to vector<1x7x128xf32>
    %515 = vector.broadcast %514 : vector<1x7x128xf32> to vector<4x7x128xf32>
    %516 = arith.mulf %511, %515 : vector<4x7x128xf32>
    %517 = arith.addf %509, %516 : vector<4x7x128xf32>
    %518 = vector.extract_strided_slice %478 {offsets = [5, 0, 0, 0], sizes = [1, 4, 7, 128], strides = [1, 1, 1, 1]} : vector<16x4x7x128xf32> to vector<1x4x7x128xf32>
    %519 = vector.shape_cast %518 : vector<1x4x7x128xf32> to vector<4x7x128xf32>
    %520 = vector.extract_strided_slice %477 {offsets = [5, 0, 0], sizes = [1, 7, 128], strides = [1, 1, 1]} : vector<16x7x128xf32> to vector<1x7x128xf32>
    %521 = vector.shape_cast %520 : vector<1x7x128xf32> to vector<7x128xf32>
    %522 = vector.shape_cast %521 : vector<7x128xf32> to vector<1x7x128xf32>
    %523 = vector.broadcast %522 : vector<1x7x128xf32> to vector<4x7x128xf32>
    %524 = arith.mulf %519, %523 : vector<4x7x128xf32>
    %525 = arith.addf %517, %524 : vector<4x7x128xf32>
    %526 = vector.extract_strided_slice %478 {offsets = [6, 0, 0, 0], sizes = [1, 4, 7, 128], strides = [1, 1, 1, 1]} : vector<16x4x7x128xf32> to vector<1x4x7x128xf32>
    %527 = vector.shape_cast %526 : vector<1x4x7x128xf32> to vector<4x7x128xf32>
    %528 = vector.extract_strided_slice %477 {offsets = [6, 0, 0], sizes = [1, 7, 128], strides = [1, 1, 1]} : vector<16x7x128xf32> to vector<1x7x128xf32>
    %529 = vector.shape_cast %528 : vector<1x7x128xf32> to vector<7x128xf32>
    %530 = vector.shape_cast %529 : vector<7x128xf32> to vector<1x7x128xf32>
    %531 = vector.broadcast %530 : vector<1x7x128xf32> to vector<4x7x128xf32>
    %532 = arith.mulf %527, %531 : vector<4x7x128xf32>
    %533 = arith.addf %525, %532 : vector<4x7x128xf32>
    %534 = vector.extract_strided_slice %478 {offsets = [7, 0, 0, 0], sizes = [1, 4, 7, 128], strides = [1, 1, 1, 1]} : vector<16x4x7x128xf32> to vector<1x4x7x128xf32>
    %535 = vector.shape_cast %534 : vector<1x4x7x128xf32> to vector<4x7x128xf32>
    %536 = vector.extract_strided_slice %477 {offsets = [7, 0, 0], sizes = [1, 7, 128], strides = [1, 1, 1]} : vector<16x7x128xf32> to vector<1x7x128xf32>
    %537 = vector.shape_cast %536 : vector<1x7x128xf32> to vector<7x128xf32>
    %538 = vector.shape_cast %537 : vector<7x128xf32> to vector<1x7x128xf32>
    %539 = vector.broadcast %538 : vector<1x7x128xf32> to vector<4x7x128xf32>
    %540 = arith.mulf %535, %539 : vector<4x7x128xf32>
    %541 = arith.addf %533, %540 : vector<4x7x128xf32>
    %542 = vector.extract_strided_slice %478 {offsets = [8, 0, 0, 0], sizes = [1, 4, 7, 128], strides = [1, 1, 1, 1]} : vector<16x4x7x128xf32> to vector<1x4x7x128xf32>
    %543 = vector.shape_cast %542 : vector<1x4x7x128xf32> to vector<4x7x128xf32>
    %544 = vector.extract_strided_slice %477 {offsets = [8, 0, 0], sizes = [1, 7, 128], strides = [1, 1, 1]} : vector<16x7x128xf32> to vector<1x7x128xf32>
    %545 = vector.shape_cast %544 : vector<1x7x128xf32> to vector<7x128xf32>
    %546 = vector.shape_cast %545 : vector<7x128xf32> to vector<1x7x128xf32>
    %547 = vector.broadcast %546 : vector<1x7x128xf32> to vector<4x7x128xf32>
    %548 = arith.mulf %543, %547 : vector<4x7x128xf32>
    %549 = arith.addf %541, %548 : vector<4x7x128xf32>
    %550 = vector.extract_strided_slice %478 {offsets = [9, 0, 0, 0], sizes = [1, 4, 7, 128], strides = [1, 1, 1, 1]} : vector<16x4x7x128xf32> to vector<1x4x7x128xf32>
    %551 = vector.shape_cast %550 : vector<1x4x7x128xf32> to vector<4x7x128xf32>
    %552 = vector.extract_strided_slice %477 {offsets = [9, 0, 0], sizes = [1, 7, 128], strides = [1, 1, 1]} : vector<16x7x128xf32> to vector<1x7x128xf32>
    %553 = vector.shape_cast %552 : vector<1x7x128xf32> to vector<7x128xf32>
    %554 = vector.shape_cast %553 : vector<7x128xf32> to vector<1x7x128xf32>
    %555 = vector.broadcast %554 : vector<1x7x128xf32> to vector<4x7x128xf32>
    %556 = arith.mulf %551, %555 : vector<4x7x128xf32>
    %557 = arith.addf %549, %556 : vector<4x7x128xf32>
    %558 = vector.extract_strided_slice %478 {offsets = [10, 0, 0, 0], sizes = [1, 4, 7, 128], strides = [1, 1, 1, 1]} : vector<16x4x7x128xf32> to vector<1x4x7x128xf32>
    %559 = vector.shape_cast %558 : vector<1x4x7x128xf32> to vector<4x7x128xf32>
    %560 = vector.extract_strided_slice %477 {offsets = [10, 0, 0], sizes = [1, 7, 128], strides = [1, 1, 1]} : vector<16x7x128xf32> to vector<1x7x128xf32>
    %561 = vector.shape_cast %560 : vector<1x7x128xf32> to vector<7x128xf32>
    %562 = vector.shape_cast %561 : vector<7x128xf32> to vector<1x7x128xf32>
    %563 = vector.broadcast %562 : vector<1x7x128xf32> to vector<4x7x128xf32>
    %564 = arith.mulf %559, %563 : vector<4x7x128xf32>
    %565 = arith.addf %557, %564 : vector<4x7x128xf32>
    %566 = vector.extract_strided_slice %478 {offsets = [11, 0, 0, 0], sizes = [1, 4, 7, 128], strides = [1, 1, 1, 1]} : vector<16x4x7x128xf32> to vector<1x4x7x128xf32>
    %567 = vector.shape_cast %566 : vector<1x4x7x128xf32> to vector<4x7x128xf32>
    %568 = vector.extract_strided_slice %477 {offsets = [11, 0, 0], sizes = [1, 7, 128], strides = [1, 1, 1]} : vector<16x7x128xf32> to vector<1x7x128xf32>
    %569 = vector.shape_cast %568 : vector<1x7x128xf32> to vector<7x128xf32>
    %570 = vector.shape_cast %569 : vector<7x128xf32> to vector<1x7x128xf32>
    %571 = vector.broadcast %570 : vector<1x7x128xf32> to vector<4x7x128xf32>
    %572 = arith.mulf %567, %571 : vector<4x7x128xf32>
    %573 = arith.addf %565, %572 : vector<4x7x128xf32>
    %574 = vector.extract_strided_slice %478 {offsets = [12, 0, 0, 0], sizes = [1, 4, 7, 128], strides = [1, 1, 1, 1]} : vector<16x4x7x128xf32> to vector<1x4x7x128xf32>
    %575 = vector.shape_cast %574 : vector<1x4x7x128xf32> to vector<4x7x128xf32>
    %576 = vector.extract_strided_slice %477 {offsets = [12, 0, 0], sizes = [1, 7, 128], strides = [1, 1, 1]} : vector<16x7x128xf32> to vector<1x7x128xf32>
    %577 = vector.shape_cast %576 : vector<1x7x128xf32> to vector<7x128xf32>
    %578 = vector.shape_cast %577 : vector<7x128xf32> to vector<1x7x128xf32>
    %579 = vector.broadcast %578 : vector<1x7x128xf32> to vector<4x7x128xf32>
    %580 = arith.mulf %575, %579 : vector<4x7x128xf32>
    %581 = arith.addf %573, %580 : vector<4x7x128xf32>
    %582 = vector.extract_strided_slice %478 {offsets = [13, 0, 0, 0], sizes = [1, 4, 7, 128], strides = [1, 1, 1, 1]} : vector<16x4x7x128xf32> to vector<1x4x7x128xf32>
    %583 = vector.shape_cast %582 : vector<1x4x7x128xf32> to vector<4x7x128xf32>
    %584 = vector.extract_strided_slice %477 {offsets = [13, 0, 0], sizes = [1, 7, 128], strides = [1, 1, 1]} : vector<16x7x128xf32> to vector<1x7x128xf32>
    %585 = vector.shape_cast %584 : vector<1x7x128xf32> to vector<7x128xf32>
    %586 = vector.shape_cast %585 : vector<7x128xf32> to vector<1x7x128xf32>
    %587 = vector.broadcast %586 : vector<1x7x128xf32> to vector<4x7x128xf32>
    %588 = arith.mulf %583, %587 : vector<4x7x128xf32>
    %589 = arith.addf %581, %588 : vector<4x7x128xf32>
    %590 = vector.extract_strided_slice %478 {offsets = [14, 0, 0, 0], sizes = [1, 4, 7, 128], strides = [1, 1, 1, 1]} : vector<16x4x7x128xf32> to vector<1x4x7x128xf32>
    %591 = vector.shape_cast %590 : vector<1x4x7x128xf32> to vector<4x7x128xf32>
    %592 = vector.extract_strided_slice %477 {offsets = [14, 0, 0], sizes = [1, 7, 128], strides = [1, 1, 1]} : vector<16x7x128xf32> to vector<1x7x128xf32>
    %593 = vector.shape_cast %592 : vector<1x7x128xf32> to vector<7x128xf32>
    %594 = vector.shape_cast %593 : vector<7x128xf32> to vector<1x7x128xf32>
    %595 = vector.broadcast %594 : vector<1x7x128xf32> to vector<4x7x128xf32>
    %596 = arith.mulf %591, %595 : vector<4x7x128xf32>
    %597 = arith.addf %589, %596 : vector<4x7x128xf32>
    %598 = vector.extract_strided_slice %478 {offsets = [15, 0, 0, 0], sizes = [1, 4, 7, 128], strides = [1, 1, 1, 1]} : vector<16x4x7x128xf32> to vector<1x4x7x128xf32>
    %599 = vector.shape_cast %598 : vector<1x4x7x128xf32> to vector<4x7x128xf32>
    %600 = vector.extract_strided_slice %477 {offsets = [15, 0, 0], sizes = [1, 7, 128], strides = [1, 1, 1]} : vector<16x7x128xf32> to vector<1x7x128xf32>
    %601 = vector.shape_cast %600 : vector<1x7x128xf32> to vector<7x128xf32>
    %602 = vector.shape_cast %601 : vector<7x128xf32> to vector<1x7x128xf32>
    %603 = vector.broadcast %602 : vector<1x7x128xf32> to vector<4x7x128xf32>
    %604 = arith.mulf %599, %603 : vector<4x7x128xf32>
    %605 = arith.addf %597, %604 : vector<4x7x128xf32>
    %cst_52 = arith.constant dense<0.000000e+00> : vector<4x128xf32>
    %606 = vector.multi_reduction <add>, %605, %cst_52 [1] : vector<4x7x128xf32> to vector<4x128xf32>
    %c0_53 = arith.constant 0 : index
    %c0_54 = arith.constant 0 : index
    %607 = vector.load %arg8[%c0_53, %c0_54] : memref<4x128xf32, #tpu.memory_space<vmem>>, vector<4x128xf32>
    %608 = arith.addf %606, %607 : vector<4x128xf32>
    %c0_55 = arith.constant 0 : index
    %c0_56 = arith.constant 0 : index
    %609 = vector.load %arg9[%c0_55, %c0_56] : memref<4x128xf32, #tpu.memory_space<vmem>>, vector<4x128xf32>
    tpu.vector_store %arg9[%c0_55, %c0_56], %608 {strides = array<i32>} : memref<4x128xf32, #tpu.memory_space<vmem>>, vector<4x128xf32>,
    return
  }
  func.func @transform_0(%arg0: i32) -> (i32, i32, i32) {
    %c0_i32 = arith.constant 0 : i32
    %c0_i32_0 = arith.constant 0 : i32
    %c0_i32_1 = arith.constant 0 : i32
    return %c0_i32, %c0_i32_0, %arg0 : i32, i32, i32
  }
  func.func @transform_1(%arg0: i32) -> (i32, i32, i32) {
    %c0_i32 = arith.constant 0 : i32
    %c0_i32_0 = arith.constant 0 : i32
    %c0_i32_1 = arith.constant 0 : i32
    return %c0_i32, %c0_i32_0, %arg0 : i32, i32, i32
  }
  func.func @transform_2(%arg0: i32) -> i32 {
    %c0_i32 = arith.constant 0 : i32
    %c0_i32_0 = arith.constant 0 : i32
    return %c0_i32 : i32
  }
  func.func @transform_3(%arg0: i32) -> i32 {
    %c0_i32 = arith.constant 0 : i32
    %c0_i32_0 = arith.constant 0 : i32
    return %c0_i32 : i32
  }
  func.func @transform_4(%arg0: i32) -> i32 {
    %c0_i32 = arith.constant 0 : i32
    %c0_i32_0 = arith.constant 0 : i32
    return %c0_i32 : i32
  }
  func.func @transform_5(%arg0: i32) -> i32 {
    %c0_i32 = arith.constant 0 : i32
    %c0_i32_0 = arith.constant 0 : i32
    return %c0_i32 : i32
  }
  func.func @transform_6(%arg0: i32) -> (i32, i32, i32, i32) {
    %c0_i32 = arith.constant 0 : i32
    %c0_i32_0 = arith.constant 0 : i32
    %c0_i32_1 = arith.constant 0 : i32
    %c0_i32_2 = arith.constant 0 : i32
    %c0_i32_3 = arith.constant 0 : i32
    return %c0_i32, %c0_i32_0, %c0_i32_1, %c0_i32_2 : i32, i32, i32, i32
  }
  func.func @transform_7(%arg0: i32) -> (i32, i32) {
    %c0_i32 = arith.constant 0 : i32
    %c0_i32_0 = arith.constant 0 : i32
    %c0_i32_1 = arith.constant 0 : i32
    return %c0_i32, %c0_i32_0 : i32, i32
  }
  func.func @transform_8(%arg0: i32) -> (i32, i32) {
    %c0_i32 = arith.constant 0 : i32
    %c0_i32_0 = arith.constant 0 : i32
    return %c0_i32, %arg0 : i32, i32
  }
}

</mosaic_0001>

<llo_original>
// kernel: tpu_custom_call.1
$region0: #{tpu_custom_call.1}
  #allocation0 [shape = 'u32[]', space=smem, size = 0x4, offset = 0x4, fixed_abs, tag = 'smem constant byte address 0x4 - core index']
  #allocation1 [shape = 'u32[72,128]{1,0:T(1,128)}', space=vmem, size = 0x9000, scoped, tag = 'internal scratch']
  %s0 = inlined_call_operand.vmem [shape: f32[17,16,128], index: 0, kind: input, shape index: {}]
  %s1 = inlined_call_operand.vmem [shape: f32[17,8,128], index: 1, kind: input, shape index: {}]
  %s2 = inlined_call_operand.vmem [shape: f32[16], index: 2, kind: input, shape index: {}]
  %s3 = inlined_call_operand.vmem [shape: f32[4], index: 3, kind: input, shape index: {}]
  %s4 = inlined_call_operand.vmem [shape: f32[64], index: 4, kind: input, shape index: {}]
  %s5 = inlined_call_operand.vmem [shape: f32[4], index: 5, kind: input, shape index: {}]
  %s6 = inlined_call_operand.vmem [shape: f32[16,4,7,128], index: 6, kind: input, shape index: {}]
  %s7 = inlined_call_operand.vmem [shape: f32[4,128], index: 7, kind: input, shape index: {}]
  %s8 = inlined_call_operand.hbm [shape: f32[4,128], index: 8, kind: output, shape index: {}]
  %s9 = sld [smem:[#allocation0]]
  $region58: #{tpu_custom_call.1} parent=0
    _
  %s11 = ssub.s32 1, %s9
  %s12 = scalar_select 0, %s11, %s9
  $region1: #{tpu_custom_call.1} parent=0
    #allocation2 [shape = 'u8[512]{0}', space=smem, size = 0x200, scoped, tag = 'input window, operand 2, single buffered']
    #allocation3 [shape = 's32[1]{0}', space=sflag, size = 0x4, scoped, tag = 'scoped memory for tpu_custom_call.1']
    #allocation4 [shape = 's32[1]{0}', space=sflag, size = 0x4, scoped, tag = 'scoped memory for tpu_custom_call.1']
    #allocation5 [shape = 'u8[512]{0}', space=smem, size = 0x200, scoped, tag = 'input window, operand 3, single buffered']
    #allocation6 [shape = 's32[1]{0}', space=sflag, size = 0x4, scoped, tag = 'scoped memory for tpu_custom_call.1']
    #allocation7 [shape = 'u8[512]{0}', space=smem, size = 0x200, scoped, tag = 'input window, operand 4, single buffered']
    #allocation8 [shape = 'u8[512]{0}', space=smem, size = 0x200, scoped, tag = 'input window, operand 5, single buffered']
    #allocation9 [shape = 's32[1]{0}', space=sflag, size = 0x4, scoped, tag = 'scoped memory for tpu_custom_call.1']
    #allocation10 [shape = 'u8[2048]{0}', space=vmem, size = 0x800, scoped, tag = 'output window, operand 0, single buffered']
    %13 = vsyncpa [#allocation4], 0
    %14 = vsyncpa [#allocation6], 0
    %15 = vsyncpa [#allocation9], 0
    %16 = vsyncpa [#allocation3], 0
    // Predicated region
    $region2: #{tpu_custom_call.1} parent=1 // pred_check
      _
    $region3: #{tpu_custom_call.1} parent=1 // pred_check_branch
      %18 = sbr.rel (0) target = $region5
    $region4: #{tpu_custom_call.1} parent=1 // pred_region
      _
    $region5: #{tpu_custom_call.1} parent=1 // pred_fallthru
      _
    // Predicated region
    $region6: #{tpu_custom_call.1} parent=1 // pred_check
      _
    $region7: #{tpu_custom_call.1} parent=1 // pred_check_branch
      %20 = sbr.rel (0) target = $region9
    $region8: #{tpu_custom_call.1} parent=1 // pred_region
      _
    $region9: #{tpu_custom_call.1} parent=1 // pred_fallthru
      _
    // Predicated region
    $region10: #{tpu_custom_call.1} parent=1 // pred_check
      _
    $region11: #{tpu_custom_call.1} parent=1 // pred_check_branch
      %22 = sbr.rel (0) target = $region13
    $region12: #{tpu_custom_call.1} parent=1 // pred_region
      %24 = vsyncadd [#allocation4], 0
      %s26 = sshll.u32 %s2, 4
      %s27 = int_to_ptr.vmem [resolvable:$true] %s26
      %29 = dma.vmem_to_smem %s27, 16, [#allocation2], [#allocation4]
    $region13: #{tpu_custom_call.1} parent=1 // pred_fallthru
      _
    // Predicated region
    $region14: #{tpu_custom_call.1} parent=1 // pred_check
      _
    $region15: #{tpu_custom_call.1} parent=1 // pred_check_branch
      %31 = sbr.rel (0) target = $region17
    $region16: #{tpu_custom_call.1} parent=1 // pred_region
      %33 = vsyncadd [#allocation6], 0
      %s35 = sshll.u32 %s3, 4
      %s36 = int_to_ptr.vmem [resolvable:$true] %s35
      %38 = dma.vmem_to_smem %s36, 16, [#allocation5], [#allocation6]
    $region17: #{tpu_custom_call.1} parent=1 // pred_fallthru
      _
    // Predicated region
    $region18: #{tpu_custom_call.1} parent=1 // pred_check
      _
    $region19: #{tpu_custom_call.1} parent=1 // pred_check_branch
      %40 = sbr.rel (0) target = $region21
    $region20: #{tpu_custom_call.1} parent=1 // pred_region
      %42 = vsyncadd [#allocation6], 0
      %s44 = sshll.u32 %s4, 4
      %s45 = int_to_ptr.vmem [resolvable:$true] %s44
      %47 = dma.vmem_to_smem %s45, 16, [#allocation7], [#allocation6]
    $region21: #{tpu_custom_call.1} parent=1 // pred_fallthru
      _
    // Predicated region
    $region22: #{tpu_custom_call.1} parent=1 // pred_check
      _
    $region23: #{tpu_custom_call.1} parent=1 // pred_check_branch
      %49 = sbr.rel (0) target = $region25
    $region24: #{tpu_custom_call.1} parent=1 // pred_region
      %51 = vsyncadd [#allocation9], 0
      %s53 = sshll.u32 %s5, 4
      %s54 = int_to_ptr.vmem [resolvable:$true] %s53
      %56 = dma.vmem_to_smem %s54, 16, [#allocation8], [#allocation9]
    $region25: #{tpu_custom_call.1} parent=1 // pred_fallthru
      _
    // Predicated region
    $region26: #{tpu_custom_call.1} parent=1 // pred_check
      _
    $region27: #{tpu_custom_call.1} parent=1 // pred_check_branch
      %58 = sbr.rel (0) target = $region29
    $region28: #{tpu_custom_call.1} parent=1 // pred_region
      _
    $region29: #{tpu_custom_call.1} parent=1 // pred_fallthru
      _
    // Predicated region
    $region30: #{tpu_custom_call.1} parent=1 // pred_check
      _
    $region31: #{tpu_custom_call.1} parent=1 // pred_check_branch
      %60 = sbr.rel (0) target = $region33
    $region32: #{tpu_custom_call.1} parent=1 // pred_region
      _
    $region33: #{tpu_custom_call.1} parent=1 // pred_fallthru
      _
    // Predicated region
    $region34: #{tpu_custom_call.1} parent=1 // pred_check
      _
    $region35: #{tpu_custom_call.1} parent=1 // pred_check_branch
      %62 = sbr.rel (0) target = $region37
    $region36: #{tpu_custom_call.1} parent=1 // pred_region
      %64 = dma.done [#allocation4], 16
    $region37: #{tpu_custom_call.1} parent=1 // pred_fallthru
      _
    // Predicated region
    $region38: #{tpu_custom_call.1} parent=1 // pred_check
      _
    $region39: #{tpu_custom_call.1} parent=1 // pred_check_branch
      %66 = sbr.rel (0) target = $region41
    $region40: #{tpu_custom_call.1} parent=1 // pred_region
      %68 = dma.done [#allocation6], 16
    $region41: #{tpu_custom_call.1} parent=1 // pred_fallthru
      _
    // Predicated region
    $region42: #{tpu_custom_call.1} parent=1 // pred_check
      _
    $region43: #{tpu_custom_call.1} parent=1 // pred_check_branch
      %70 = sbr.rel (0) target = $region45
    $region44: #{tpu_custom_call.1} parent=1 // pred_region
      %72 = dma.done [#allocation6], 16
    $region45: #{tpu_custom_call.1} parent=1 // pred_fallthru
      _
    // Predicated region
    $region46: #{tpu_custom_call.1} parent=1 // pred_check
      _
    $region47: #{tpu_custom_call.1} parent=1 // pred_check_branch
      %74 = sbr.rel (0) target = $region49
    $region48: #{tpu_custom_call.1} parent=1 // pred_region
      %76 = dma.done [#allocation9], 16
    $region49: #{tpu_custom_call.1} parent=1 // pred_fallthru
      _
    %77 = sfence
    %v78 = vld [vmem:[%s0] sm:$0xff]
    %v79 = vld [vmem:[%s0 + $0x10] sm:$0xff]
    %v80 = vld [vmem:[%s0 + $0x20] sm:$0xff]
    %v81 = vld [vmem:[%s0 + $0x30] sm:$0xff]
    %v82 = vld [vmem:[%s0 + $0x40] sm:$0xff]
    %v83 = vld [vmem:[%s0 + $0x50] sm:$0xff]
    %v84 = vld [vmem:[%s0 + $0x60] sm:$0xff]
    %v85 = vld [vmem:[%s0 + $0x70] sm:$0xff]
    %v86 = vld [vmem:[%s0 + $0x80] sm:$0xff]
    %v87 = vld [vmem:[%s0 + $0x90] sm:$0xff]
    %v88 = vld [vmem:[%s0 + $0xa0] sm:$0xff]
    %v89 = vld [vmem:[%s0 + $0xb0] sm:$0xff]
    %v90 = vld [vmem:[%s0 + $0xc0] sm:$0xff]
    %v91 = vld [vmem:[%s0 + $0xd0] sm:$0xff]
    %v92 = vld [vmem:[%s0 + $0xe0] sm:$0xff]
    %v93 = vld [vmem:[%s0 + $0xf0] sm:$0xff]
    %s94 = scalar_lea.vmem %s0, 16
    %v95 = vld [vmem:[%s94] sm:$0xff]
    %v96 = vld [vmem:[%s94 + $0x10] sm:$0xff]
    %v97 = vld [vmem:[%s94 + $0x20] sm:$0xff]
    %v98 = vld [vmem:[%s94 + $0x30] sm:$0xff]
    %v99 = vld [vmem:[%s94 + $0x40] sm:$0xff]
    %v100 = vld [vmem:[%s94 + $0x50] sm:$0xff]
    %v101 = vld [vmem:[%s94 + $0x60] sm:$0xff]
    %v102 = vld [vmem:[%s94 + $0x70] sm:$0xff]
    %v103 = vld [vmem:[%s94 + $0x80] sm:$0xff]
    %v104 = vld [vmem:[%s94 + $0x90] sm:$0xff]
    %v105 = vld [vmem:[%s94 + $0xa0] sm:$0xff]
    %v106 = vld [vmem:[%s94 + $0xb0] sm:$0xff]
    %v107 = vld [vmem:[%s94 + $0xc0] sm:$0xff]
    %v108 = vld [vmem:[%s94 + $0xd0] sm:$0xff]
    %v109 = vld [vmem:[%s94 + $0xe0] sm:$0xff]
    %v110 = vld [vmem:[%s94 + $0xf0] sm:$0xff]
    %v111 = vld [vmem:[%s1] sm:$0xff]
    %v112 = vld [vmem:[%s1 + $0x8] sm:$0xff]
    %v113 = vld [vmem:[%s1 + $0x10] sm:$0xff]
    %v114 = vld [vmem:[%s1 + $0x18] sm:$0xff]
    %v115 = vld [vmem:[%s1 + $0x20] sm:$0xff]
    %v116 = vld [vmem:[%s1 + $0x28] sm:$0xff]
    %v117 = vld [vmem:[%s1 + $0x30] sm:$0xff]
    %v118 = vld [vmem:[%s1 + $0x38] sm:$0xff]
    %v119 = vld [vmem:[%s1 + $0x40] sm:$0xff]
    %v120 = vld [vmem:[%s1 + $0x48] sm:$0xff]
    %v121 = vld [vmem:[%s1 + $0x50] sm:$0xff]
    %v122 = vld [vmem:[%s1 + $0x58] sm:$0xff]
    %v123 = vld [vmem:[%s1 + $0x60] sm:$0xff]
    %v124 = vld [vmem:[%s1 + $0x68] sm:$0xff]
    %v125 = vld [vmem:[%s1 + $0x70] sm:$0xff]
    %v126 = vld [vmem:[%s1 + $0x78] sm:$0xff]
    %s127 = scalar_lea.vmem %s1, 8
    %v128 = vld [vmem:[%s127] sm:$0xff]
    %v129 = vld [vmem:[%s127 + $0x8] sm:$0xff]
    %v130 = vld [vmem:[%s127 + $0x10] sm:$0xff]
    %v131 = vld [vmem:[%s127 + $0x18] sm:$0xff]
    %v132 = vld [vmem:[%s127 + $0x20] sm:$0xff]
    %v133 = vld [vmem:[%s127 + $0x28] sm:$0xff]
    %v134 = vld [vmem:[%s127 + $0x30] sm:$0xff]
    %v135 = vld [vmem:[%s127 + $0x38] sm:$0xff]
    %v136 = vld [vmem:[%s127 + $0x40] sm:$0xff]
    %v137 = vld [vmem:[%s127 + $0x48] sm:$0xff]
    %v138 = vld [vmem:[%s127 + $0x50] sm:$0xff]
    %v139 = vld [vmem:[%s127 + $0x58] sm:$0xff]
    %v140 = vld [vmem:[%s127 + $0x60] sm:$0xff]
    %v141 = vld [vmem:[%s127 + $0x68] sm:$0xff]
    %v142 = vld [vmem:[%s127 + $0x70] sm:$0xff]
    %v143 = vld [vmem:[%s127 + $0x78] sm:$0xff]
    %v144 = vld [vmem:[%s0 + $0x1] sm:$0xff]
    %v145 = vld [vmem:[%s0 + $0x11] sm:$0xff]
    %v146 = vld [vmem:[%s0 + $0x21] sm:$0xff]
    %v147 = vld [vmem:[%s0 + $0x31] sm:$0xff]
    %v148 = vld [vmem:[%s0 + $0x41] sm:$0xff]
    %v149 = vld [vmem:[%s0 + $0x51] sm:$0xff]
    %v150 = vld [vmem:[%s0 + $0x61] sm:$0xff]
    %v151 = vld [vmem:[%s0 + $0x71] sm:$0xff]
    %v152 = vld [vmem:[%s0 + $0x81] sm:$0xff]
    %v153 = vld [vmem:[%s0 + $0x91] sm:$0xff]
    %v154 = vld [vmem:[%s0 + $0xa1] sm:$0xff]
    %v155 = vld [vmem:[%s0 + $0xb1] sm:$0xff]
    %v156 = vld [vmem:[%s0 + $0xc1] sm:$0xff]
    %v157 = vld [vmem:[%s0 + $0xd1] sm:$0xff]
    %v158 = vld [vmem:[%s0 + $0xe1] sm:$0xff]
    %v159 = vld [vmem:[%s0 + $0xf1] sm:$0xff]
    %v160 = vld [vmem:[%s94 + $0x1] sm:$0xff]
    %v161 = vld [vmem:[%s94 + $0x11] sm:$0xff]
    %v162 = vld [vmem:[%s94 + $0x21] sm:$0xff]
    %v163 = vld [vmem:[%s94 + $0x31] sm:$0xff]
    %v164 = vld [vmem:[%s94 + $0x41] sm:$0xff]
    %v165 = vld [vmem:[%s94 + $0x51] sm:$0xff]
    %v166 = vld [vmem:[%s94 + $0x61] sm:$0xff]
    %v167 = vld [vmem:[%s94 + $0x71] sm:$0xff]
    %v168 = vld [vmem:[%s94 + $0x81] sm:$0xff]
    %v169 = vld [vmem:[%s94 + $0x91] sm:$0xff]
    %v170 = vld [vmem:[%s94 + $0xa1] sm:$0xff]
    %v171 = vld [vmem:[%s94 + $0xb1] sm:$0xff]
    %v172 = vld [vmem:[%s94 + $0xc1] sm:$0xff]
    %v173 = vld [vmem:[%s94 + $0xd1] sm:$0xff]
    %v174 = vld [vmem:[%s94 + $0xe1] sm:$0xff]
    %v175 = vld [vmem:[%s94 + $0xf1] sm:$0xff]
    %s176 = sld [smem:[#allocation2]]
    %s177 = sld [smem:[#allocation2 + $0x1]]
    %s178 = sld [smem:[#allocation2 + $0x2]]
    %s179 = sld [smem:[#allocation2 + $0x3]]
    %v180 = vstv %s176
    %v181 = vmul.f32 %v180, %v78
    %v182 = vmul.f32 %v180, %v79
    %v183 = vmul.f32 %v180, %v80
    %v184 = vmul.f32 %v180, %v81
    %v185 = vmul.f32 %v180, %v82
    %v186 = vmul.f32 %v180, %v83
    %v187 = vmul.f32 %v180, %v84
    %v188 = vmul.f32 %v180, %v85
    %v189 = vmul.f32 %v180, %v86
    %v190 = vmul.f32 %v180, %v87
    %v191 = vmul.f32 %v180, %v88
    %v192 = vmul.f32 %v180, %v89
    %v193 = vmul.f32 %v180, %v90
    %v194 = vmul.f32 %v180, %v91
    %v195 = vmul.f32 %v180, %v92
    %v196 = vmul.f32 %v180, %v93
    %v197 = vstv %s177
    %v198 = vmul.f32 %v197, %v111
    %v199 = vmul.f32 %v197, %v112
    %v200 = vmul.f32 %v197, %v113
    %v201 = vmul.f32 %v197, %v114
    %v202 = vmul.f32 %v197, %v115
    %v203 = vmul.f32 %v197, %v116
    %v204 = vmul.f32 %v197, %v117
    %v205 = vmul.f32 %v197, %v118
    %v206 = vmul.f32 %v197, %v119
    %v207 = vmul.f32 %v197, %v120
    %v208 = vmul.f32 %v197, %v121
    %v209 = vmul.f32 %v197, %v122
    %v210 = vmul.f32 %v197, %v123
    %v211 = vmul.f32 %v197, %v124
    %v212 = vmul.f32 %v197, %v125
    %v213 = vmul.f32 %v197, %v126
    %v214 = vadd.f32 %v181, %v198
    %v215 = vadd.f32 %v182, %v199
    %v216 = vadd.f32 %v183, %v200
    %v217 = vadd.f32 %v184, %v201
    %v218 = vadd.f32 %v185, %v202
    %v219 = vadd.f32 %v186, %v203
    %v220 = vadd.f32 %v187, %v204
    %v221 = vadd.f32 %v188, %v205
    %v222 = vadd.f32 %v189, %v206
    %v223 = vadd.f32 %v190, %v207
    %v224 = vadd.f32 %v191, %v208
    %v225 = vadd.f32 %v192, %v209
    %v226 = vadd.f32 %v193, %v210
    %v227 = vadd.f32 %v194, %v211
    %v228 = vadd.f32 %v195, %v212
    %v229 = vadd.f32 %v196, %v213
    %v230 = vstv %s178
    %v231 = vmul.f32 %v230, %v95
    %v232 = vmul.f32 %v230, %v96
    %v233 = vmul.f32 %v230, %v97
    %v234 = vmul.f32 %v230, %v98
    %v235 = vmul.f32 %v230, %v99
    %v236 = vmul.f32 %v230, %v100
    %v237 = vmul.f32 %v230, %v101
    %v238 = vmul.f32 %v230, %v102
    %v239 = vmul.f32 %v230, %v103
    %v240 = vmul.f32 %v230, %v104
    %v241 = vmul.f32 %v230, %v105
    %v242 = vmul.f32 %v230, %v106
    %v243 = vmul.f32 %v230, %v107
    %v244 = vmul.f32 %v230, %v108
    %v245 = vmul.f32 %v230, %v109
    %v246 = vmul.f32 %v230, %v110
    %v247 = vadd.f32 %v214, %v231
    %v248 = vadd.f32 %v215, %v232
    %v249 = vadd.f32 %v216, %v233
    %v250 = vadd.f32 %v217, %v234
    %v251 = vadd.f32 %v218, %v235
    %v252 = vadd.f32 %v219, %v236
    %v253 = vadd.f32 %v220, %v237
    %v254 = vadd.f32 %v221, %v238
    %v255 = vadd.f32 %v222, %v239
    %v256 = vadd.f32 %v223, %v240
    %v257 = vadd.f32 %v224, %v241
    %v258 = vadd.f32 %v225, %v242
    %v259 = vadd.f32 %v226, %v243
    %v260 = vadd.f32 %v227, %v244
    %v261 = vadd.f32 %v228, %v245
    %v262 = vadd.f32 %v229, %v246
    %v263 = vstv %s179
    %v264 = vmul.f32 %v263, %v128
    %v265 = vmul.f32 %v263, %v129
    %v266 = vmul.f32 %v263, %v130
    %v267 = vmul.f32 %v263, %v131
    %v268 = vmul.f32 %v263, %v132
    %v269 = vmul.f32 %v263, %v133
    %v270 = vmul.f32 %v263, %v134
    %v271 = vmul.f32 %v263, %v135
    %v272 = vmul.f32 %v263, %v136
    %v273 = vmul.f32 %v263, %v137
    %v274 = vmul.f32 %v263, %v138
    %v275 = vmul.f32 %v263, %v139
    %v276 = vmul.f32 %v263, %v140
    %v277 = vmul.f32 %v263, %v141
    %v278 = vmul.f32 %v263, %v142
    %v279 = vmul.f32 %v263, %v143
    %v280 = vadd.f32 %v247, %v264
    %v281 = vadd.f32 %v248, %v265
    %v282 = vadd.f32 %v249, %v266
    %v283 = vadd.f32 %v250, %v267
    %v284 = vadd.f32 %v251, %v268
    %v285 = vadd.f32 %v252, %v269
    %v286 = vadd.f32 %v253, %v270
    %v287 = vadd.f32 %v254, %v271
    %v288 = vadd.f32 %v255, %v272
    %v289 = vadd.f32 %v256, %v273
    %v290 = vadd.f32 %v257, %v274
    %v291 = vadd.f32 %v258, %v275
    %v292 = vadd.f32 %v259, %v276
    %v293 = vadd.f32 %v260, %v277
    %v294 = vadd.f32 %v261, %v278
    %v295 = vadd.f32 %v262, %v279
    %v296 = vmul.f32 %v180, %v111
    %v297 = vmul.f32 %v180, %v112
    %v298 = vmul.f32 %v180, %v113
    %v299 = vmul.f32 %v180, %v114
    %v300 = vmul.f32 %v180, %v115
    %v301 = vmul.f32 %v180, %v116
    %v302 = vmul.f32 %v180, %v117
    %v303 = vmul.f32 %v180, %v118
    %v304 = vmul.f32 %v180, %v119
    %v305 = vmul.f32 %v180, %v120
    %v306 = vmul.f32 %v180, %v121
    %v307 = vmul.f32 %v180, %v122
    %v308 = vmul.f32 %v180, %v123
    %v309 = vmul.f32 %v180, %v124
    %v310 = vmul.f32 %v180, %v125
    %v311 = vmul.f32 %v180, %v126
    %v312 = vmul.f32 %v197, %v144
    %v313 = vmul.f32 %v197, %v145
    %v314 = vmul.f32 %v197, %v146
    %v315 = vmul.f32 %v197, %v147
    %v316 = vmul.f32 %v197, %v148
    %v317 = vmul.f32 %v197, %v149
    %v318 = vmul.f32 %v197, %v150
    %v319 = vmul.f32 %v197, %v151
    %v320 = vmul.f32 %v197, %v152
    %v321 = vmul.f32 %v197, %v153
    %v322 = vmul.f32 %v197, %v154
    %v323 = vmul.f32 %v197, %v155
    %v324 = vmul.f32 %v197, %v156
    %v325 = vmul.f32 %v197, %v157
    %v326 = vmul.f32 %v197, %v158
    %v327 = vmul.f32 %v197, %v159
    %v328 = vadd.f32 %v296, %v312
    %v329 = vadd.f32 %v297, %v313
    %v330 = vadd.f32 %v298, %v314
    %v331 = vadd.f32 %v299, %v315
    %v332 = vadd.f32 %v300, %v316
    %v333 = vadd.f32 %v301, %v317
    %v334 = vadd.f32 %v302, %v318
    %v335 = vadd.f32 %v303, %v319
    %v336 = vadd.f32 %v304, %v320
    %v337 = vadd.f32 %v305, %v321
    %v338 = vadd.f32 %v306, %v322
    %v339 = vadd.f32 %v307, %v323
    %v340 = vadd.f32 %v308, %v324
    %v341 = vadd.f32 %v309, %v325
    %v342 = vadd.f32 %v310, %v326
    %v343 = vadd.f32 %v311, %v327
    %v344 = vmul.f32 %v230, %v128
    %v345 = vmul.f32 %v230, %v129
    %v346 = vmul.f32 %v230, %v130
    %v347 = vmul.f32 %v230, %v131
    %v348 = vmul.f32 %v230, %v132
    %v349 = vmul.f32 %v230, %v133
    %v350 = vmul.f32 %v230, %v134
    %v351 = vmul.f32 %v230, %v135
    %v352 = vmul.f32 %v230, %v136
    %v353 = vmul.f32 %v230, %v137
    %v354 = vmul.f32 %v230, %v138
    %v355 = vmul.f32 %v230, %v139
    %v356 = vmul.f32 %v230, %v140
    %v357 = vmul.f32 %v230, %v141
    %v358 = vmul.f32 %v230, %v142
    %v359 = vmul.f32 %v230, %v143
    %v360 = vadd.f32 %v328, %v344
    %v361 = vadd.f32 %v329, %v345
    %v362 = vadd.f32 %v330, %v346
    %v363 = vadd.f32 %v331, %v347
    %v364 = vadd.f32 %v332, %v348
    %v365 = vadd.f32 %v333, %v349
    %v366 = vadd.f32 %v334, %v350
    %v367 = vadd.f32 %v335, %v351
    %v368 = vadd.f32 %v336, %v352
    %v369 = vadd.f32 %v337, %v353
    %v370 = vadd.f32 %v338, %v354
    %v371 = vadd.f32 %v339, %v355
    %v372 = vadd.f32 %v340, %v356
    %v373 = vadd.f32 %v341, %v357
    %v374 = vadd.f32 %v342, %v358
    %v375 = vadd.f32 %v343, %v359
    %v376 = vmul.f32 %v263, %v160
    %v377 = vmul.f32 %v263, %v161
    %v378 = vmul.f32 %v263, %v162
    %v379 = vmul.f32 %v263, %v163
    %v380 = vmul.f32 %v263, %v164
    %v381 = vmul.f32 %v263, %v165
    %v382 = vmul.f32 %v263, %v166
    %v383 = vmul.f32 %v263, %v167
    %v384 = vmul.f32 %v263, %v168
    %v385 = vmul.f32 %v263, %v169
    %v386 = vmul.f32 %v263, %v170
    %v387 = vmul.f32 %v263, %v171
    %v388 = vmul.f32 %v263, %v172
    %v389 = vmul.f32 %v263, %v173
    %v390 = vmul.f32 %v263, %v174
    %v391 = vmul.f32 %v263, %v175
    %v392 = vadd.f32 %v360, %v376
    %v393 = vadd.f32 %v361, %v377
    %v394 = vadd.f32 %v362, %v378
    %v395 = vadd.f32 %v363, %v379
    %v396 = vadd.f32 %v364, %v380
    %v397 = vadd.f32 %v365, %v381
    %v398 = vadd.f32 %v366, %v382
    %v399 = vadd.f32 %v367, %v383
    %v400 = vadd.f32 %v368, %v384
    %v401 = vadd.f32 %v369, %v385
    %v402 = vadd.f32 %v370, %v386
    %v403 = vadd.f32 %v371, %v387
    %v404 = vadd.f32 %v372, %v388
    %v405 = vadd.f32 %v373, %v389
    %v406 = vadd.f32 %v374, %v390
    %v407 = vadd.f32 %v375, %v391
    %v408 = vmax.f32 %v280, %v392
    %v409 = vmax.f32 %v281, %v393
    %v410 = vmax.f32 %v282, %v394
    %v411 = vmax.f32 %v283, %v395
    %v412 = vmax.f32 %v284, %v396
    %v413 = vmax.f32 %v285, %v397
    %v414 = vmax.f32 %v286, %v398
    %v415 = vmax.f32 %v287, %v399
    %v416 = vmax.f32 %v288, %v400
    %v417 = vmax.f32 %v289, %v401
    %v418 = vmax.f32 %v290, %v402
    %v419 = vmax.f32 %v291, %v403
    %v420 = vmax.f32 %v292, %v404
    %v421 = vmax.f32 %v293, %v405
    %v422 = vmax.f32 %v294, %v406
    %v423 = vmax.f32 %v295, %v407
    %v424 = vmax.f32 %v408, %v409
    %v425 = vmax.f32 %v410, %v411
    %v426 = vmax.f32 %v412, %v413
    %v427 = vmax.f32 %v414, %v415
    %v428 = vmax.f32 %v416, %v417
    %v429 = vmax.f32 %v418, %v419
    %v430 = vmax.f32 %v420, %v421
    %v431 = vmax.f32 %v422, %v423
    %s432 = sld [smem:[#allocation5]]
    %v433 = vstv %s432
    %v434 = vadd.f32 %v424, %v433
    %v435 = vadd.f32 %v425, %v433
    %v436 = vadd.f32 %v426, %v433
    %v437 = vadd.f32 %v427, %v433
    %v438 = vadd.f32 %v428, %v433
    %v439 = vadd.f32 %v429, %v433
    %v440 = vadd.f32 %v430, %v433
    %v441 = vadd.f32 %v431, %v433
    %v442 = vmax.f32 %v434, 0.0
    %v443 = vmax.f32 %v435, 0.0
    %v444 = vmax.f32 %v436, 0.0
    %v445 = vmax.f32 %v437, 0.0
    %v446 = vmax.f32 %v438, 0.0
    %v447 = vmax.f32 %v439, 0.0
    %v448 = vmax.f32 %v440, 0.0
    %v449 = vmax.f32 %v441, 0.0
    %s450 = sld [smem:[#allocation2 + $0x4]]
    %s451 = sld [smem:[#allocation2 + $0x5]]
    %s452 = sld [smem:[#allocation2 + $0x6]]
    %s453 = sld [smem:[#allocation2 + $0x7]]
    %v454 = vstv %s450
    %v455 = vmul.f32 %v454, %v78
    %v456 = vmul.f32 %v454, %v79
    %v457 = vmul.f32 %v454, %v80
    %v458 = vmul.f32 %v454, %v81
    %v459 = vmul.f32 %v454, %v82
    %v460 = vmul.f32 %v454, %v83
    %v461 = vmul.f32 %v454, %v84
    %v462 = vmul.f32 %v454, %v85
    %v463 = vmul.f32 %v454, %v86
    %v464 = vmul.f32 %v454, %v87
    %v465 = vmul.f32 %v454, %v88
    %v466 = vmul.f32 %v454, %v89
    %v467 = vmul.f32 %v454, %v90
    %v468 = vmul.f32 %v454, %v91
    %v469 = vmul.f32 %v454, %v92
    %v470 = vmul.f32 %v454, %v93
    %v471 = vstv %s451
    %v472 = vmul.f32 %v471, %v111
    %v473 = vmul.f32 %v471, %v112
    %v474 = vmul.f32 %v471, %v113
    %v475 = vmul.f32 %v471, %v114
    %v476 = vmul.f32 %v471, %v115
    %v477 = vmul.f32 %v471, %v116
    %v478 = vmul.f32 %v471, %v117
    %v479 = vmul.f32 %v471, %v118
    %v480 = vmul.f32 %v471, %v119
    %v481 = vmul.f32 %v471, %v120
    %v482 = vmul.f32 %v471, %v121
    %v483 = vmul.f32 %v471, %v122
    %v484 = vmul.f32 %v471, %v123
    %v485 = vmul.f32 %v471, %v124
    %v486 = vmul.f32 %v471, %v125
    %v487 = vmul.f32 %v471, %v126
    %v488 = vadd.f32 %v455, %v472
    %v489 = vadd.f32 %v456, %v473
    %v490 = vadd.f32 %v457, %v474
    %v491 = vadd.f32 %v458, %v475
    %v492 = vadd.f32 %v459, %v476
    %v493 = vadd.f32 %v460, %v477
    %v494 = vadd.f32 %v461, %v478
    %v495 = vadd.f32 %v462, %v479
    %v496 = vadd.f32 %v463, %v480
    %v497 = vadd.f32 %v464, %v481
    %v498 = vadd.f32 %v465, %v482
    %v499 = vadd.f32 %v466, %v483
    %v500 = vadd.f32 %v467, %v484
    %v501 = vadd.f32 %v468, %v485
    %v502 = vadd.f32 %v469, %v486
    %v503 = vadd.f32 %v470, %v487
    %v504 = vstv %s452
    %v505 = vmul.f32 %v504, %v95
    %v506 = vmul.f32 %v504, %v96
    %v507 = vmul.f32 %v504, %v97
    %v508 = vmul.f32 %v504, %v98
    %v509 = vmul.f32 %v504, %v99
    %v510 = vmul.f32 %v504, %v100
    %v511 = vmul.f32 %v504, %v101
    %v512 = vmul.f32 %v504, %v102
    %v513 = vmul.f32 %v504, %v103
    %v514 = vmul.f32 %v504, %v104
    %v515 = vmul.f32 %v504, %v105
    %v516 = vmul.f32 %v504, %v106
    %v517 = vmul.f32 %v504, %v107
    %v518 = vmul.f32 %v504, %v108
    %v519 = vmul.f32 %v504, %v109
    %v520 = vmul.f32 %v504, %v110
    %v521 = vadd.f32 %v488, %v505
    %v522 = vadd.f32 %v489, %v506
    %v523 = vadd.f32 %v490, %v507
    %v524 = vadd.f32 %v491, %v508
    %v525 = vadd.f32 %v492, %v509
    %v526 = vadd.f32 %v493, %v510
    %v527 = vadd.f32 %v494, %v511
    %v528 = vadd.f32 %v495, %v512
    %v529 = vadd.f32 %v496, %v513
    %v530 = vadd.f32 %v497, %v514
    %v531 = vadd.f32 %v498, %v515
    %v532 = vadd.f32 %v499, %v516
    %v533 = vadd.f32 %v500, %v517
    %v534 = vadd.f32 %v501, %v518
    %v535 = vadd.f32 %v502, %v519
    %v536 = vadd.f32 %v503, %v520
    %v537 = vstv %s453
    %v538 = vmul.f32 %v537, %v128
    %v539 = vmul.f32 %v537, %v129
    %v540 = vmul.f32 %v537, %v130
    %v541 = vmul.f32 %v537, %v131
    %v542 = vmul.f32 %v537, %v132
    %v543 = vmul.f32 %v537, %v133
    %v544 = vmul.f32 %v537, %v134
    %v545 = vmul.f32 %v537, %v135
    %v546 = vmul.f32 %v537, %v136
    %v547 = vmul.f32 %v537, %v137
    %v548 = vmul.f32 %v537, %v138
    %v549 = vmul.f32 %v537, %v139
    %v550 = vmul.f32 %v537, %v140
    %v551 = vmul.f32 %v537, %v141
    %v552 = vmul.f32 %v537, %v142
    %v553 = vmul.f32 %v537, %v143
    %v554 = vadd.f32 %v521, %v538
    %v555 = vadd.f32 %v522, %v539
    %v556 = vadd.f32 %v523, %v540
    %v557 = vadd.f32 %v524, %v541
    %v558 = vadd.f32 %v525, %v542
    %v559 = vadd.f32 %v526, %v543
    %v560 = vadd.f32 %v527, %v544
    %v561 = vadd.f32 %v528, %v545
    %v562 = vadd.f32 %v529, %v546
    %v563 = vadd.f32 %v530, %v547
    %v564 = vadd.f32 %v531, %v548
    %v565 = vadd.f32 %v532, %v549
    %v566 = vadd.f32 %v533, %v550
    %v567 = vadd.f32 %v534, %v551
    %v568 = vadd.f32 %v535, %v552
    %v569 = vadd.f32 %v536, %v553
    %v570 = vmul.f32 %v454, %v111
    %v571 = vmul.f32 %v454, %v112
    %v572 = vmul.f32 %v454, %v113
    %v573 = vmul.f32 %v454, %v114
    %v574 = vmul.f32 %v454, %v115
    %v575 = vmul.f32 %v454, %v116
    %v576 = vmul.f32 %v454, %v117
    %v577 = vmul.f32 %v454, %v118
    %v578 = vmul.f32 %v454, %v119
    %v579 = vmul.f32 %v454, %v120
    %v580 = vmul.f32 %v454, %v121
    %v581 = vmul.f32 %v454, %v122
    %v582 = vmul.f32 %v454, %v123
    %v583 = vmul.f32 %v454, %v124
    %v584 = vmul.f32 %v454, %v125
    %v585 = vmul.f32 %v454, %v126
    %v586 = vmul.f32 %v471, %v144
    %v587 = vmul.f32 %v471, %v145
    %v588 = vmul.f32 %v471, %v146
    %v589 = vmul.f32 %v471, %v147
    %v590 = vmul.f32 %v471, %v148
    %v591 = vmul.f32 %v471, %v149
    %v592 = vmul.f32 %v471, %v150
    %v593 = vmul.f32 %v471, %v151
    %v594 = vmul.f32 %v471, %v152
    %v595 = vmul.f32 %v471, %v153
    %v596 = vmul.f32 %v471, %v154
    %v597 = vmul.f32 %v471, %v155
    %v598 = vmul.f32 %v471, %v156
    %v599 = vmul.f32 %v471, %v157
    %v600 = vmul.f32 %v471, %v158
    %v601 = vmul.f32 %v471, %v159
    %v602 = vadd.f32 %v570, %v586
    %v603 = vadd.f32 %v571, %v587
    %v604 = vadd.f32 %v572, %v588
    %v605 = vadd.f32 %v573, %v589
    %v606 = vadd.f32 %v574, %v590
    %v607 = vadd.f32 %v575, %v591
    %v608 = vadd.f32 %v576, %v592
    %v609 = vadd.f32 %v577, %v593
    %v610 = vadd.f32 %v578, %v594
    %v611 = vadd.f32 %v579, %v595
    %v612 = vadd.f32 %v580, %v596
    %v613 = vadd.f32 %v581, %v597
    %v614 = vadd.f32 %v582, %v598
    %v615 = vadd.f32 %v583, %v599
    %v616 = vadd.f32 %v584, %v600
    %v617 = vadd.f32 %v585, %v601
    %v618 = vmul.f32 %v504, %v128
    %v619 = vmul.f32 %v504, %v129
    %v620 = vmul.f32 %v504, %v130
    %v621 = vmul.f32 %v504, %v131
    %v622 = vmul.f32 %v504, %v132
    %v623 = vmul.f32 %v504, %v133
    %v624 = vmul.f32 %v504, %v134
    %v625 = vmul.f32 %v504, %v135
    %v626 = vmul.f32 %v504, %v136
    %v627 = vmul.f32 %v504, %v137
    %v628 = vmul.f32 %v504, %v138
    %v629 = vmul.f32 %v504, %v139
    %v630 = vmul.f32 %v504, %v140
    %v631 = vmul.f32 %v504, %v141
    %v632 = vmul.f32 %v504, %v142
    %v633 = vmul.f32 %v504, %v143
    %v634 = vadd.f32 %v602, %v618
    %v635 = vadd.f32 %v603, %v619
    %v636 = vadd.f32 %v604, %v620
    %v637 = vadd.f32 %v605, %v621
    %v638 = vadd.f32 %v606, %v622
    %v639 = vadd.f32 %v607, %v623
    %v640 = vadd.f32 %v608, %v624
    %v641 = vadd.f32 %v609, %v625
    %v642 = vadd.f32 %v610, %v626
    %v643 = vadd.f32 %v611, %v627
    %v644 = vadd.f32 %v612, %v628
    %v645 = vadd.f32 %v613, %v629
    %v646 = vadd.f32 %v614, %v630
    %v647 = vadd.f32 %v615, %v631
    %v648 = vadd.f32 %v616, %v632
    %v649 = vadd.f32 %v617, %v633
    %v650 = vmul.f32 %v537, %v160
    %v651 = vmul.f32 %v537, %v161
    %v652 = vmul.f32 %v537, %v162
    %v653 = vmul.f32 %v537, %v163
    %v654 = vmul.f32 %v537, %v164
    %v655 = vmul.f32 %v537, %v165
    %v656 = vmul.f32 %v537, %v166
    %v657 = vmul.f32 %v537, %v167
    %v658 = vmul.f32 %v537, %v168
    %v659 = vmul.f32 %v537, %v169
    %v660 = vmul.f32 %v537, %v170
    %v661 = vmul.f32 %v537, %v171
    %v662 = vmul.f32 %v537, %v172
    %v663 = vmul.f32 %v537, %v173
    %v664 = vmul.f32 %v537, %v174
    %v665 = vmul.f32 %v537, %v175
    %v666 = vadd.f32 %v634, %v650
    %v667 = vadd.f32 %v635, %v651
    %v668 = vadd.f32 %v636, %v652
    %v669 = vadd.f32 %v637, %v653
    %v670 = vadd.f32 %v638, %v654
    %v671 = vadd.f32 %v639, %v655
    %v672 = vadd.f32 %v640, %v656
    %v673 = vadd.f32 %v641, %v657
    %v674 = vadd.f32 %v642, %v658
    %v675 = vadd.f32 %v643, %v659
    %v676 = vadd.f32 %v644, %v660
    %v677 = vadd.f32 %v645, %v661
    %v678 = vadd.f32 %v646, %v662
    %v679 = vadd.f32 %v647, %v663
    %v680 = vadd.f32 %v648, %v664
    %v681 = vadd.f32 %v649, %v665
    %v682 = vmax.f32 %v554, %v666
    %v683 = vmax.f32 %v555, %v667
    %v684 = vmax.f32 %v556, %v668
    %v685 = vmax.f32 %v557, %v669
    %v686 = vmax.f32 %v558, %v670
    %v687 = vmax.f32 %v559, %v671
    %v688 = vmax.f32 %v560, %v672
    %v689 = vmax.f32 %v561, %v673
    %v690 = vmax.f32 %v562, %v674
    %v691 = vmax.f32 %v563, %v675
    %v692 = vmax.f32 %v564, %v676
    %v693 = vmax.f32 %v565, %v677
    %v694 = vmax.f32 %v566, %v678
    %v695 = vmax.f32 %v567, %v679
    %v696 = vmax.f32 %v568, %v680
    %v697 = vmax.f32 %v569, %v681
    %v698 = vmax.f32 %v682, %v683
    %v699 = vmax.f32 %v684, %v685
    %v700 = vmax.f32 %v686, %v687
    %v701 = vmax.f32 %v688, %v689
    %v702 = vmax.f32 %v690, %v691
    %v703 = vmax.f32 %v692, %v693
    %v704 = vmax.f32 %v694, %v695
    %v705 = vmax.f32 %v696, %v697
    %s706 = sld [smem:[#allocation5 + $0x1]]
    %v707 = vstv %s706
    %v708 = vadd.f32 %v698, %v707
    %v709 = vadd.f32 %v699, %v707
    %v710 = vadd.f32 %v700, %v707
    %v711 = vadd.f32 %v701, %v707
    %v712 = vadd.f32 %v702, %v707
    %v713 = vadd.f32 %v703, %v707
    %v714 = vadd.f32 %v704, %v707
    %v715 = vadd.f32 %v705, %v707
    %v716 = vmax.f32 %v708, 0.0
    %v717 = vmax.f32 %v709, 0.0
    %v718 = vmax.f32 %v710, 0.0
    %v719 = vmax.f32 %v711, 0.0
    %v720 = vmax.f32 %v712, 0.0
    %v721 = vmax.f32 %v713, 0.0
    %v722 = vmax.f32 %v714, 0.0
    %v723 = vmax.f32 %v715, 0.0
    %s724 = sld [smem:[#allocation2 + $0x8]]
    %s725 = sld [smem:[#allocation2 + $0x9]]
    %s726 = sld [smem:[#allocation2 + $0xa]]
    %s727 = sld [smem:[#allocation2 + $0xb]]
    %v728 = vstv %s724
    %v729 = vmul.f32 %v728, %v78
    %v730 = vmul.f32 %v728, %v79
    %v731 = vmul.f32 %v728, %v80
    %v732 = vmul.f32 %v728, %v81
    %v733 = vmul.f32 %v728, %v82
    %v734 = vmul.f32 %v728, %v83
    %v735 = vmul.f32 %v728, %v84
    %v736 = vmul.f32 %v728, %v85
    %v737 = vmul.f32 %v728, %v86
    %v738 = vmul.f32 %v728, %v87
    %v739 = vmul.f32 %v728, %v88
    %v740 = vmul.f32 %v728, %v89
    %v741 = vmul.f32 %v728, %v90
    %v742 = vmul.f32 %v728, %v91
    %v743 = vmul.f32 %v728, %v92
    %v744 = vmul.f32 %v728, %v93
    %v745 = vstv %s725
    %v746 = vmul.f32 %v745, %v111
    %v747 = vmul.f32 %v745, %v112
    %v748 = vmul.f32 %v745, %v113
    %v749 = vmul.f32 %v745, %v114
    %v750 = vmul.f32 %v745, %v115
    %v751 = vmul.f32 %v745, %v116
    %v752 = vmul.f32 %v745, %v117
    %v753 = vmul.f32 %v745, %v118
    %v754 = vmul.f32 %v745, %v119
    %v755 = vmul.f32 %v745, %v120
    %v756 = vmul.f32 %v745, %v121
    %v757 = vmul.f32 %v745, %v122
    %v758 = vmul.f32 %v745, %v123
    %v759 = vmul.f32 %v745, %v124
    %v760 = vmul.f32 %v745, %v125
    %v761 = vmul.f32 %v745, %v126
    %v762 = vadd.f32 %v729, %v746
    %v763 = vadd.f32 %v730, %v747
    %v764 = vadd.f32 %v731, %v748
    %v765 = vadd.f32 %v732, %v749
    %v766 = vadd.f32 %v733, %v750
    %v767 = vadd.f32 %v734, %v751
    %v768 = vadd.f32 %v735, %v752
    %v769 = vadd.f32 %v736, %v753
    %v770 = vadd.f32 %v737, %v754
    %v771 = vadd.f32 %v738, %v755
    %v772 = vadd.f32 %v739, %v756
    %v773 = vadd.f32 %v740, %v757
    %v774 = vadd.f32 %v741, %v758
    %v775 = vadd.f32 %v742, %v759
    %v776 = vadd.f32 %v743, %v760
    %v777 = vadd.f32 %v744, %v761
    %v778 = vstv %s726
    %v779 = vmul.f32 %v778, %v95
    %v780 = vmul.f32 %v778, %v96
    %v781 = vmul.f32 %v778, %v97
    %v782 = vmul.f32 %v778, %v98
    %v783 = vmul.f32 %v778, %v99
    %v784 = vmul.f32 %v778, %v100
    %v785 = vmul.f32 %v778, %v101
    %v786 = vmul.f32 %v778, %v102
    %v787 = vmul.f32 %v778, %v103
    %v788 = vmul.f32 %v778, %v104
    %v789 = vmul.f32 %v778, %v105
    %v790 = vmul.f32 %v778, %v106
    %v791 = vmul.f32 %v778, %v107
    %v792 = vmul.f32 %v778, %v108
    %v793 = vmul.f32 %v778, %v109
    %v794 = vmul.f32 %v778, %v110
    %v795 = vadd.f32 %v762, %v779
    %v796 = vadd.f32 %v763, %v780
    %v797 = vadd.f32 %v764, %v781
    %v798 = vadd.f32 %v765, %v782
    %v799 = vadd.f32 %v766, %v783
    %v800 = vadd.f32 %v767, %v784
    %v801 = vadd.f32 %v768, %v785
    %v802 = vadd.f32 %v769, %v786
    %v803 = vadd.f32 %v770, %v787
    %v804 = vadd.f32 %v771, %v788
    %v805 = vadd.f32 %v772, %v789
    %v806 = vadd.f32 %v773, %v790
    %v807 = vadd.f32 %v774, %v791
    %v808 = vadd.f32 %v775, %v792
    %v809 = vadd.f32 %v776, %v793
    %v810 = vadd.f32 %v777, %v794
    %v811 = vstv %s727
    %v812 = vmul.f32 %v811, %v128
    %v813 = vmul.f32 %v811, %v129
    %v814 = vmul.f32 %v811, %v130
    %v815 = vmul.f32 %v811, %v131
    %v816 = vmul.f32 %v811, %v132
    %v817 = vmul.f32 %v811, %v133
    %v818 = vmul.f32 %v811, %v134
    %v819 = vmul.f32 %v811, %v135
    %v820 = vmul.f32 %v811, %v136
    %v821 = vmul.f32 %v811, %v137
    %v822 = vmul.f32 %v811, %v138
    %v823 = vmul.f32 %v811, %v139
    %v824 = vmul.f32 %v811, %v140
    %v825 = vmul.f32 %v811, %v141
    %v826 = vmul.f32 %v811, %v142
    %v827 = vmul.f32 %v811, %v143
    %v828 = vadd.f32 %v795, %v812
    %v829 = vadd.f32 %v796, %v813
    %v830 = vadd.f32 %v797, %v814
    %v831 = vadd.f32 %v798, %v815
    %v832 = vadd.f32 %v799, %v816
    %v833 = vadd.f32 %v800, %v817
    %v834 = vadd.f32 %v801, %v818
    %v835 = vadd.f32 %v802, %v819
    %v836 = vadd.f32 %v803, %v820
    %v837 = vadd.f32 %v804, %v821
    %v838 = vadd.f32 %v805, %v822
    %v839 = vadd.f32 %v806, %v823
    %v840 = vadd.f32 %v807, %v824
    %v841 = vadd.f32 %v808, %v825
    %v842 = vadd.f32 %v809, %v826
    %v843 = vadd.f32 %v810, %v827
    %v844 = vmul.f32 %v728, %v111
    %v845 = vmul.f32 %v728, %v112
    %v846 = vmul.f32 %v728, %v113
    %v847 = vmul.f32 %v728, %v114
    %v848 = vmul.f32 %v728, %v115
    %v849 = vmul.f32 %v728, %v116
    %v850 = vmul.f32 %v728, %v117
    %v851 = vmul.f32 %v728, %v118
    %v852 = vmul.f32 %v728, %v119
    %v853 = vmul.f32 %v728, %v120
    %v854 = vmul.f32 %v728, %v121
    %v855 = vmul.f32 %v728, %v122
    %v856 = vmul.f32 %v728, %v123
    %v857 = vmul.f32 %v728, %v124
    %v858 = vmul.f32 %v728, %v125
    %v859 = vmul.f32 %v728, %v126
    %v860 = vmul.f32 %v745, %v144
    %v861 = vmul.f32 %v745, %v145
    %v862 = vmul.f32 %v745, %v146
    %v863 = vmul.f32 %v745, %v147
    %v864 = vmul.f32 %v745, %v148
    %v865 = vmul.f32 %v745, %v149
    %v866 = vmul.f32 %v745, %v150
    %v867 = vmul.f32 %v745, %v151
    %v868 = vmul.f32 %v745, %v152
    %v869 = vmul.f32 %v745, %v153
    %v870 = vmul.f32 %v745, %v154
    %v871 = vmul.f32 %v745, %v155
    %v872 = vmul.f32 %v745, %v156
    %v873 = vmul.f32 %v745, %v157
    %v874 = vmul.f32 %v745, %v158
    %v875 = vmul.f32 %v745, %v159
    %v876 = vadd.f32 %v844, %v860
    %v877 = vadd.f32 %v845, %v861
    %v878 = vadd.f32 %v846, %v862
    %v879 = vadd.f32 %v847, %v863
    %v880 = vadd.f32 %v848, %v864
    %v881 = vadd.f32 %v849, %v865
    %v882 = vadd.f32 %v850, %v866
    %v883 = vadd.f32 %v851, %v867
    %v884 = vadd.f32 %v852, %v868
    %v885 = vadd.f32 %v853, %v869
    %v886 = vadd.f32 %v854, %v870
    %v887 = vadd.f32 %v855, %v871
    %v888 = vadd.f32 %v856, %v872
    %v889 = vadd.f32 %v857, %v873
    %v890 = vadd.f32 %v858, %v874
    %v891 = vadd.f32 %v859, %v875
    %v892 = vmul.f32 %v778, %v128
    %v893 = vmul.f32 %v778, %v129
    %v894 = vmul.f32 %v778, %v130
    %v895 = vmul.f32 %v778, %v131
    %v896 = vmul.f32 %v778, %v132
    %v897 = vmul.f32 %v778, %v133
    %v898 = vmul.f32 %v778, %v134
    %v899 = vmul.f32 %v778, %v135
    %v900 = vmul.f32 %v778, %v136
    %v901 = vmul.f32 %v778, %v137
    %v902 = vmul.f32 %v778, %v138
    %v903 = vmul.f32 %v778, %v139
    %v904 = vmul.f32 %v778, %v140
    %v905 = vmul.f32 %v778, %v141
    %v906 = vmul.f32 %v778, %v142
    %v907 = vmul.f32 %v778, %v143
    %v908 = vadd.f32 %v876, %v892
    %v909 = vadd.f32 %v877, %v893
    %v910 = vadd.f32 %v878, %v894
    %v911 = vadd.f32 %v879, %v895
    %v912 = vadd.f32 %v880, %v896
    %v913 = vadd.f32 %v881, %v897
    %v914 = vadd.f32 %v882, %v898
    %v915 = vadd.f32 %v883, %v899
    %v916 = vadd.f32 %v884, %v900
    %v917 = vadd.f32 %v885, %v901
    %v918 = vadd.f32 %v886, %v902
    %v919 = vadd.f32 %v887, %v903
    %v920 = vadd.f32 %v888, %v904
    %v921 = vadd.f32 %v889, %v905
    %v922 = vadd.f32 %v890, %v906
    %v923 = vadd.f32 %v891, %v907
    %v924 = vmul.f32 %v811, %v160
    %v925 = vmul.f32 %v811, %v161
    %v926 = vmul.f32 %v811, %v162
    %v927 = vmul.f32 %v811, %v163
    %v928 = vmul.f32 %v811, %v164
    %v929 = vmul.f32 %v811, %v165
    %v930 = vmul.f32 %v811, %v166
    %v931 = vmul.f32 %v811, %v167
    %v932 = vmul.f32 %v811, %v168
    %v933 = vmul.f32 %v811, %v169
    %v934 = vmul.f32 %v811, %v170
    %v935 = vmul.f32 %v811, %v171
    %v936 = vmul.f32 %v811, %v172
    %v937 = vmul.f32 %v811, %v173
    %v938 = vmul.f32 %v811, %v174
    %v939 = vmul.f32 %v811, %v175
    %v940 = vadd.f32 %v908, %v924
    %v941 = vadd.f32 %v909, %v925
    %v942 = vadd.f32 %v910, %v926
    %v943 = vadd.f32 %v911, %v927
    %v944 = vadd.f32 %v912, %v928
    %v945 = vadd.f32 %v913, %v929
    %v946 = vadd.f32 %v914, %v930
    %v947 = vadd.f32 %v915, %v931
    %v948 = vadd.f32 %v916, %v932
    %v949 = vadd.f32 %v917, %v933
    %v950 = vadd.f32 %v918, %v934
    %v951 = vadd.f32 %v919, %v935
    %v952 = vadd.f32 %v920, %v936
    %v953 = vadd.f32 %v921, %v937
    %v954 = vadd.f32 %v922, %v938
    %v955 = vadd.f32 %v923, %v939
    %v956 = vmax.f32 %v828, %v940
    %v957 = vmax.f32 %v829, %v941
    %v958 = vmax.f32 %v830, %v942
    %v959 = vmax.f32 %v831, %v943
    %v960 = vmax.f32 %v832, %v944
    %v961 = vmax.f32 %v833, %v945
    %v962 = vmax.f32 %v834, %v946
    %v963 = vmax.f32 %v835, %v947
    %v964 = vmax.f32 %v836, %v948
    %v965 = vmax.f32 %v837, %v949
    %v966 = vmax.f32 %v838, %v950
    %v967 = vmax.f32 %v839, %v951
    %v968 = vmax.f32 %v840, %v952
    %v969 = vmax.f32 %v841, %v953
    %v970 = vmax.f32 %v842, %v954
    %v971 = vmax.f32 %v843, %v955
    %v972 = vmax.f32 %v956, %v957
    %v973 = vmax.f32 %v958, %v959
    %v974 = vmax.f32 %v960, %v961
    %v975 = vmax.f32 %v962, %v963
    %v976 = vmax.f32 %v964, %v965
    %v977 = vmax.f32 %v966, %v967
    %v978 = vmax.f32 %v968, %v969
    %v979 = vmax.f32 %v970, %v971
    %s980 = sld [smem:[#allocation5 + $0x2]]
    %v981 = vstv %s980
    %v982 = vadd.f32 %v972, %v981
    %v983 = vadd.f32 %v973, %v981
    %v984 = vadd.f32 %v974, %v981
    %v985 = vadd.f32 %v975, %v981
    %v986 = vadd.f32 %v976, %v981
    %v987 = vadd.f32 %v977, %v981
    %v988 = vadd.f32 %v978, %v981
    %v989 = vadd.f32 %v979, %v981
    %v990 = vmax.f32 %v982, 0.0
    %v991 = vmax.f32 %v983, 0.0
    %v992 = vmax.f32 %v984, 0.0
    %v993 = vmax.f32 %v985, 0.0
    %v994 = vmax.f32 %v986, 0.0
    %v995 = vmax.f32 %v987, 0.0
    %v996 = vmax.f32 %v988, 0.0
    %v997 = vmax.f32 %v989, 0.0
    %s998 = sld [smem:[#allocation2 + $0xc]]
    %s999 = sld [smem:[#allocation2 + $0xd]]
    %s1000 = sld [smem:[#allocation2 + $0xe]]
    %s1001 = sld [smem:[#allocation2 + $0xf]]
    %v1002 = vstv %s998
    %v1003 = vmul.f32 %v1002, %v78
    %v1004 = vmul.f32 %v1002, %v79
    %v1005 = vmul.f32 %v1002, %v80
    %v1006 = vmul.f32 %v1002, %v81
    %v1007 = vmul.f32 %v1002, %v82
    %v1008 = vmul.f32 %v1002, %v83
    %v1009 = vmul.f32 %v1002, %v84
    %v1010 = vmul.f32 %v1002, %v85
    %v1011 = vmul.f32 %v1002, %v86
    %v1012 = vmul.f32 %v1002, %v87
    %v1013 = vmul.f32 %v1002, %v88
    %v1014 = vmul.f32 %v1002, %v89
    %v1015 = vmul.f32 %v1002, %v90
    %v1016 = vmul.f32 %v1002, %v91
    %v1017 = vmul.f32 %v1002, %v92
    %v1018 = vmul.f32 %v1002, %v93
    %v1019 = vstv %s999
    %v1020 = vmul.f32 %v1019, %v111
    %v1021 = vmul.f32 %v1019, %v112
    %v1022 = vmul.f32 %v1019, %v113
    %v1023 = vmul.f32 %v1019, %v114
    %v1024 = vmul.f32 %v1019, %v115
    %v1025 = vmul.f32 %v1019, %v116
    %v1026 = vmul.f32 %v1019, %v117
    %v1027 = vmul.f32 %v1019, %v118
    %v1028 = vmul.f32 %v1019, %v119
    %v1029 = vmul.f32 %v1019, %v120
    %v1030 = vmul.f32 %v1019, %v121
    %v1031 = vmul.f32 %v1019, %v122
    %v1032 = vmul.f32 %v1019, %v123
    %v1033 = vmul.f32 %v1019, %v124
    %v1034 = vmul.f32 %v1019, %v125
    %v1035 = vmul.f32 %v1019, %v126
    %v1036 = vadd.f32 %v1003, %v1020
    %v1037 = vadd.f32 %v1004, %v1021
    %v1038 = vadd.f32 %v1005, %v1022
    %v1039 = vadd.f32 %v1006, %v1023
    %v1040 = vadd.f32 %v1007, %v1024
    %v1041 = vadd.f32 %v1008, %v1025
    %v1042 = vadd.f32 %v1009, %v1026
    %v1043 = vadd.f32 %v1010, %v1027
    %v1044 = vadd.f32 %v1011, %v1028
    %v1045 = vadd.f32 %v1012, %v1029
    %v1046 = vadd.f32 %v1013, %v1030
    %v1047 = vadd.f32 %v1014, %v1031
    %v1048 = vadd.f32 %v1015, %v1032
    %v1049 = vadd.f32 %v1016, %v1033
    %v1050 = vadd.f32 %v1017, %v1034
    %v1051 = vadd.f32 %v1018, %v1035
    %v1052 = vstv %s1000
    %v1053 = vmul.f32 %v1052, %v95
    %v1054 = vmul.f32 %v1052, %v96
    %v1055 = vmul.f32 %v1052, %v97
    %v1056 = vmul.f32 %v1052, %v98
    %v1057 = vmul.f32 %v1052, %v99
    %v1058 = vmul.f32 %v1052, %v100
    %v1059 = vmul.f32 %v1052, %v101
    %v1060 = vmul.f32 %v1052, %v102
    %v1061 = vmul.f32 %v1052, %v103
    %v1062 = vmul.f32 %v1052, %v104
    %v1063 = vmul.f32 %v1052, %v105
    %v1064 = vmul.f32 %v1052, %v106
    %v1065 = vmul.f32 %v1052, %v107
    %v1066 = vmul.f32 %v1052, %v108
    %v1067 = vmul.f32 %v1052, %v109
    %v1068 = vmul.f32 %v1052, %v110
    %v1069 = vadd.f32 %v1036, %v1053
    %v1070 = vadd.f32 %v1037, %v1054
    %v1071 = vadd.f32 %v1038, %v1055
    %v1072 = vadd.f32 %v1039, %v1056
    %v1073 = vadd.f32 %v1040, %v1057
    %v1074 = vadd.f32 %v1041, %v1058
    %v1075 = vadd.f32 %v1042, %v1059
    %v1076 = vadd.f32 %v1043, %v1060
    %v1077 = vadd.f32 %v1044, %v1061
    %v1078 = vadd.f32 %v1045, %v1062
    %v1079 = vadd.f32 %v1046, %v1063
    %v1080 = vadd.f32 %v1047, %v1064
    %v1081 = vadd.f32 %v1048, %v1065
    %v1082 = vadd.f32 %v1049, %v1066
    %v1083 = vadd.f32 %v1050, %v1067
    %v1084 = vadd.f32 %v1051, %v1068
    %v1085 = vstv %s1001
    %v1086 = vmul.f32 %v1085, %v128
    %v1087 = vmul.f32 %v1085, %v129
    %v1088 = vmul.f32 %v1085, %v130
    %v1089 = vmul.f32 %v1085, %v131
    %v1090 = vmul.f32 %v1085, %v132
    %v1091 = vmul.f32 %v1085, %v133
    %v1092 = vmul.f32 %v1085, %v134
    %v1093 = vmul.f32 %v1085, %v135
    %v1094 = vmul.f32 %v1085, %v136
    %v1095 = vmul.f32 %v1085, %v137
    %v1096 = vmul.f32 %v1085, %v138
    %v1097 = vmul.f32 %v1085, %v139
    %v1098 = vmul.f32 %v1085, %v140
    %v1099 = vmul.f32 %v1085, %v141
    %v1100 = vmul.f32 %v1085, %v142
    %v1101 = vmul.f32 %v1085, %v143
    %v1102 = vadd.f32 %v1069, %v1086
    %v1103 = vadd.f32 %v1070, %v1087
    %v1104 = vadd.f32 %v1071, %v1088
    %v1105 = vadd.f32 %v1072, %v1089
    %v1106 = vadd.f32 %v1073, %v1090
    %v1107 = vadd.f32 %v1074, %v1091
    %v1108 = vadd.f32 %v1075, %v1092
    %v1109 = vadd.f32 %v1076, %v1093
    %v1110 = vadd.f32 %v1077, %v1094
    %v1111 = vadd.f32 %v1078, %v1095
    %v1112 = vadd.f32 %v1079, %v1096
    %v1113 = vadd.f32 %v1080, %v1097
    %v1114 = vadd.f32 %v1081, %v1098
    %v1115 = vadd.f32 %v1082, %v1099
    %v1116 = vadd.f32 %v1083, %v1100
    %v1117 = vadd.f32 %v1084, %v1101
    %v1118 = vmul.f32 %v1002, %v111
    %v1119 = vmul.f32 %v1002, %v112
    %v1120 = vmul.f32 %v1002, %v113
    %v1121 = vmul.f32 %v1002, %v114
    %v1122 = vmul.f32 %v1002, %v115
    %v1123 = vmul.f32 %v1002, %v116
    %v1124 = vmul.f32 %v1002, %v117
    %v1125 = vmul.f32 %v1002, %v118
    %v1126 = vmul.f32 %v1002, %v119
    %v1127 = vmul.f32 %v1002, %v120
    %v1128 = vmul.f32 %v1002, %v121
    %v1129 = vmul.f32 %v1002, %v122
    %v1130 = vmul.f32 %v1002, %v123
    %v1131 = vmul.f32 %v1002, %v124
    %v1132 = vmul.f32 %v1002, %v125
    %v1133 = vmul.f32 %v1002, %v126
    %v1134 = vmul.f32 %v1019, %v144
    %v1135 = vmul.f32 %v1019, %v145
    %v1136 = vmul.f32 %v1019, %v146
    %v1137 = vmul.f32 %v1019, %v147
    %v1138 = vmul.f32 %v1019, %v148
    %v1139 = vmul.f32 %v1019, %v149
    %v1140 = vmul.f32 %v1019, %v150
    %v1141 = vmul.f32 %v1019, %v151
    %v1142 = vmul.f32 %v1019, %v152
    %v1143 = vmul.f32 %v1019, %v153
    %v1144 = vmul.f32 %v1019, %v154
    %v1145 = vmul.f32 %v1019, %v155
    %v1146 = vmul.f32 %v1019, %v156
    %v1147 = vmul.f32 %v1019, %v157
    %v1148 = vmul.f32 %v1019, %v158
    %v1149 = vmul.f32 %v1019, %v159
    %v1150 = vadd.f32 %v1118, %v1134
    %v1151 = vadd.f32 %v1119, %v1135
    %v1152 = vadd.f32 %v1120, %v1136
    %v1153 = vadd.f32 %v1121, %v1137
    %v1154 = vadd.f32 %v1122, %v1138
    %v1155 = vadd.f32 %v1123, %v1139
    %v1156 = vadd.f32 %v1124, %v1140
    %v1157 = vadd.f32 %v1125, %v1141
    %v1158 = vadd.f32 %v1126, %v1142
    %v1159 = vadd.f32 %v1127, %v1143
    %v1160 = vadd.f32 %v1128, %v1144
    %v1161 = vadd.f32 %v1129, %v1145
    %v1162 = vadd.f32 %v1130, %v1146
    %v1163 = vadd.f32 %v1131, %v1147
    %v1164 = vadd.f32 %v1132, %v1148
    %v1165 = vadd.f32 %v1133, %v1149
    %v1166 = vmul.f32 %v1052, %v128
    %v1167 = vmul.f32 %v1052, %v129
    %v1168 = vmul.f32 %v1052, %v130
    %v1169 = vmul.f32 %v1052, %v131
    %v1170 = vmul.f32 %v1052, %v132
    %v1171 = vmul.f32 %v1052, %v133
    %v1172 = vmul.f32 %v1052, %v134
    %v1173 = vmul.f32 %v1052, %v135
    %v1174 = vmul.f32 %v1052, %v136
    %v1175 = vmul.f32 %v1052, %v137
    %v1176 = vmul.f32 %v1052, %v138
    %v1177 = vmul.f32 %v1052, %v139
    %v1178 = vmul.f32 %v1052, %v140
    %v1179 = vmul.f32 %v1052, %v141
    %v1180 = vmul.f32 %v1052, %v142
    %v1181 = vmul.f32 %v1052, %v143
    %v1182 = vadd.f32 %v1150, %v1166
    %v1183 = vadd.f32 %v1151, %v1167
    %v1184 = vadd.f32 %v1152, %v1168
    %v1185 = vadd.f32 %v1153, %v1169
    %v1186 = vadd.f32 %v1154, %v1170
    %v1187 = vadd.f32 %v1155, %v1171
    %v1188 = vadd.f32 %v1156, %v1172
    %v1189 = vadd.f32 %v1157, %v1173
    %v1190 = vadd.f32 %v1158, %v1174
    %v1191 = vadd.f32 %v1159, %v1175
    %v1192 = vadd.f32 %v1160, %v1176
    %v1193 = vadd.f32 %v1161, %v1177
    %v1194 = vadd.f32 %v1162, %v1178
    %v1195 = vadd.f32 %v1163, %v1179
    %v1196 = vadd.f32 %v1164, %v1180
    %v1197 = vadd.f32 %v1165, %v1181
    %v1198 = vmul.f32 %v1085, %v160
    %v1199 = vmul.f32 %v1085, %v161
    %v1200 = vmul.f32 %v1085, %v162
    %v1201 = vmul.f32 %v1085, %v163
    %v1202 = vmul.f32 %v1085, %v164
    %v1203 = vmul.f32 %v1085, %v165
    %v1204 = vmul.f32 %v1085, %v166
    %v1205 = vmul.f32 %v1085, %v167
    %v1206 = vmul.f32 %v1085, %v168
    %v1207 = vmul.f32 %v1085, %v169
    %v1208 = vmul.f32 %v1085, %v170
    %v1209 = vmul.f32 %v1085, %v171
    %v1210 = vmul.f32 %v1085, %v172
    %v1211 = vmul.f32 %v1085, %v173
    %v1212 = vmul.f32 %v1085, %v174
    %v1213 = vmul.f32 %v1085, %v175
    %v1214 = vadd.f32 %v1182, %v1198
    %v1215 = vadd.f32 %v1183, %v1199
    %v1216 = vadd.f32 %v1184, %v1200
    %v1217 = vadd.f32 %v1185, %v1201
    %v1218 = vadd.f32 %v1186, %v1202
    %v1219 = vadd.f32 %v1187, %v1203
    %v1220 = vadd.f32 %v1188, %v1204
    %v1221 = vadd.f32 %v1189, %v1205
    %v1222 = vadd.f32 %v1190, %v1206
    %v1223 = vadd.f32 %v1191, %v1207
    %v1224 = vadd.f32 %v1192, %v1208
    %v1225 = vadd.f32 %v1193, %v1209
    %v1226 = vadd.f32 %v1194, %v1210
    %v1227 = vadd.f32 %v1195, %v1211
    %v1228 = vadd.f32 %v1196, %v1212
    %v1229 = vadd.f32 %v1197, %v1213
    %v1230 = vmax.f32 %v1102, %v1214
    %v1231 = vmax.f32 %v1103, %v1215
    %v1232 = vmax.f32 %v1104, %v1216
    %v1233 = vmax.f32 %v1105, %v1217
    %v1234 = vmax.f32 %v1106, %v1218
    %v1235 = vmax.f32 %v1107, %v1219
    %v1236 = vmax.f32 %v1108, %v1220
    %v1237 = vmax.f32 %v1109, %v1221
    %v1238 = vmax.f32 %v1110, %v1222
    %v1239 = vmax.f32 %v1111, %v1223
    %v1240 = vmax.f32 %v1112, %v1224
    %v1241 = vmax.f32 %v1113, %v1225
    %v1242 = vmax.f32 %v1114, %v1226
    %v1243 = vmax.f32 %v1115, %v1227
    %v1244 = vmax.f32 %v1116, %v1228
    %v1245 = vmax.f32 %v1117, %v1229
    %v1246 = vmax.f32 %v1230, %v1231
    %v1247 = vmax.f32 %v1232, %v1233
    %v1248 = vmax.f32 %v1234, %v1235
    %v1249 = vmax.f32 %v1236, %v1237
    %v1250 = vmax.f32 %v1238, %v1239
    %v1251 = vmax.f32 %v1240, %v1241
    %v1252 = vmax.f32 %v1242, %v1243
    %v1253 = vmax.f32 %v1244, %v1245
    %s1254 = sld [smem:[#allocation5 + $0x3]]
    %v1255 = vstv %s1254
    %v1256 = vadd.f32 %v1246, %v1255
    %v1257 = vadd.f32 %v1247, %v1255
    %v1258 = vadd.f32 %v1248, %v1255
    %v1259 = vadd.f32 %v1249, %v1255
    %v1260 = vadd.f32 %v1250, %v1255
    %v1261 = vadd.f32 %v1251, %v1255
    %v1262 = vadd.f32 %v1252, %v1255
    %v1263 = vadd.f32 %v1253, %v1255
    %v1264 = vmax.f32 %v1256, 0.0
    %v1265 = vmax.f32 %v1257, 0.0
    %v1266 = vmax.f32 %v1258, 0.0
    %v1267 = vmax.f32 %v1259, 0.0
    %v1268 = vmax.f32 %v1260, 0.0
    %v1269 = vmax.f32 %v1261, 0.0
    %v1270 = vmax.f32 %v1262, 0.0
    %v1271 = vmax.f32 %v1263, 0.0
    %v1280 = vrot.slane %v442, 7
    %v1281 = vrot.slane %v443, 7
    %v1282 = vrot.slane %v444, 7
    %v1283 = vrot.slane %v445, 7
    %v1284 = vrot.slane %v446, 7
    %v1285 = vrot.slane %v447, 7
    %v1286 = vrot.slane %v448, 7
    %v1287 = vrot.slane %v449, 7
    %vm1296 = vcmask 1040384
    %v1297 = vsel %vm1296, 0.0, %v1280
    %v1298 = vsel %vm1296, 0.0, %v1281
    %v1299 = vsel %vm1296, 0.0, %v1282
    %v1300 = vsel %vm1296, 0.0, %v1283
    %v1301 = vsel %vm1296, 0.0, %v1284
    %v1302 = vsel %vm1296, 0.0, %v1285
    %v1303 = vsel %vm1296, 0.0, %v1286
    %v1304 = vsel %vm1296, 0.0, %v1287
    %v1313 = vrot.slane %v716, 7
    %v1314 = vrot.slane %v717, 7
    %v1315 = vrot.slane %v718, 7
    %v1316 = vrot.slane %v719, 7
    %v1317 = vrot.slane %v720, 7
    %v1318 = vrot.slane %v721, 7
    %v1319 = vrot.slane %v722, 7
    %v1320 = vrot.slane %v723, 7
    %v1329 = vsel %vm1296, 0.0, %v1313
    %v1330 = vsel %vm1296, 0.0, %v1314
    %v1331 = vsel %vm1296, 0.0, %v1315
    %v1332 = vsel %vm1296, 0.0, %v1316
    %v1333 = vsel %vm1296, 0.0, %v1317
    %v1334 = vsel %vm1296, 0.0, %v1318
    %v1335 = vsel %vm1296, 0.0, %v1319
    %v1336 = vsel %vm1296, 0.0, %v1320
    %v1345 = vrot.slane %v990, 7
    %v1346 = vrot.slane %v991, 7
    %v1347 = vrot.slane %v992, 7
    %v1348 = vrot.slane %v993, 7
    %v1349 = vrot.slane %v994, 7
    %v1350 = vrot.slane %v995, 7
    %v1351 = vrot.slane %v996, 7
    %v1352 = vrot.slane %v997, 7
    %v1361 = vsel %vm1296, 0.0, %v1345
    %v1362 = vsel %vm1296, 0.0, %v1346
    %v1363 = vsel %vm1296, 0.0, %v1347
    %v1364 = vsel %vm1296, 0.0, %v1348
    %v1365 = vsel %vm1296, 0.0, %v1349
    %v1366 = vsel %vm1296, 0.0, %v1350
    %v1367 = vsel %vm1296, 0.0, %v1351
    %v1368 = vsel %vm1296, 0.0, %v1352
    %v1377 = vrot.slane %v1264, 7
    %v1378 = vrot.slane %v1265, 7
    %v1379 = vrot.slane %v1266, 7
    %v1380 = vrot.slane %v1267, 7
    %v1381 = vrot.slane %v1268, 7
    %v1382 = vrot.slane %v1269, 7
    %v1383 = vrot.slane %v1270, 7
    %v1384 = vrot.slane %v1271, 7
    %v1393 = vsel %vm1296, 0.0, %v1377
    %v1394 = vsel %vm1296, 0.0, %v1378
    %v1395 = vsel %vm1296, 0.0, %v1379
    %v1396 = vsel %vm1296, 0.0, %v1380
    %v1397 = vsel %vm1296, 0.0, %v1381
    %v1398 = vsel %vm1296, 0.0, %v1382
    %v1399 = vsel %vm1296, 0.0, %v1383
    %v1400 = vsel %vm1296, 0.0, %v1384
    %s1401 = sld [smem:[#allocation7]]
    %v1402 = vstv %s1401
    %v1403 = vmul.f32 %v1402, 0.0
    %v1404 = vmul.f32 %v1402, %v1297
    %v1405 = vmul.f32 %v1402, %v1298
    %v1406 = vmul.f32 %v1402, %v1299
    %v1407 = vmul.f32 %v1402, %v1300
    %v1408 = vmul.f32 %v1402, %v1301
    %v1409 = vmul.f32 %v1402, %v1302
    %v1410 = vmul.f32 %v1402, %v1303
    %s1411 = sld [smem:[#allocation7 + $0x1]]
    %v1412 = vstv %s1411
    %v1413 = vmul.f32 %v1412, 0.0
    %v1414 = vmul.f32 %v1412, %v442
    %v1415 = vmul.f32 %v1412, %v443
    %v1416 = vmul.f32 %v1412, %v444
    %v1417 = vmul.f32 %v1412, %v445
    %v1418 = vmul.f32 %v1412, %v446
    %v1419 = vmul.f32 %v1412, %v447
    %v1420 = vmul.f32 %v1412, %v448
    %v1421 = vadd.f32 %v1403, %v1413
    %v1422 = vadd.f32 %v1404, %v1414
    %v1423 = vadd.f32 %v1405, %v1415
    %v1424 = vadd.f32 %v1406, %v1416
    %v1425 = vadd.f32 %v1407, %v1417
    %v1426 = vadd.f32 %v1408, %v1418
    %v1427 = vadd.f32 %v1409, %v1419
    %v1428 = vadd.f32 %v1410, %v1420
    %s1429 = sld [smem:[#allocation7 + $0x2]]
    %v1430 = vstv %s1429
    %v1431 = vmul.f32 %v1430, %v1297
    %v1432 = vmul.f32 %v1430, %v1298
    %v1433 = vmul.f32 %v1430, %v1299
    %v1434 = vmul.f32 %v1430, %v1300
    %v1435 = vmul.f32 %v1430, %v1301
    %v1436 = vmul.f32 %v1430, %v1302
    %v1437 = vmul.f32 %v1430, %v1303
    %v1438 = vmul.f32 %v1430, %v1304
    %v1439 = vadd.f32 %v1421, %v1431
    %v1440 = vadd.f32 %v1422, %v1432
    %v1441 = vadd.f32 %v1423, %v1433
    %v1442 = vadd.f32 %v1424, %v1434
    %v1443 = vadd.f32 %v1425, %v1435
    %v1444 = vadd.f32 %v1426, %v1436
    %v1445 = vadd.f32 %v1427, %v1437
    %v1446 = vadd.f32 %v1428, %v1438
    %s1447 = sld [smem:[#allocation7 + $0x3]]
    %v1448 = vstv %s1447
    %v1449 = vmul.f32 %v1448, %v442
    %v1450 = vmul.f32 %v1448, %v443
    %v1451 = vmul.f32 %v1448, %v444
    %v1452 = vmul.f32 %v1448, %v445
    %v1453 = vmul.f32 %v1448, %v446
    %v1454 = vmul.f32 %v1448, %v447
    %v1455 = vmul.f32 %v1448, %v448
    %v1456 = vmul.f32 %v1448, %v449
    %v1457 = vadd.f32 %v1439, %v1449
    %v1458 = vadd.f32 %v1440, %v1450
    %v1459 = vadd.f32 %v1441, %v1451
    %v1460 = vadd.f32 %v1442, %v1452
    %v1461 = vadd.f32 %v1443, %v1453
    %v1462 = vadd.f32 %v1444, %v1454
    %v1463 = vadd.f32 %v1445, %v1455
    %v1464 = vadd.f32 %v1446, %v1456
    %s1465 = sld [smem:[#allocation7 + $0x4]]
    %v1466 = vstv %s1465
    %v1467 = vmul.f32 %v1466, 0.0
    %v1468 = vmul.f32 %v1466, %v1329
    %v1469 = vmul.f32 %v1466, %v1330
    %v1470 = vmul.f32 %v1466, %v1331
    %v1471 = vmul.f32 %v1466, %v1332
    %v1472 = vmul.f32 %v1466, %v1333
    %v1473 = vmul.f32 %v1466, %v1334
    %v1474 = vmul.f32 %v1466, %v1335
    %v1475 = vadd.f32 %v1457, %v1467
    %v1476 = vadd.f32 %v1458, %v1468
    %v1477 = vadd.f32 %v1459, %v1469
    %v1478 = vadd.f32 %v1460, %v1470
    %v1479 = vadd.f32 %v1461, %v1471
    %v1480 = vadd.f32 %v1462, %v1472
    %v1481 = vadd.f32 %v1463, %v1473
    %v1482 = vadd.f32 %v1464, %v1474
    %s1483 = sld [smem:[#allocation7 + $0x5]]
    %v1484 = vstv %s1483
    %v1485 = vmul.f32 %v1484, 0.0
    %v1486 = vmul.f32 %v1484, %v716
    %v1487 = vmul.f32 %v1484, %v717
    %v1488 = vmul.f32 %v1484, %v718
    %v1489 = vmul.f32 %v1484, %v719
    %v1490 = vmul.f32 %v1484, %v720
    %v1491 = vmul.f32 %v1484, %v721
    %v1492 = vmul.f32 %v1484, %v722
    %v1493 = vadd.f32 %v1475, %v1485
    %v1494 = vadd.f32 %v1476, %v1486
    %v1495 = vadd.f32 %v1477, %v1487
    %v1496 = vadd.f32 %v1478, %v1488
    %v1497 = vadd.f32 %v1479, %v1489
    %v1498 = vadd.f32 %v1480, %v1490
    %v1499 = vadd.f32 %v1481, %v1491
    %v1500 = vadd.f32 %v1482, %v1492
    %s1501 = sld [smem:[#allocation7 + $0x6]]
    %v1502 = vstv %s1501
    %v1503 = vmul.f32 %v1502, %v1329
    %v1504 = vmul.f32 %v1502, %v1330
    %v1505 = vmul.f32 %v1502, %v1331
    %v1506 = vmul.f32 %v1502, %v1332
    %v1507 = vmul.f32 %v1502, %v1333
    %v1508 = vmul.f32 %v1502, %v1334
    %v1509 = vmul.f32 %v1502, %v1335
    %v1510 = vmul.f32 %v1502, %v1336
    %v1511 = vadd.f32 %v1493, %v1503
    %v1512 = vadd.f32 %v1494, %v1504
    %v1513 = vadd.f32 %v1495, %v1505
    %v1514 = vadd.f32 %v1496, %v1506
    %v1515 = vadd.f32 %v1497, %v1507
    %v1516 = vadd.f32 %v1498, %v1508
    %v1517 = vadd.f32 %v1499, %v1509
    %v1518 = vadd.f32 %v1500, %v1510
    %s1519 = sld [smem:[#allocation7 + $0x7]]
    %v1520 = vstv %s1519
    %v1521 = vmul.f32 %v1520, %v716
    %v1522 = vmul.f32 %v1520, %v717
    %v1523 = vmul.f32 %v1520, %v718
    %v1524 = vmul.f32 %v1520, %v719
    %v1525 = vmul.f32 %v1520, %v720
    %v1526 = vmul.f32 %v1520, %v721
    %v1527 = vmul.f32 %v1520, %v722
    %v1528 = vmul.f32 %v1520, %v723
    %v1529 = vadd.f32 %v1511, %v1521
    %v1530 = vadd.f32 %v1512, %v1522
    %v1531 = vadd.f32 %v1513, %v1523
    %v1532 = vadd.f32 %v1514, %v1524
    %v1533 = vadd.f32 %v1515, %v1525
    %v1534 = vadd.f32 %v1516, %v1526
    %v1535 = vadd.f32 %v1517, %v1527
    %v1536 = vadd.f32 %v1518, %v1528
    %s1537 = sld [smem:[#allocation7 + $0x8]]
    %v1538 = vstv %s1537
    %v1539 = vmul.f32 %v1538, 0.0
    %v1540 = vmul.f32 %v1538, %v1361
    %v1541 = vmul.f32 %v1538, %v1362
    %v1542 = vmul.f32 %v1538, %v1363
    %v1543 = vmul.f32 %v1538, %v1364
    %v1544 = vmul.f32 %v1538, %v1365
    %v1545 = vmul.f32 %v1538, %v1366
    %v1546 = vmul.f32 %v1538, %v1367
    %v1547 = vadd.f32 %v1529, %v1539
    %v1548 = vadd.f32 %v1530, %v1540
    %v1549 = vadd.f32 %v1531, %v1541
    %v1550 = vadd.f32 %v1532, %v1542
    %v1551 = vadd.f32 %v1533, %v1543
    %v1552 = vadd.f32 %v1534, %v1544
    %v1553 = vadd.f32 %v1535, %v1545
    %v1554 = vadd.f32 %v1536, %v1546
    %s1555 = sld [smem:[#allocation7 + $0x9]]
    %v1556 = vstv %s1555
    %v1557 = vmul.f32 %v1556, 0.0
    %v1558 = vmul.f32 %v1556, %v990
    %v1559 = vmul.f32 %v1556, %v991
    %v1560 = vmul.f32 %v1556, %v992
    %v1561 = vmul.f32 %v1556, %v993
    %v1562 = vmul.f32 %v1556, %v994
    %v1563 = vmul.f32 %v1556, %v995
    %v1564 = vmul.f32 %v1556, %v996
    %v1565 = vadd.f32 %v1547, %v1557
    %v1566 = vadd.f32 %v1548, %v1558
    %v1567 = vadd.f32 %v1549, %v1559
    %v1568 = vadd.f32 %v1550, %v1560
    %v1569 = vadd.f32 %v1551, %v1561
    %v1570 = vadd.f32 %v1552, %v1562
    %v1571 = vadd.f32 %v1553, %v1563
    %v1572 = vadd.f32 %v1554, %v1564
    %s1573 = sld [smem:[#allocation7 + $0xa]]
    %v1574 = vstv %s1573
    %v1575 = vmul.f32 %v1574, %v1361
    %v1576 = vmul.f32 %v1574, %v1362
    %v1577 = vmul.f32 %v1574, %v1363
    %v1578 = vmul.f32 %v1574, %v1364
    %v1579 = vmul.f32 %v1574, %v1365
    %v1580 = vmul.f32 %v1574, %v1366
    %v1581 = vmul.f32 %v1574, %v1367
    %v1582 = vmul.f32 %v1574, %v1368
    %v1583 = vadd.f32 %v1565, %v1575
    %v1584 = vadd.f32 %v1566, %v1576
    %v1585 = vadd.f32 %v1567, %v1577
    %v1586 = vadd.f32 %v1568, %v1578
    %v1587 = vadd.f32 %v1569, %v1579
    %v1588 = vadd.f32 %v1570, %v1580
    %v1589 = vadd.f32 %v1571, %v1581
    %v1590 = vadd.f32 %v1572, %v1582
    %s1591 = sld [smem:[#allocation7 + $0xb]]
    %v1592 = vstv %s1591
    %v1593 = vmul.f32 %v1592, %v990
    %v1594 = vmul.f32 %v1592, %v991
    %v1595 = vmul.f32 %v1592, %v992
    %v1596 = vmul.f32 %v1592, %v993
    %v1597 = vmul.f32 %v1592, %v994
    %v1598 = vmul.f32 %v1592, %v995
    %v1599 = vmul.f32 %v1592, %v996
    %v1600 = vmul.f32 %v1592, %v997
    %v1601 = vadd.f32 %v1583, %v1593
    %v1602 = vadd.f32 %v1584, %v1594
    %v1603 = vadd.f32 %v1585, %v1595
    %v1604 = vadd.f32 %v1586, %v1596
    %v1605 = vadd.f32 %v1587, %v1597
    %v1606 = vadd.f32 %v1588, %v1598
    %v1607 = vadd.f32 %v1589, %v1599
    %v1608 = vadd.f32 %v1590, %v1600
    %s1609 = sld [smem:[#allocation7 + $0xc]]
    %v1610 = vstv %s1609
    %v1611 = vmul.f32 %v1610, 0.0
    %v1612 = vmul.f32 %v1610, %v1393
    %v1613 = vmul.f32 %v1610, %v1394
    %v1614 = vmul.f32 %v1610, %v1395
    %v1615 = vmul.f32 %v1610, %v1396
    %v1616 = vmul.f32 %v1610, %v1397
    %v1617 = vmul.f32 %v1610, %v1398
    %v1618 = vmul.f32 %v1610, %v1399
    %v1619 = vadd.f32 %v1601, %v1611
    %v1620 = vadd.f32 %v1602, %v1612
    %v1621 = vadd.f32 %v1603, %v1613
    %v1622 = vadd.f32 %v1604, %v1614
    %v1623 = vadd.f32 %v1605, %v1615
    %v1624 = vadd.f32 %v1606, %v1616
    %v1625 = vadd.f32 %v1607, %v1617
    %v1626 = vadd.f32 %v1608, %v1618
    %s1627 = sld [smem:[#allocation7 + $0xd]]
    %v1628 = vstv %s1627
    %v1629 = vmul.f32 %v1628, 0.0
    %v1630 = vmul.f32 %v1628, %v1264
    %v1631 = vmul.f32 %v1628, %v1265
    %v1632 = vmul.f32 %v1628, %v1266
    %v1633 = vmul.f32 %v1628, %v1267
    %v1634 = vmul.f32 %v1628, %v1268
    %v1635 = vmul.f32 %v1628, %v1269
    %v1636 = vmul.f32 %v1628, %v1270
    %v1637 = vadd.f32 %v1619, %v1629
    %v1638 = vadd.f32 %v1620, %v1630
    %v1639 = vadd.f32 %v1621, %v1631
    %v1640 = vadd.f32 %v1622, %v1632
    %v1641 = vadd.f32 %v1623, %v1633
    %v1642 = vadd.f32 %v1624, %v1634
    %v1643 = vadd.f32 %v1625, %v1635
    %v1644 = vadd.f32 %v1626, %v1636
    %s1645 = sld [smem:[#allocation7 + $0xe]]
    %v1646 = vstv %s1645
    %v1647 = vmul.f32 %v1646, %v1393
    %v1648 = vmul.f32 %v1646, %v1394
    %v1649 = vmul.f32 %v1646, %v1395
    %v1650 = vmul.f32 %v1646, %v1396
    %v1651 = vmul.f32 %v1646, %v1397
    %v1652 = vmul.f32 %v1646, %v1398
    %v1653 = vmul.f32 %v1646, %v1399
    %v1654 = vmul.f32 %v1646, %v1400
    %v1655 = vadd.f32 %v1637, %v1647
    %v1656 = vadd.f32 %v1638, %v1648
    %v1657 = vadd.f32 %v1639, %v1649
    %v1658 = vadd.f32 %v1640, %v1650
    %v1659 = vadd.f32 %v1641, %v1651
    %v1660 = vadd.f32 %v1642, %v1652
    %v1661 = vadd.f32 %v1643, %v1653
    %v1662 = vadd.f32 %v1644, %v1654
    %s1663 = sld [smem:[#allocation7 + $0xf]]
    %v1664 = vstv %s1663
    %v1665 = vmul.f32 %v1664, %v1264
    %v1666 = vmul.f32 %v1664, %v1265
    %v1667 = vmul.f32 %v1664, %v1266
    %v1668 = vmul.f32 %v1664, %v1267
    %v1669 = vmul.f32 %v1664, %v1268
    %v1670 = vmul.f32 %v1664, %v1269
    %v1671 = vmul.f32 %v1664, %v1270
    %v1672 = vmul.f32 %v1664, %v1271
    %v1673 = vadd.f32 %v1655, %v1665
    %v1674 = vadd.f32 %v1656, %v1666
    %v1675 = vadd.f32 %v1657, %v1667
    %v1676 = vadd.f32 %v1658, %v1668
    %v1677 = vadd.f32 %v1659, %v1669
    %v1678 = vadd.f32 %v1660, %v1670
    %v1679 = vadd.f32 %v1661, %v1671
    %v1680 = vadd.f32 %v1662, %v1672
    %v1681 = vmax.f32 %v1673, %v1674
    %v1682 = vmax.f32 %v1675, %v1676
    %v1683 = vmax.f32 %v1677, %v1678
    %v1684 = vmax.f32 %v1679, %v1680
    %s1685 = sld [smem:[#allocation8]]
    %v1686 = vstv %s1685
    %v1687 = vadd.f32 %v1681, %v1686
    %v1688 = vadd.f32 %v1682, %v1686
    %v1689 = vadd.f32 %v1683, %v1686
    %v1690 = vadd.f32 %v1684, %v1686
    %s1691 = sld [smem:[#allocation7 + $0x10]]
    %v1692 = vstv %s1691
    %v1693 = vmul.f32 %v1692, 0.0
    %v1694 = vmul.f32 %v1692, %v1297
    %v1695 = vmul.f32 %v1692, %v1298
    %v1696 = vmul.f32 %v1692, %v1299
    %v1697 = vmul.f32 %v1692, %v1300
    %v1698 = vmul.f32 %v1692, %v1301
    %v1699 = vmul.f32 %v1692, %v1302
    %v1700 = vmul.f32 %v1692, %v1303
    %s1701 = sld [smem:[#allocation7 + $0x11]]
    %v1702 = vstv %s1701
    %v1703 = vmul.f32 %v1702, 0.0
    %v1704 = vmul.f32 %v1702, %v442
    %v1705 = vmul.f32 %v1702, %v443
    %v1706 = vmul.f32 %v1702, %v444
    %v1707 = vmul.f32 %v1702, %v445
    %v1708 = vmul.f32 %v1702, %v446
    %v1709 = vmul.f32 %v1702, %v447
    %v1710 = vmul.f32 %v1702, %v448
    %v1711 = vadd.f32 %v1693, %v1703
    %v1712 = vadd.f32 %v1694, %v1704
    %v1713 = vadd.f32 %v1695, %v1705
    %v1714 = vadd.f32 %v1696, %v1706
    %v1715 = vadd.f32 %v1697, %v1707
    %v1716 = vadd.f32 %v1698, %v1708
    %v1717 = vadd.f32 %v1699, %v1709
    %v1718 = vadd.f32 %v1700, %v1710
    %s1719 = sld [smem:[#allocation7 + $0x12]]
    %v1720 = vstv %s1719
    %v1721 = vmul.f32 %v1720, %v1297
    %v1722 = vmul.f32 %v1720, %v1298
    %v1723 = vmul.f32 %v1720, %v1299
    %v1724 = vmul.f32 %v1720, %v1300
    %v1725 = vmul.f32 %v1720, %v1301
    %v1726 = vmul.f32 %v1720, %v1302
    %v1727 = vmul.f32 %v1720, %v1303
    %v1728 = vmul.f32 %v1720, %v1304
    %v1729 = vadd.f32 %v1711, %v1721
    %v1730 = vadd.f32 %v1712, %v1722
    %v1731 = vadd.f32 %v1713, %v1723
    %v1732 = vadd.f32 %v1714, %v1724
    %v1733 = vadd.f32 %v1715, %v1725
    %v1734 = vadd.f32 %v1716, %v1726
    %v1735 = vadd.f32 %v1717, %v1727
    %v1736 = vadd.f32 %v1718, %v1728
    %s1737 = sld [smem:[#allocation7 + $0x13]]
    %v1738 = vstv %s1737
    %v1739 = vmul.f32 %v1738, %v442
    %v1740 = vmul.f32 %v1738, %v443
    %v1741 = vmul.f32 %v1738, %v444
    %v1742 = vmul.f32 %v1738, %v445
    %v1743 = vmul.f32 %v1738, %v446
    %v1744 = vmul.f32 %v1738, %v447
    %v1745 = vmul.f32 %v1738, %v448
    %v1746 = vmul.f32 %v1738, %v449
    %v1747 = vadd.f32 %v1729, %v1739
    %v1748 = vadd.f32 %v1730, %v1740
    %v1749 = vadd.f32 %v1731, %v1741
    %v1750 = vadd.f32 %v1732, %v1742
    %v1751 = vadd.f32 %v1733, %v1743
    %v1752 = vadd.f32 %v1734, %v1744
    %v1753 = vadd.f32 %v1735, %v1745
    %v1754 = vadd.f32 %v1736, %v1746
    %s1755 = sld [smem:[#allocation7 + $0x14]]
    %v1756 = vstv %s1755
    %v1757 = vmul.f32 %v1756, 0.0
    %v1758 = vmul.f32 %v1756, %v1329
    %v1759 = vmul.f32 %v1756, %v1330
    %v1760 = vmul.f32 %v1756, %v1331
    %v1761 = vmul.f32 %v1756, %v1332
    %v1762 = vmul.f32 %v1756, %v1333
    %v1763 = vmul.f32 %v1756, %v1334
    %v1764 = vmul.f32 %v1756, %v1335
    %v1765 = vadd.f32 %v1747, %v1757
    %v1766 = vadd.f32 %v1748, %v1758
    %v1767 = vadd.f32 %v1749, %v1759
    %v1768 = vadd.f32 %v1750, %v1760
    %v1769 = vadd.f32 %v1751, %v1761
    %v1770 = vadd.f32 %v1752, %v1762
    %v1771 = vadd.f32 %v1753, %v1763
    %v1772 = vadd.f32 %v1754, %v1764
    %s1773 = sld [smem:[#allocation7 + $0x15]]
    %v1774 = vstv %s1773
    %v1775 = vmul.f32 %v1774, 0.0
    %v1776 = vmul.f32 %v1774, %v716
    %v1777 = vmul.f32 %v1774, %v717
    %v1778 = vmul.f32 %v1774, %v718
    %v1779 = vmul.f32 %v1774, %v719
    %v1780 = vmul.f32 %v1774, %v720
    %v1781 = vmul.f32 %v1774, %v721
    %v1782 = vmul.f32 %v1774, %v722
    %v1783 = vadd.f32 %v1765, %v1775
    %v1784 = vadd.f32 %v1766, %v1776
    %v1785 = vadd.f32 %v1767, %v1777
    %v1786 = vadd.f32 %v1768, %v1778
    %v1787 = vadd.f32 %v1769, %v1779
    %v1788 = vadd.f32 %v1770, %v1780
    %v1789 = vadd.f32 %v1771, %v1781
    %v1790 = vadd.f32 %v1772, %v1782
    %s1791 = sld [smem:[#allocation7 + $0x16]]
    %v1792 = vstv %s1791
    %v1793 = vmul.f32 %v1792, %v1329
    %v1794 = vmul.f32 %v1792, %v1330
    %v1795 = vmul.f32 %v1792, %v1331
    %v1796 = vmul.f32 %v1792, %v1332
    %v1797 = vmul.f32 %v1792, %v1333
    %v1798 = vmul.f32 %v1792, %v1334
    %v1799 = vmul.f32 %v1792, %v1335
    %v1800 = vmul.f32 %v1792, %v1336
    %v1801 = vadd.f32 %v1783, %v1793
    %v1802 = vadd.f32 %v1784, %v1794
    %v1803 = vadd.f32 %v1785, %v1795
    %v1804 = vadd.f32 %v1786, %v1796
    %v1805 = vadd.f32 %v1787, %v1797
    %v1806 = vadd.f32 %v1788, %v1798
    %v1807 = vadd.f32 %v1789, %v1799
    %v1808 = vadd.f32 %v1790, %v1800
    %s1809 = sld [smem:[#allocation7 + $0x17]]
    %v1810 = vstv %s1809
    %v1811 = vmul.f32 %v1810, %v716
    %v1812 = vmul.f32 %v1810, %v717
    %v1813 = vmul.f32 %v1810, %v718
    %v1814 = vmul.f32 %v1810, %v719
    %v1815 = vmul.f32 %v1810, %v720
    %v1816 = vmul.f32 %v1810, %v721
    %v1817 = vmul.f32 %v1810, %v722
    %v1818 = vmul.f32 %v1810, %v723
    %v1819 = vadd.f32 %v1801, %v1811
    %v1820 = vadd.f32 %v1802, %v1812
    %v1821 = vadd.f32 %v1803, %v1813
    %v1822 = vadd.f32 %v1804, %v1814
    %v1823 = vadd.f32 %v1805, %v1815
    %v1824 = vadd.f32 %v1806, %v1816
    %v1825 = vadd.f32 %v1807, %v1817
    %v1826 = vadd.f32 %v1808, %v1818
    %s1827 = sld [smem:[#allocation7 + $0x18]]
    %v1828 = vstv %s1827
    %v1829 = vmul.f32 %v1828, 0.0
    %v1830 = vmul.f32 %v1828, %v1361
    %v1831 = vmul.f32 %v1828, %v1362
    %v1832 = vmul.f32 %v1828, %v1363
    %v1833 = vmul.f32 %v1828, %v1364
    %v1834 = vmul.f32 %v1828, %v1365
    %v1835 = vmul.f32 %v1828, %v1366
    %v1836 = vmul.f32 %v1828, %v1367
    %v1837 = vadd.f32 %v1819, %v1829
    %v1838 = vadd.f32 %v1820, %v1830
    %v1839 = vadd.f32 %v1821, %v1831
    %v1840 = vadd.f32 %v1822, %v1832
    %v1841 = vadd.f32 %v1823, %v1833
    %v1842 = vadd.f32 %v1824, %v1834
    %v1843 = vadd.f32 %v1825, %v1835
    %v1844 = vadd.f32 %v1826, %v1836
    %s1845 = sld [smem:[#allocation7 + $0x19]]
    %v1846 = vstv %s1845
    %v1847 = vmul.f32 %v1846, 0.0
    %v1848 = vmul.f32 %v1846, %v990
    %v1849 = vmul.f32 %v1846, %v991
    %v1850 = vmul.f32 %v1846, %v992
    %v1851 = vmul.f32 %v1846, %v993
    %v1852 = vmul.f32 %v1846, %v994
    %v1853 = vmul.f32 %v1846, %v995
    %v1854 = vmul.f32 %v1846, %v996
    %v1855 = vadd.f32 %v1837, %v1847
    %v1856 = vadd.f32 %v1838, %v1848
    %v1857 = vadd.f32 %v1839, %v1849
    %v1858 = vadd.f32 %v1840, %v1850
    %v1859 = vadd.f32 %v1841, %v1851
    %v1860 = vadd.f32 %v1842, %v1852
    %v1861 = vadd.f32 %v1843, %v1853
    %v1862 = vadd.f32 %v1844, %v1854
    %s1863 = sld [smem:[#allocation7 + $0x1a]]
    %v1864 = vstv %s1863
    %v1865 = vmul.f32 %v1864, %v1361
    %v1866 = vmul.f32 %v1864, %v1362
    %v1867 = vmul.f32 %v1864, %v1363
    %v1868 = vmul.f32 %v1864, %v1364
    %v1869 = vmul.f32 %v1864, %v1365
    %v1870 = vmul.f32 %v1864, %v1366
    %v1871 = vmul.f32 %v1864, %v1367
    %v1872 = vmul.f32 %v1864, %v1368
    %v1873 = vadd.f32 %v1855, %v1865
    %v1874 = vadd.f32 %v1856, %v1866
    %v1875 = vadd.f32 %v1857, %v1867
    %v1876 = vadd.f32 %v1858, %v1868
    %v1877 = vadd.f32 %v1859, %v1869
    %v1878 = vadd.f32 %v1860, %v1870
    %v1879 = vadd.f32 %v1861, %v1871
    %v1880 = vadd.f32 %v1862, %v1872
    %s1881 = sld [smem:[#allocation7 + $0x1b]]
    %v1882 = vstv %s1881
    %v1883 = vmul.f32 %v1882, %v990
    %v1884 = vmul.f32 %v1882, %v991
    %v1885 = vmul.f32 %v1882, %v992
    %v1886 = vmul.f32 %v1882, %v993
    %v1887 = vmul.f32 %v1882, %v994
    %v1888 = vmul.f32 %v1882, %v995
    %v1889 = vmul.f32 %v1882, %v996
    %v1890 = vmul.f32 %v1882, %v997
    %v1891 = vadd.f32 %v1873, %v1883
    %v1892 = vadd.f32 %v1874, %v1884
    %v1893 = vadd.f32 %v1875, %v1885
    %v1894 = vadd.f32 %v1876, %v1886
    %v1895 = vadd.f32 %v1877, %v1887
    %v1896 = vadd.f32 %v1878, %v1888
    %v1897 = vadd.f32 %v1879, %v1889
    %v1898 = vadd.f32 %v1880, %v1890
    %s1899 = sld [smem:[#allocation7 + $0x1c]]
    %v1900 = vstv %s1899
    %v1901 = vmul.f32 %v1900, 0.0
    %v1902 = vmul.f32 %v1900, %v1393
    %v1903 = vmul.f32 %v1900, %v1394
    %v1904 = vmul.f32 %v1900, %v1395
    %v1905 = vmul.f32 %v1900, %v1396
    %v1906 = vmul.f32 %v1900, %v1397
    %v1907 = vmul.f32 %v1900, %v1398
    %v1908 = vmul.f32 %v1900, %v1399
    %v1909 = vadd.f32 %v1891, %v1901
    %v1910 = vadd.f32 %v1892, %v1902
    %v1911 = vadd.f32 %v1893, %v1903
    %v1912 = vadd.f32 %v1894, %v1904
    %v1913 = vadd.f32 %v1895, %v1905
    %v1914 = vadd.f32 %v1896, %v1906
    %v1915 = vadd.f32 %v1897, %v1907
    %v1916 = vadd.f32 %v1898, %v1908
    %s1917 = sld [smem:[#allocation7 + $0x1d]]
    %v1918 = vstv %s1917
    %v1919 = vmul.f32 %v1918, 0.0
    %v1920 = vmul.f32 %v1918, %v1264
    %v1921 = vmul.f32 %v1918, %v1265
    %v1922 = vmul.f32 %v1918, %v1266
    %v1923 = vmul.f32 %v1918, %v1267
    %v1924 = vmul.f32 %v1918, %v1268
    %v1925 = vmul.f32 %v1918, %v1269
    %v1926 = vmul.f32 %v1918, %v1270
    %v1927 = vadd.f32 %v1909, %v1919
    %v1928 = vadd.f32 %v1910, %v1920
    %v1929 = vadd.f32 %v1911, %v1921
    %v1930 = vadd.f32 %v1912, %v1922
    %v1931 = vadd.f32 %v1913, %v1923
    %v1932 = vadd.f32 %v1914, %v1924
    %v1933 = vadd.f32 %v1915, %v1925
    %v1934 = vadd.f32 %v1916, %v1926
    %s1935 = sld [smem:[#allocation7 + $0x1e]]
    %v1936 = vstv %s1935
    %v1937 = vmul.f32 %v1936, %v1393
    %v1938 = vmul.f32 %v1936, %v1394
    %v1939 = vmul.f32 %v1936, %v1395
    %v1940 = vmul.f32 %v1936, %v1396
    %v1941 = vmul.f32 %v1936, %v1397
    %v1942 = vmul.f32 %v1936, %v1398
    %v1943 = vmul.f32 %v1936, %v1399
    %v1944 = vmul.f32 %v1936, %v1400
    %v1945 = vadd.f32 %v1927, %v1937
    %v1946 = vadd.f32 %v1928, %v1938
    %v1947 = vadd.f32 %v1929, %v1939
    %v1948 = vadd.f32 %v1930, %v1940
    %v1949 = vadd.f32 %v1931, %v1941
    %v1950 = vadd.f32 %v1932, %v1942
    %v1951 = vadd.f32 %v1933, %v1943
    %v1952 = vadd.f32 %v1934, %v1944
    %s1953 = sld [smem:[#allocation7 + $0x1f]]
    %v1954 = vstv %s1953
    %v1955 = vmul.f32 %v1954, %v1264
    %v1956 = vmul.f32 %v1954, %v1265
    %v1957 = vmul.f32 %v1954, %v1266
    %v1958 = vmul.f32 %v1954, %v1267
    %v1959 = vmul.f32 %v1954, %v1268
    %v1960 = vmul.f32 %v1954, %v1269
    %v1961 = vmul.f32 %v1954, %v1270
    %v1962 = vmul.f32 %v1954, %v1271
    %v1963 = vadd.f32 %v1945, %v1955
    %v1964 = vadd.f32 %v1946, %v1956
    %v1965 = vadd.f32 %v1947, %v1957
    %v1966 = vadd.f32 %v1948, %v1958
    %v1967 = vadd.f32 %v1949, %v1959
    %v1968 = vadd.f32 %v1950, %v1960
    %v1969 = vadd.f32 %v1951, %v1961
    %v1970 = vadd.f32 %v1952, %v1962
    %v1971 = vmax.f32 %v1963, %v1964
    %v1972 = vmax.f32 %v1965, %v1966
    %v1973 = vmax.f32 %v1967, %v1968
    %v1974 = vmax.f32 %v1969, %v1970
    %s1975 = sld [smem:[#allocation8 + $0x1]]
    %v1976 = vstv %s1975
    %v1977 = vadd.f32 %v1971, %v1976
    %v1978 = vadd.f32 %v1972, %v1976
    %v1979 = vadd.f32 %v1973, %v1976
    %v1980 = vadd.f32 %v1974, %v1976
    %s1981 = sld [smem:[#allocation7 + $0x20]]
    %v1982 = vstv %s1981
    %v1983 = vmul.f32 %v1982, 0.0
    %v1984 = vmul.f32 %v1982, %v1297
    %v1985 = vmul.f32 %v1982, %v1298
    %v1986 = vmul.f32 %v1982, %v1299
    %v1987 = vmul.f32 %v1982, %v1300
    %v1988 = vmul.f32 %v1982, %v1301
    %v1989 = vmul.f32 %v1982, %v1302
    %v1990 = vmul.f32 %v1982, %v1303
    %s1991 = sld [smem:[#allocation7 + $0x21]]
    %v1992 = vstv %s1991
    %v1993 = vmul.f32 %v1992, 0.0
    %v1994 = vmul.f32 %v1992, %v442
    %v1995 = vmul.f32 %v1992, %v443
    %v1996 = vmul.f32 %v1992, %v444
    %v1997 = vmul.f32 %v1992, %v445
    %v1998 = vmul.f32 %v1992, %v446
    %v1999 = vmul.f32 %v1992, %v447
    %v2000 = vmul.f32 %v1992, %v448
    %v2001 = vadd.f32 %v1983, %v1993
    %v2002 = vadd.f32 %v1984, %v1994
    %v2003 = vadd.f32 %v1985, %v1995
    %v2004 = vadd.f32 %v1986, %v1996
    %v2005 = vadd.f32 %v1987, %v1997
    %v2006 = vadd.f32 %v1988, %v1998
    %v2007 = vadd.f32 %v1989, %v1999
    %v2008 = vadd.f32 %v1990, %v2000
    %s2009 = sld [smem:[#allocation7 + $0x22]]
    %v2010 = vstv %s2009
    %v2011 = vmul.f32 %v2010, %v1297
    %v2012 = vmul.f32 %v2010, %v1298
    %v2013 = vmul.f32 %v2010, %v1299
    %v2014 = vmul.f32 %v2010, %v1300
    %v2015 = vmul.f32 %v2010, %v1301
    %v2016 = vmul.f32 %v2010, %v1302
    %v2017 = vmul.f32 %v2010, %v1303
    %v2018 = vmul.f32 %v2010, %v1304
    %v2019 = vadd.f32 %v2001, %v2011
    %v2020 = vadd.f32 %v2002, %v2012
    %v2021 = vadd.f32 %v2003, %v2013
    %v2022 = vadd.f32 %v2004, %v2014
    %v2023 = vadd.f32 %v2005, %v2015
    %v2024 = vadd.f32 %v2006, %v2016
    %v2025 = vadd.f32 %v2007, %v2017
    %v2026 = vadd.f32 %v2008, %v2018
    %s2027 = sld [smem:[#allocation7 + $0x23]]
    %v2028 = vstv %s2027
    %v2029 = vmul.f32 %v2028, %v442
    %v2030 = vmul.f32 %v2028, %v443
    %v2031 = vmul.f32 %v2028, %v444
    %v2032 = vmul.f32 %v2028, %v445
    %v2033 = vmul.f32 %v2028, %v446
    %v2034 = vmul.f32 %v2028, %v447
    %v2035 = vmul.f32 %v2028, %v448
    %v2036 = vmul.f32 %v2028, %v449
    %v2037 = vadd.f32 %v2019, %v2029
    %v2038 = vadd.f32 %v2020, %v2030
    %v2039 = vadd.f32 %v2021, %v2031
    %v2040 = vadd.f32 %v2022, %v2032
    %v2041 = vadd.f32 %v2023, %v2033
    %v2042 = vadd.f32 %v2024, %v2034
    %v2043 = vadd.f32 %v2025, %v2035
    %v2044 = vadd.f32 %v2026, %v2036
    %s2045 = sld [smem:[#allocation7 + $0x24]]
    %v2046 = vstv %s2045
    %v2047 = vmul.f32 %v2046, 0.0
    %v2048 = vmul.f32 %v2046, %v1329
    %v2049 = vmul.f32 %v2046, %v1330
    %v2050 = vmul.f32 %v2046, %v1331
    %v2051 = vmul.f32 %v2046, %v1332
    %v2052 = vmul.f32 %v2046, %v1333
    %v2053 = vmul.f32 %v2046, %v1334
    %v2054 = vmul.f32 %v2046, %v1335
    %v2055 = vadd.f32 %v2037, %v2047
    %v2056 = vadd.f32 %v2038, %v2048
    %v2057 = vadd.f32 %v2039, %v2049
    %v2058 = vadd.f32 %v2040, %v2050
    %v2059 = vadd.f32 %v2041, %v2051
    %v2060 = vadd.f32 %v2042, %v2052
    %v2061 = vadd.f32 %v2043, %v2053
    %v2062 = vadd.f32 %v2044, %v2054
    %s2063 = sld [smem:[#allocation7 + $0x25]]
    %v2064 = vstv %s2063
    %v2065 = vmul.f32 %v2064, 0.0
    %v2066 = vmul.f32 %v2064, %v716
    %v2067 = vmul.f32 %v2064, %v717
    %v2068 = vmul.f32 %v2064, %v718
    %v2069 = vmul.f32 %v2064, %v719
    %v2070 = vmul.f32 %v2064, %v720
    %v2071 = vmul.f32 %v2064, %v721
    %v2072 = vmul.f32 %v2064, %v722
    %v2073 = vadd.f32 %v2055, %v2065
    %v2074 = vadd.f32 %v2056, %v2066
    %v2075 = vadd.f32 %v2057, %v2067
    %v2076 = vadd.f32 %v2058, %v2068
    %v2077 = vadd.f32 %v2059, %v2069
    %v2078 = vadd.f32 %v2060, %v2070
    %v2079 = vadd.f32 %v2061, %v2071
    %v2080 = vadd.f32 %v2062, %v2072
    %s2081 = sld [smem:[#allocation7 + $0x26]]
    %v2082 = vstv %s2081
    %v2083 = vmul.f32 %v2082, %v1329
    %v2084 = vmul.f32 %v2082, %v1330
    %v2085 = vmul.f32 %v2082, %v1331
    %v2086 = vmul.f32 %v2082, %v1332
    %v2087 = vmul.f32 %v2082, %v1333
    %v2088 = vmul.f32 %v2082, %v1334
    %v2089 = vmul.f32 %v2082, %v1335
    %v2090 = vmul.f32 %v2082, %v1336
    %v2091 = vadd.f32 %v2073, %v2083
    %v2092 = vadd.f32 %v2074, %v2084
    %v2093 = vadd.f32 %v2075, %v2085
    %v2094 = vadd.f32 %v2076, %v2086
    %v2095 = vadd.f32 %v2077, %v2087
    %v2096 = vadd.f32 %v2078, %v2088
    %v2097 = vadd.f32 %v2079, %v2089
    %v2098 = vadd.f32 %v2080, %v2090
    %s2099 = sld [smem:[#allocation7 + $0x27]]
    %v2100 = vstv %s2099
    %v2101 = vmul.f32 %v2100, %v716
    %v2102 = vmul.f32 %v2100, %v717
    %v2103 = vmul.f32 %v2100, %v718
    %v2104 = vmul.f32 %v2100, %v719
    %v2105 = vmul.f32 %v2100, %v720
    %v2106 = vmul.f32 %v2100, %v721
    %v2107 = vmul.f32 %v2100, %v722
    %v2108 = vmul.f32 %v2100, %v723
    %v2109 = vadd.f32 %v2091, %v2101
    %v2110 = vadd.f32 %v2092, %v2102
    %v2111 = vadd.f32 %v2093, %v2103
    %v2112 = vadd.f32 %v2094, %v2104
    %v2113 = vadd.f32 %v2095, %v2105
    %v2114 = vadd.f32 %v2096, %v2106
    %v2115 = vadd.f32 %v2097, %v2107
    %v2116 = vadd.f32 %v2098, %v2108
    %s2117 = sld [smem:[#allocation7 + $0x28]]
    %v2118 = vstv %s2117
    %v2119 = vmul.f32 %v2118, 0.0
    %v2120 = vmul.f32 %v2118, %v1361
    %v2121 = vmul.f32 %v2118, %v1362
    %v2122 = vmul.f32 %v2118, %v1363
    %v2123 = vmul.f32 %v2118, %v1364
    %v2124 = vmul.f32 %v2118, %v1365
    %v2125 = vmul.f32 %v2118, %v1366
    %v2126 = vmul.f32 %v2118, %v1367
    %v2127 = vadd.f32 %v2109, %v2119
    %v2128 = vadd.f32 %v2110, %v2120
    %v2129 = vadd.f32 %v2111, %v2121
    %v2130 = vadd.f32 %v2112, %v2122
    %v2131 = vadd.f32 %v2113, %v2123
    %v2132 = vadd.f32 %v2114, %v2124
    %v2133 = vadd.f32 %v2115, %v2125
    %v2134 = vadd.f32 %v2116, %v2126
    %s2135 = sld [smem:[#allocation7 + $0x29]]
    %v2136 = vstv %s2135
    %v2137 = vmul.f32 %v2136, 0.0
    %v2138 = vmul.f32 %v2136, %v990
    %v2139 = vmul.f32 %v2136, %v991
    %v2140 = vmul.f32 %v2136, %v992
    %v2141 = vmul.f32 %v2136, %v993
    %v2142 = vmul.f32 %v2136, %v994
    %v2143 = vmul.f32 %v2136, %v995
    %v2144 = vmul.f32 %v2136, %v996
    %v2145 = vadd.f32 %v2127, %v2137
    %v2146 = vadd.f32 %v2128, %v2138
    %v2147 = vadd.f32 %v2129, %v2139
    %v2148 = vadd.f32 %v2130, %v2140
    %v2149 = vadd.f32 %v2131, %v2141
    %v2150 = vadd.f32 %v2132, %v2142
    %v2151 = vadd.f32 %v2133, %v2143
    %v2152 = vadd.f32 %v2134, %v2144
    %s2153 = sld [smem:[#allocation7 + $0x2a]]
    %v2154 = vstv %s2153
    %v2155 = vmul.f32 %v2154, %v1361
    %v2156 = vmul.f32 %v2154, %v1362
    %v2157 = vmul.f32 %v2154, %v1363
    %v2158 = vmul.f32 %v2154, %v1364
    %v2159 = vmul.f32 %v2154, %v1365
    %v2160 = vmul.f32 %v2154, %v1366
    %v2161 = vmul.f32 %v2154, %v1367
    %v2162 = vmul.f32 %v2154, %v1368
    %v2163 = vadd.f32 %v2145, %v2155
    %v2164 = vadd.f32 %v2146, %v2156
    %v2165 = vadd.f32 %v2147, %v2157
    %v2166 = vadd.f32 %v2148, %v2158
    %v2167 = vadd.f32 %v2149, %v2159
    %v2168 = vadd.f32 %v2150, %v2160
    %v2169 = vadd.f32 %v2151, %v2161
    %v2170 = vadd.f32 %v2152, %v2162
    %s2171 = sld [smem:[#allocation7 + $0x2b]]
    %v2172 = vstv %s2171
    %v2173 = vmul.f32 %v2172, %v990
    %v2174 = vmul.f32 %v2172, %v991
    %v2175 = vmul.f32 %v2172, %v992
    %v2176 = vmul.f32 %v2172, %v993
    %v2177 = vmul.f32 %v2172, %v994
    %v2178 = vmul.f32 %v2172, %v995
    %v2179 = vmul.f32 %v2172, %v996
    %v2180 = vmul.f32 %v2172, %v997
    %v2181 = vadd.f32 %v2163, %v2173
    %v2182 = vadd.f32 %v2164, %v2174
    %v2183 = vadd.f32 %v2165, %v2175
    %v2184 = vadd.f32 %v2166, %v2176
    %v2185 = vadd.f32 %v2167, %v2177
    %v2186 = vadd.f32 %v2168, %v2178
    %v2187 = vadd.f32 %v2169, %v2179
    %v2188 = vadd.f32 %v2170, %v2180
    %s2189 = sld [smem:[#allocation7 + $0x2c]]
    %v2190 = vstv %s2189
    %v2191 = vmul.f32 %v2190, 0.0
    %v2192 = vmul.f32 %v2190, %v1393
    %v2193 = vmul.f32 %v2190, %v1394
    %v2194 = vmul.f32 %v2190, %v1395
    %v2195 = vmul.f32 %v2190, %v1396
    %v2196 = vmul.f32 %v2190, %v1397
    %v2197 = vmul.f32 %v2190, %v1398
    %v2198 = vmul.f32 %v2190, %v1399
    %v2199 = vadd.f32 %v2181, %v2191
    %v2200 = vadd.f32 %v2182, %v2192
    %v2201 = vadd.f32 %v2183, %v2193
    %v2202 = vadd.f32 %v2184, %v2194
    %v2203 = vadd.f32 %v2185, %v2195
    %v2204 = vadd.f32 %v2186, %v2196
    %v2205 = vadd.f32 %v2187, %v2197
    %v2206 = vadd.f32 %v2188, %v2198
    %s2207 = sld [smem:[#allocation7 + $0x2d]]
    %v2208 = vstv %s2207
    %v2209 = vmul.f32 %v2208, 0.0
    %v2210 = vmul.f32 %v2208, %v1264
    %v2211 = vmul.f32 %v2208, %v1265
    %v2212 = vmul.f32 %v2208, %v1266
    %v2213 = vmul.f32 %v2208, %v1267
    %v2214 = vmul.f32 %v2208, %v1268
    %v2215 = vmul.f32 %v2208, %v1269
    %v2216 = vmul.f32 %v2208, %v1270
    %v2217 = vadd.f32 %v2199, %v2209
    %v2218 = vadd.f32 %v2200, %v2210
    %v2219 = vadd.f32 %v2201, %v2211
    %v2220 = vadd.f32 %v2202, %v2212
    %v2221 = vadd.f32 %v2203, %v2213
    %v2222 = vadd.f32 %v2204, %v2214
    %v2223 = vadd.f32 %v2205, %v2215
    %v2224 = vadd.f32 %v2206, %v2216
    %s2225 = sld [smem:[#allocation7 + $0x2e]]
    %v2226 = vstv %s2225
    %v2227 = vmul.f32 %v2226, %v1393
    %v2228 = vmul.f32 %v2226, %v1394
    %v2229 = vmul.f32 %v2226, %v1395
    %v2230 = vmul.f32 %v2226, %v1396
    %v2231 = vmul.f32 %v2226, %v1397
    %v2232 = vmul.f32 %v2226, %v1398
    %v2233 = vmul.f32 %v2226, %v1399
    %v2234 = vmul.f32 %v2226, %v1400
    %v2235 = vadd.f32 %v2217, %v2227
    %v2236 = vadd.f32 %v2218, %v2228
    %v2237 = vadd.f32 %v2219, %v2229
    %v2238 = vadd.f32 %v2220, %v2230
    %v2239 = vadd.f32 %v2221, %v2231
    %v2240 = vadd.f32 %v2222, %v2232
    %v2241 = vadd.f32 %v2223, %v2233
    %v2242 = vadd.f32 %v2224, %v2234
    %s2243 = sld [smem:[#allocation7 + $0x2f]]
    %v2244 = vstv %s2243
    %v2245 = vmul.f32 %v2244, %v1264
    %v2246 = vmul.f32 %v2244, %v1265
    %v2247 = vmul.f32 %v2244, %v1266
    %v2248 = vmul.f32 %v2244, %v1267
    %v2249 = vmul.f32 %v2244, %v1268
    %v2250 = vmul.f32 %v2244, %v1269
    %v2251 = vmul.f32 %v2244, %v1270
    %v2252 = vmul.f32 %v2244, %v1271
    %v2253 = vadd.f32 %v2235, %v2245
    %v2254 = vadd.f32 %v2236, %v2246
    %v2255 = vadd.f32 %v2237, %v2247
    %v2256 = vadd.f32 %v2238, %v2248
    %v2257 = vadd.f32 %v2239, %v2249
    %v2258 = vadd.f32 %v2240, %v2250
    %v2259 = vadd.f32 %v2241, %v2251
    %v2260 = vadd.f32 %v2242, %v2252
    %v2261 = vmax.f32 %v2253, %v2254
    %v2262 = vmax.f32 %v2255, %v2256
    %v2263 = vmax.f32 %v2257, %v2258
    %v2264 = vmax.f32 %v2259, %v2260
    %s2265 = sld [smem:[#allocation8 + $0x2]]
    %v2266 = vstv %s2265
    %v2267 = vadd.f32 %v2261, %v2266
    %v2268 = vadd.f32 %v2262, %v2266
    %v2269 = vadd.f32 %v2263, %v2266
    %v2270 = vadd.f32 %v2264, %v2266
    %s2271 = sld [smem:[#allocation7 + $0x30]]
    %v2272 = vstv %s2271
    %v2273 = vmul.f32 %v2272, 0.0
    %v2274 = vmul.f32 %v2272, %v1297
    %v2275 = vmul.f32 %v2272, %v1298
    %v2276 = vmul.f32 %v2272, %v1299
    %v2277 = vmul.f32 %v2272, %v1300
    %v2278 = vmul.f32 %v2272, %v1301
    %v2279 = vmul.f32 %v2272, %v1302
    %v2280 = vmul.f32 %v2272, %v1303
    %s2281 = sld [smem:[#allocation7 + $0x31]]
    %v2282 = vstv %s2281
    %v2283 = vmul.f32 %v2282, 0.0
    %v2284 = vmul.f32 %v2282, %v442
    %v2285 = vmul.f32 %v2282, %v443
    %v2286 = vmul.f32 %v2282, %v444
    %v2287 = vmul.f32 %v2282, %v445
    %v2288 = vmul.f32 %v2282, %v446
    %v2289 = vmul.f32 %v2282, %v447
    %v2290 = vmul.f32 %v2282, %v448
    %v2291 = vadd.f32 %v2273, %v2283
    %v2292 = vadd.f32 %v2274, %v2284
    %v2293 = vadd.f32 %v2275, %v2285
    %v2294 = vadd.f32 %v2276, %v2286
    %v2295 = vadd.f32 %v2277, %v2287
    %v2296 = vadd.f32 %v2278, %v2288
    %v2297 = vadd.f32 %v2279, %v2289
    %v2298 = vadd.f32 %v2280, %v2290
    %s2299 = sld [smem:[#allocation7 + $0x32]]
    %v2300 = vstv %s2299
    %v2301 = vmul.f32 %v2300, %v1297
    %v2302 = vmul.f32 %v2300, %v1298
    %v2303 = vmul.f32 %v2300, %v1299
    %v2304 = vmul.f32 %v2300, %v1300
    %v2305 = vmul.f32 %v2300, %v1301
    %v2306 = vmul.f32 %v2300, %v1302
    %v2307 = vmul.f32 %v2300, %v1303
    %v2308 = vmul.f32 %v2300, %v1304
    %v2309 = vadd.f32 %v2291, %v2301
    %v2310 = vadd.f32 %v2292, %v2302
    %v2311 = vadd.f32 %v2293, %v2303
    %v2312 = vadd.f32 %v2294, %v2304
    %v2313 = vadd.f32 %v2295, %v2305
    %v2314 = vadd.f32 %v2296, %v2306
    %v2315 = vadd.f32 %v2297, %v2307
    %v2316 = vadd.f32 %v2298, %v2308
    %s2317 = sld [smem:[#allocation7 + $0x33]]
    %v2318 = vstv %s2317
    %v2319 = vmul.f32 %v2318, %v442
    %v2320 = vmul.f32 %v2318, %v443
    %v2321 = vmul.f32 %v2318, %v444
    %v2322 = vmul.f32 %v2318, %v445
    %v2323 = vmul.f32 %v2318, %v446
    %v2324 = vmul.f32 %v2318, %v447
    %v2325 = vmul.f32 %v2318, %v448
    %v2326 = vmul.f32 %v2318, %v449
    %v2327 = vadd.f32 %v2309, %v2319
    %v2328 = vadd.f32 %v2310, %v2320
    %v2329 = vadd.f32 %v2311, %v2321
    %v2330 = vadd.f32 %v2312, %v2322
    %v2331 = vadd.f32 %v2313, %v2323
    %v2332 = vadd.f32 %v2314, %v2324
    %v2333 = vadd.f32 %v2315, %v2325
    %v2334 = vadd.f32 %v2316, %v2326
    %s2335 = sld [smem:[#allocation7 + $0x34]]
    %v2336 = vstv %s2335
    %v2337 = vmul.f32 %v2336, 0.0
    %v2338 = vmul.f32 %v2336, %v1329
    %v2339 = vmul.f32 %v2336, %v1330
    %v2340 = vmul.f32 %v2336, %v1331
    %v2341 = vmul.f32 %v2336, %v1332
    %v2342 = vmul.f32 %v2336, %v1333
    %v2343 = vmul.f32 %v2336, %v1334
    %v2344 = vmul.f32 %v2336, %v1335
    %v2345 = vadd.f32 %v2327, %v2337
    %v2346 = vadd.f32 %v2328, %v2338
    %v2347 = vadd.f32 %v2329, %v2339
    %v2348 = vadd.f32 %v2330, %v2340
    %v2349 = vadd.f32 %v2331, %v2341
    %v2350 = vadd.f32 %v2332, %v2342
    %v2351 = vadd.f32 %v2333, %v2343
    %v2352 = vadd.f32 %v2334, %v2344
    %s2353 = sld [smem:[#allocation7 + $0x35]]
    %v2354 = vstv %s2353
    %v2355 = vmul.f32 %v2354, 0.0
    %v2356 = vmul.f32 %v2354, %v716
    %v2357 = vmul.f32 %v2354, %v717
    %v2358 = vmul.f32 %v2354, %v718
    %v2359 = vmul.f32 %v2354, %v719
    %v2360 = vmul.f32 %v2354, %v720
    %v2361 = vmul.f32 %v2354, %v721
    %v2362 = vmul.f32 %v2354, %v722
    %v2363 = vadd.f32 %v2345, %v2355
    %v2364 = vadd.f32 %v2346, %v2356
    %v2365 = vadd.f32 %v2347, %v2357
    %v2366 = vadd.f32 %v2348, %v2358
    %v2367 = vadd.f32 %v2349, %v2359
    %v2368 = vadd.f32 %v2350, %v2360
    %v2369 = vadd.f32 %v2351, %v2361
    %v2370 = vadd.f32 %v2352, %v2362
    %s2371 = sld [smem:[#allocation7 + $0x36]]
    %v2372 = vstv %s2371
    %v2373 = vmul.f32 %v2372, %v1329
    %v2374 = vmul.f32 %v2372, %v1330
    %v2375 = vmul.f32 %v2372, %v1331
    %v2376 = vmul.f32 %v2372, %v1332
    %v2377 = vmul.f32 %v2372, %v1333
    %v2378 = vmul.f32 %v2372, %v1334
    %v2379 = vmul.f32 %v2372, %v1335
    %v2380 = vmul.f32 %v2372, %v1336
    %v2381 = vadd.f32 %v2363, %v2373
    %v2382 = vadd.f32 %v2364, %v2374
    %v2383 = vadd.f32 %v2365, %v2375
    %v2384 = vadd.f32 %v2366, %v2376
    %v2385 = vadd.f32 %v2367, %v2377
    %v2386 = vadd.f32 %v2368, %v2378
    %v2387 = vadd.f32 %v2369, %v2379
    %v2388 = vadd.f32 %v2370, %v2380
    %s2389 = sld [smem:[#allocation7 + $0x37]]
    %v2390 = vstv %s2389
    %v2391 = vmul.f32 %v2390, %v716
    %v2392 = vmul.f32 %v2390, %v717
    %v2393 = vmul.f32 %v2390, %v718
    %v2394 = vmul.f32 %v2390, %v719
    %v2395 = vmul.f32 %v2390, %v720
    %v2396 = vmul.f32 %v2390, %v721
    %v2397 = vmul.f32 %v2390, %v722
    %v2398 = vmul.f32 %v2390, %v723
    %v2399 = vadd.f32 %v2381, %v2391
    %v2400 = vadd.f32 %v2382, %v2392
    %v2401 = vadd.f32 %v2383, %v2393
    %v2402 = vadd.f32 %v2384, %v2394
    %v2403 = vadd.f32 %v2385, %v2395
    %v2404 = vadd.f32 %v2386, %v2396
    %v2405 = vadd.f32 %v2387, %v2397
    %v2406 = vadd.f32 %v2388, %v2398
    %s2407 = sld [smem:[#allocation7 + $0x38]]
    %v2408 = vstv %s2407
    %v2409 = vmul.f32 %v2408, 0.0
    %v2410 = vmul.f32 %v2408, %v1361
    %v2411 = vmul.f32 %v2408, %v1362
    %v2412 = vmul.f32 %v2408, %v1363
    %v2413 = vmul.f32 %v2408, %v1364
    %v2414 = vmul.f32 %v2408, %v1365
    %v2415 = vmul.f32 %v2408, %v1366
    %v2416 = vmul.f32 %v2408, %v1367
    %v2417 = vadd.f32 %v2399, %v2409
    %v2418 = vadd.f32 %v2400, %v2410
    %v2419 = vadd.f32 %v2401, %v2411
    %v2420 = vadd.f32 %v2402, %v2412
    %v2421 = vadd.f32 %v2403, %v2413
    %v2422 = vadd.f32 %v2404, %v2414
    %v2423 = vadd.f32 %v2405, %v2415
    %v2424 = vadd.f32 %v2406, %v2416
    %s2425 = sld [smem:[#allocation7 + $0x39]]
    %v2426 = vstv %s2425
    %v2427 = vmul.f32 %v2426, 0.0
    %v2428 = vmul.f32 %v2426, %v990
    %v2429 = vmul.f32 %v2426, %v991
    %v2430 = vmul.f32 %v2426, %v992
    %v2431 = vmul.f32 %v2426, %v993
    %v2432 = vmul.f32 %v2426, %v994
    %v2433 = vmul.f32 %v2426, %v995
    %v2434 = vmul.f32 %v2426, %v996
    %v2435 = vadd.f32 %v2417, %v2427
    %v2436 = vadd.f32 %v2418, %v2428
    %v2437 = vadd.f32 %v2419, %v2429
    %v2438 = vadd.f32 %v2420, %v2430
    %v2439 = vadd.f32 %v2421, %v2431
    %v2440 = vadd.f32 %v2422, %v2432
    %v2441 = vadd.f32 %v2423, %v2433
    %v2442 = vadd.f32 %v2424, %v2434
    %s2443 = sld [smem:[#allocation7 + $0x3a]]
    %v2444 = vstv %s2443
    %v2445 = vmul.f32 %v2444, %v1361
    %v2446 = vmul.f32 %v2444, %v1362
    %v2447 = vmul.f32 %v2444, %v1363
    %v2448 = vmul.f32 %v2444, %v1364
    %v2449 = vmul.f32 %v2444, %v1365
    %v2450 = vmul.f32 %v2444, %v1366
    %v2451 = vmul.f32 %v2444, %v1367
    %v2452 = vmul.f32 %v2444, %v1368
    %v2453 = vadd.f32 %v2435, %v2445
    %v2454 = vadd.f32 %v2436, %v2446
    %v2455 = vadd.f32 %v2437, %v2447
    %v2456 = vadd.f32 %v2438, %v2448
    %v2457 = vadd.f32 %v2439, %v2449
    %v2458 = vadd.f32 %v2440, %v2450
    %v2459 = vadd.f32 %v2441, %v2451
    %v2460 = vadd.f32 %v2442, %v2452
    %s2461 = sld [smem:[#allocation7 + $0x3b]]
    %v2462 = vstv %s2461
    %v2463 = vmul.f32 %v2462, %v990
    %v2464 = vmul.f32 %v2462, %v991
    %v2465 = vmul.f32 %v2462, %v992
    %v2466 = vmul.f32 %v2462, %v993
    %v2467 = vmul.f32 %v2462, %v994
    %v2468 = vmul.f32 %v2462, %v995
    %v2469 = vmul.f32 %v2462, %v996
    %v2470 = vmul.f32 %v2462, %v997
    %v2471 = vadd.f32 %v2453, %v2463
    %v2472 = vadd.f32 %v2454, %v2464
    %v2473 = vadd.f32 %v2455, %v2465
    %v2474 = vadd.f32 %v2456, %v2466
    %v2475 = vadd.f32 %v2457, %v2467
    %v2476 = vadd.f32 %v2458, %v2468
    %v2477 = vadd.f32 %v2459, %v2469
    %v2478 = vadd.f32 %v2460, %v2470
    %s2479 = sld [smem:[#allocation7 + $0x3c]]
    %v2480 = vstv %s2479
    %v2481 = vmul.f32 %v2480, 0.0
    %v2482 = vmul.f32 %v2480, %v1393
    %v2483 = vmul.f32 %v2480, %v1394
    %v2484 = vmul.f32 %v2480, %v1395
    %v2485 = vmul.f32 %v2480, %v1396
    %v2486 = vmul.f32 %v2480, %v1397
    %v2487 = vmul.f32 %v2480, %v1398
    %v2488 = vmul.f32 %v2480, %v1399
    %v2489 = vadd.f32 %v2471, %v2481
    %v2490 = vadd.f32 %v2472, %v2482
    %v2491 = vadd.f32 %v2473, %v2483
    %v2492 = vadd.f32 %v2474, %v2484
    %v2493 = vadd.f32 %v2475, %v2485
    %v2494 = vadd.f32 %v2476, %v2486
    %v2495 = vadd.f32 %v2477, %v2487
    %v2496 = vadd.f32 %v2478, %v2488
    %s2497 = sld [smem:[#allocation7 + $0x3d]]
    %v2498 = vstv %s2497
    %v2499 = vmul.f32 %v2498, 0.0
    %v2500 = vmul.f32 %v2498, %v1264
    %v2501 = vmul.f32 %v2498, %v1265
    %v2502 = vmul.f32 %v2498, %v1266
    %v2503 = vmul.f32 %v2498, %v1267
    %v2504 = vmul.f32 %v2498, %v1268
    %v2505 = vmul.f32 %v2498, %v1269
    %v2506 = vmul.f32 %v2498, %v1270
    %v2507 = vadd.f32 %v2489, %v2499
    %v2508 = vadd.f32 %v2490, %v2500
    %v2509 = vadd.f32 %v2491, %v2501
    %v2510 = vadd.f32 %v2492, %v2502
    %v2511 = vadd.f32 %v2493, %v2503
    %v2512 = vadd.f32 %v2494, %v2504
    %v2513 = vadd.f32 %v2495, %v2505
    %v2514 = vadd.f32 %v2496, %v2506
    %s2515 = sld [smem:[#allocation7 + $0x3e]]
    %v2516 = vstv %s2515
    %v2517 = vmul.f32 %v2516, %v1393
    %v2518 = vmul.f32 %v2516, %v1394
    %v2519 = vmul.f32 %v2516, %v1395
    %v2520 = vmul.f32 %v2516, %v1396
    %v2521 = vmul.f32 %v2516, %v1397
    %v2522 = vmul.f32 %v2516, %v1398
    %v2523 = vmul.f32 %v2516, %v1399
    %v2524 = vmul.f32 %v2516, %v1400
    %v2525 = vadd.f32 %v2507, %v2517
    %v2526 = vadd.f32 %v2508, %v2518
    %v2527 = vadd.f32 %v2509, %v2519
    %v2528 = vadd.f32 %v2510, %v2520
    %v2529 = vadd.f32 %v2511, %v2521
    %v2530 = vadd.f32 %v2512, %v2522
    %v2531 = vadd.f32 %v2513, %v2523
    %v2532 = vadd.f32 %v2514, %v2524
    %s2533 = sld [smem:[#allocation7 + $0x3f]]
    %v2534 = vstv %s2533
    %v2535 = vmul.f32 %v2534, %v1264
    %v2536 = vmul.f32 %v2534, %v1265
    %v2537 = vmul.f32 %v2534, %v1266
    %v2538 = vmul.f32 %v2534, %v1267
    %v2539 = vmul.f32 %v2534, %v1268
    %v2540 = vmul.f32 %v2534, %v1269
    %v2541 = vmul.f32 %v2534, %v1270
    %v2542 = vmul.f32 %v2534, %v1271
    %v2543 = vadd.f32 %v2525, %v2535
    %v2544 = vadd.f32 %v2526, %v2536
    %v2545 = vadd.f32 %v2527, %v2537
    %v2546 = vadd.f32 %v2528, %v2538
    %v2547 = vadd.f32 %v2529, %v2539
    %v2548 = vadd.f32 %v2530, %v2540
    %v2549 = vadd.f32 %v2531, %v2541
    %v2550 = vadd.f32 %v2532, %v2542
    %v2551 = vmax.f32 %v2543, %v2544
    %v2552 = vmax.f32 %v2545, %v2546
    %v2553 = vmax.f32 %v2547, %v2548
    %v2554 = vmax.f32 %v2549, %v2550
    %s2555 = sld [smem:[#allocation8 + $0x3]]
    %v2556 = vstv %s2555
    %v2557 = vadd.f32 %v2551, %v2556
    %v2558 = vadd.f32 %v2552, %v2556
    %v2559 = vadd.f32 %v2553, %v2556
    %v2560 = vadd.f32 %v2554, %v2556
    %v2577 = vrot.slane %v1687, 1
    %v2578 = vrot.slane %v1688, 1
    %v2579 = vrot.slane %v1689, 1
    %v2580 = vrot.slane %v1690, 1
    %v2581 = vrot.slane %v1977, 1
    %v2582 = vrot.slane %v1978, 1
    %v2583 = vrot.slane %v1979, 1
    %v2584 = vrot.slane %v1980, 1
    %v2585 = vrot.slane %v2267, 1
    %v2586 = vrot.slane %v2268, 1
    %v2587 = vrot.slane %v2269, 1
    %v2588 = vrot.slane %v2270, 1
    %v2589 = vrot.slane %v2557, 1
    %v2590 = vrot.slane %v2558, 1
    %v2591 = vrot.slane %v2559, 1
    %v2592 = vrot.slane %v2560, 1
    %v2609 = vmax.f32 %v1687, %v2577
    %v2610 = vmax.f32 %v1688, %v2578
    %v2611 = vmax.f32 %v1689, %v2579
    %v2612 = vmax.f32 %v1690, %v2580
    %v2613 = vmax.f32 %v1977, %v2581
    %v2614 = vmax.f32 %v1978, %v2582
    %v2615 = vmax.f32 %v1979, %v2583
    %v2616 = vmax.f32 %v1980, %v2584
    %v2617 = vmax.f32 %v2267, %v2585
    %v2618 = vmax.f32 %v2268, %v2586
    %v2619 = vmax.f32 %v2269, %v2587
    %v2620 = vmax.f32 %v2270, %v2588
    %v2621 = vmax.f32 %v2557, %v2589
    %v2622 = vmax.f32 %v2558, %v2590
    %v2623 = vmax.f32 %v2559, %v2591
    %v2624 = vmax.f32 %v2560, %v2592
    %v2625 = vmax.f32 %v2609, 0.0
    %v2626 = vmax.f32 %v2610, 0.0
    %v2627 = vmax.f32 %v2611, 0.0
    %v2628 = vmax.f32 %v2612, 0.0
    %v2629 = vmax.f32 %v2613, 0.0
    %v2630 = vmax.f32 %v2614, 0.0
    %v2631 = vmax.f32 %v2615, 0.0
    %v2632 = vmax.f32 %v2616, 0.0
    %v2633 = vmax.f32 %v2617, 0.0
    %v2634 = vmax.f32 %v2618, 0.0
    %v2635 = vmax.f32 %v2619, 0.0
    %v2636 = vmax.f32 %v2620, 0.0
    %v2637 = vmax.f32 %v2621, 0.0
    %v2638 = vmax.f32 %v2622, 0.0
    %v2639 = vmax.f32 %v2623, 0.0
    %v2640 = vmax.f32 %v2624, 0.0
    %v2641 = vld [vmem:[%s6] sm:$0x7f]
    %v2642 = vld [vmem:[%s6 + $0x8] sm:$0x7f]
    %v2643 = vld [vmem:[%s6 + $0x10] sm:$0x7f]
    %v2644 = vld [vmem:[%s6 + $0x18] sm:$0x7f]
    %v2645 = vld [vmem:[%s6 + $0x20] sm:$0x7f]
    %v2646 = vld [vmem:[%s6 + $0x28] sm:$0x7f]
    %v2647 = vld [vmem:[%s6 + $0x30] sm:$0x7f]
    %v2648 = vld [vmem:[%s6 + $0x38] sm:$0x7f]
    %v2649 = vld [vmem:[%s6 + $0x40] sm:$0x7f]
    %v2650 = vld [vmem:[%s6 + $0x48] sm:$0x7f]
    %v2651 = vld [vmem:[%s6 + $0x50] sm:$0x7f]
    %v2652 = vld [vmem:[%s6 + $0x58] sm:$0x7f]
    %v2653 = vld [vmem:[%s6 + $0x60] sm:$0x7f]
    %v2654 = vld [vmem:[%s6 + $0x68] sm:$0x7f]
    %v2655 = vld [vmem:[%s6 + $0x70] sm:$0x7f]
    %v2656 = vld [vmem:[%s6 + $0x78] sm:$0x7f]
    %v2657 = vld [vmem:[%s6 + $0x80] sm:$0x7f]
    %v2658 = vld [vmem:[%s6 + $0x88] sm:$0x7f]
    %v2659 = vld [vmem:[%s6 + $0x90] sm:$0x7f]
    %v2660 = vld [vmem:[%s6 + $0x98] sm:$0x7f]
    %v2661 = vld [vmem:[%s6 + $0xa0] sm:$0x7f]
    %v2662 = vld [vmem:[%s6 + $0xa8] sm:$0x7f]
    %v2663 = vld [vmem:[%s6 + $0xb0] sm:$0x7f]
    %v2664 = vld [vmem:[%s6 + $0xb8] sm:$0x7f]
    %v2665 = vld [vmem:[%s6 + $0xc0] sm:$0x7f]
    %v2666 = vld [vmem:[%s6 + $0xc8] sm:$0x7f]
    %v2667 = vld [vmem:[%s6 + $0xd0] sm:$0x7f]
    %v2668 = vld [vmem:[%s6 + $0xd8] sm:$0x7f]
    %v2669 = vld [vmem:[%s6 + $0xe0] sm:$0x7f]
    %v2670 = vld [vmem:[%s6 + $0xe8] sm:$0x7f]
    %v2671 = vld [vmem:[%s6 + $0xf0] sm:$0x7f]
    %v2672 = vld [vmem:[%s6 + $0xf8] sm:$0x7f]
    %v2673 = vld [vmem:[%s6 + $0x100] sm:$0x7f]
    %v2674 = vld [vmem:[%s6 + $0x108] sm:$0x7f]
    %v2675 = vld [vmem:[%s6 + $0x110] sm:$0x7f]
    %v2676 = vld [vmem:[%s6 + $0x118] sm:$0x7f]
    %v2677 = vld [vmem:[%s6 + $0x120] sm:$0x7f]
    %v2678 = vld [vmem:[%s6 + $0x128] sm:$0x7f]
    %v2679 = vld [vmem:[%s6 + $0x130] sm:$0x7f]
    %v2680 = vld [vmem:[%s6 + $0x138] sm:$0x7f]
    %v2681 = vld [vmem:[%s6 + $0x140] sm:$0x7f]
    %v2682 = vld [vmem:[%s6 + $0x148] sm:$0x7f]
    %v2683 = vld [vmem:[%s6 + $0x150] sm:$0x7f]
    %v2684 = vld [vmem:[%s6 + $0x158] sm:$0x7f]
    %v2685 = vld [vmem:[%s6 + $0x160] sm:$0x7f]
    %v2686 = vld [vmem:[%s6 + $0x168] sm:$0x7f]
    %v2687 = vld [vmem:[%s6 + $0x170] sm:$0x7f]
    %v2688 = vld [vmem:[%s6 + $0x178] sm:$0x7f]
    %v2689 = vld [vmem:[%s6 + $0x180] sm:$0x7f]
    %v2690 = vld [vmem:[%s6 + $0x188] sm:$0x7f]
    %v2691 = vld [vmem:[%s6 + $0x190] sm:$0x7f]
    %v2692 = vld [vmem:[%s6 + $0x198] sm:$0x7f]
    %v2693 = vld [vmem:[%s6 + $0x1a0] sm:$0x7f]
    %v2694 = vld [vmem:[%s6 + $0x1a8] sm:$0x7f]
    %v2695 = vld [vmem:[%s6 + $0x1b0] sm:$0x7f]
    %v2696 = vld [vmem:[%s6 + $0x1b8] sm:$0x7f]
    %v2697 = vld [vmem:[%s6 + $0x1c0] sm:$0x7f]
    %v2698 = vld [vmem:[%s6 + $0x1c8] sm:$0x7f]
    %v2699 = vld [vmem:[%s6 + $0x1d0] sm:$0x7f]
    %v2700 = vld [vmem:[%s6 + $0x1d8] sm:$0x7f]
    %v2701 = vld [vmem:[%s6 + $0x1e0] sm:$0x7f]
    %v2702 = vld [vmem:[%s6 + $0x1e8] sm:$0x7f]
    %v2703 = vld [vmem:[%s6 + $0x1f0] sm:$0x7f]
    %v2704 = vld [vmem:[%s6 + $0x1f8] sm:$0x7f]
    %v2705 = vmul.f32 %v2641, %v2625
    %v2706 = vmul.f32 %v2642, %v2625
    %v2707 = vmul.f32 %v2643, %v2625
    %v2708 = vmul.f32 %v2644, %v2625
    %v2709 = vmul.f32 %v2645, %v2626
    %v2710 = vmul.f32 %v2646, %v2626
    %v2711 = vmul.f32 %v2647, %v2626
    %v2712 = vmul.f32 %v2648, %v2626
    %v2713 = vadd.f32 %v2705, %v2709
    %v2714 = vadd.f32 %v2706, %v2710
    %v2715 = vadd.f32 %v2707, %v2711
    %v2716 = vadd.f32 %v2708, %v2712
    %v2717 = vmul.f32 %v2649, %v2627
    %v2718 = vmul.f32 %v2650, %v2627
    %v2719 = vmul.f32 %v2651, %v2627
    %v2720 = vmul.f32 %v2652, %v2627
    %v2721 = vadd.f32 %v2713, %v2717
    %v2722 = vadd.f32 %v2714, %v2718
    %v2723 = vadd.f32 %v2715, %v2719
    %v2724 = vadd.f32 %v2716, %v2720
    %v2725 = vmul.f32 %v2653, %v2628
    %v2726 = vmul.f32 %v2654, %v2628
    %v2727 = vmul.f32 %v2655, %v2628
    %v2728 = vmul.f32 %v2656, %v2628
    %v2729 = vadd.f32 %v2721, %v2725
    %v2730 = vadd.f32 %v2722, %v2726
    %v2731 = vadd.f32 %v2723, %v2727
    %v2732 = vadd.f32 %v2724, %v2728
    %v2733 = vmul.f32 %v2657, %v2629
    %v2734 = vmul.f32 %v2658, %v2629
    %v2735 = vmul.f32 %v2659, %v2629
    %v2736 = vmul.f32 %v2660, %v2629
    %v2737 = vadd.f32 %v2729, %v2733
    %v2738 = vadd.f32 %v2730, %v2734
    %v2739 = vadd.f32 %v2731, %v2735
    %v2740 = vadd.f32 %v2732, %v2736
    %v2741 = vmul.f32 %v2661, %v2630
    %v2742 = vmul.f32 %v2662, %v2630
    %v2743 = vmul.f32 %v2663, %v2630
    %v2744 = vmul.f32 %v2664, %v2630
    %v2745 = vadd.f32 %v2737, %v2741
    %v2746 = vadd.f32 %v2738, %v2742
    %v2747 = vadd.f32 %v2739, %v2743
    %v2748 = vadd.f32 %v2740, %v2744
    %v2749 = vmul.f32 %v2665, %v2631
    %v2750 = vmul.f32 %v2666, %v2631
    %v2751 = vmul.f32 %v2667, %v2631
    %v2752 = vmul.f32 %v2668, %v2631
    %v2753 = vadd.f32 %v2745, %v2749
    %v2754 = vadd.f32 %v2746, %v2750
    %v2755 = vadd.f32 %v2747, %v2751
    %v2756 = vadd.f32 %v2748, %v2752
    %v2757 = vmul.f32 %v2669, %v2632
    %v2758 = vmul.f32 %v2670, %v2632
    %v2759 = vmul.f32 %v2671, %v2632
    %v2760 = vmul.f32 %v2672, %v2632
    %v2761 = vadd.f32 %v2753, %v2757
    %v2762 = vadd.f32 %v2754, %v2758
    %v2763 = vadd.f32 %v2755, %v2759
    %v2764 = vadd.f32 %v2756, %v2760
    %v2765 = vmul.f32 %v2673, %v2633
    %v2766 = vmul.f32 %v2674, %v2633
    %v2767 = vmul.f32 %v2675, %v2633
    %v2768 = vmul.f32 %v2676, %v2633
    %v2769 = vadd.f32 %v2761, %v2765
    %v2770 = vadd.f32 %v2762, %v2766
    %v2771 = vadd.f32 %v2763, %v2767
    %v2772 = vadd.f32 %v2764, %v2768
    %v2773 = vmul.f32 %v2677, %v2634
    %v2774 = vmul.f32 %v2678, %v2634
    %v2775 = vmul.f32 %v2679, %v2634
    %v2776 = vmul.f32 %v2680, %v2634
    %v2777 = vadd.f32 %v2769, %v2773
    %v2778 = vadd.f32 %v2770, %v2774
    %v2779 = vadd.f32 %v2771, %v2775
    %v2780 = vadd.f32 %v2772, %v2776
    %v2781 = vmul.f32 %v2681, %v2635
    %v2782 = vmul.f32 %v2682, %v2635
    %v2783 = vmul.f32 %v2683, %v2635
    %v2784 = vmul.f32 %v2684, %v2635
    %v2785 = vadd.f32 %v2777, %v2781
    %v2786 = vadd.f32 %v2778, %v2782
    %v2787 = vadd.f32 %v2779, %v2783
    %v2788 = vadd.f32 %v2780, %v2784
    %v2789 = vmul.f32 %v2685, %v2636
    %v2790 = vmul.f32 %v2686, %v2636
    %v2791 = vmul.f32 %v2687, %v2636
    %v2792 = vmul.f32 %v2688, %v2636
    %v2793 = vadd.f32 %v2785, %v2789
    %v2794 = vadd.f32 %v2786, %v2790
    %v2795 = vadd.f32 %v2787, %v2791
    %v2796 = vadd.f32 %v2788, %v2792
    %v2797 = vmul.f32 %v2689, %v2637
    %v2798 = vmul.f32 %v2690, %v2637
    %v2799 = vmul.f32 %v2691, %v2637
    %v2800 = vmul.f32 %v2692, %v2637
    %v2801 = vadd.f32 %v2793, %v2797
    %v2802 = vadd.f32 %v2794, %v2798
    %v2803 = vadd.f32 %v2795, %v2799
    %v2804 = vadd.f32 %v2796, %v2800
    %v2805 = vmul.f32 %v2693, %v2638
    %v2806 = vmul.f32 %v2694, %v2638
    %v2807 = vmul.f32 %v2695, %v2638
    %v2808 = vmul.f32 %v2696, %v2638
    %v2809 = vadd.f32 %v2801, %v2805
    %v2810 = vadd.f32 %v2802, %v2806
    %v2811 = vadd.f32 %v2803, %v2807
    %v2812 = vadd.f32 %v2804, %v2808
    %v2813 = vmul.f32 %v2697, %v2639
    %v2814 = vmul.f32 %v2698, %v2639
    %v2815 = vmul.f32 %v2699, %v2639
    %v2816 = vmul.f32 %v2700, %v2639
    %v2817 = vadd.f32 %v2809, %v2813
    %v2818 = vadd.f32 %v2810, %v2814
    %v2819 = vadd.f32 %v2811, %v2815
    %v2820 = vadd.f32 %v2812, %v2816
    %v2821 = vmul.f32 %v2701, %v2640
    %v2822 = vmul.f32 %v2702, %v2640
    %v2823 = vmul.f32 %v2703, %v2640
    %v2824 = vmul.f32 %v2704, %v2640
    %v2825 = vadd.f32 %v2817, %v2821
    %v2826 = vadd.f32 %v2818, %v2822
    %v2827 = vadd.f32 %v2819, %v2823
    %v2828 = vadd.f32 %v2820, %v2824
    %vm2829 = vcmask 1046528
    %v2830 = vsel %vm2829, %v2825, 0.0
    %v2831 = vrot.slane %v2830, 4
    %v2832 = vadd.f32 %v2830, %v2831
    %v2833 = vrot.slane %v2832, 2
    %v2834 = vadd.f32 %v2832, %v2833
    %v2835 = vrot.slane %v2834, 1
    %v2836 = vadd.f32 %v2834, %v2835
    %v2837 = vsel %vm2829, %v2826, 0.0
    %v2838 = vrot.slane %v2837, 4
    %v2839 = vadd.f32 %v2837, %v2838
    %v2840 = vrot.slane %v2839, 2
    %v2841 = vadd.f32 %v2839, %v2840
    %v2842 = vrot.slane %v2841, 1
    %v2843 = vadd.f32 %v2841, %v2842
    %v2844 = vsel %vm2829, %v2827, 0.0
    %v2845 = vrot.slane %v2844, 4
    %v2846 = vadd.f32 %v2844, %v2845
    %v2847 = vrot.slane %v2846, 2
    %v2848 = vadd.f32 %v2846, %v2847
    %v2849 = vrot.slane %v2848, 1
    %v2850 = vadd.f32 %v2848, %v2849
    %v2851 = vsel %vm2829, %v2828, 0.0
    %v2852 = vrot.slane %v2851, 4
    %v2853 = vadd.f32 %v2851, %v2852
    %v2854 = vrot.slane %v2853, 2
    %v2855 = vadd.f32 %v2853, %v2854
    %v2856 = vrot.slane %v2855, 1
    %v2857 = vadd.f32 %v2855, %v2856
    %v2858 = vld [vmem:[%s7] sm:$0xf]
    %v2860 = vrot.slane %v2858, 1
    %v2861 = vrot.slane %v2858, 2
    %v2862 = vrot.slane %v2858, 3
    %v2867 = vadd.f32 %v2836, %v2858
    %v2868 = vadd.f32 %v2843, %v2860
    %v2869 = vadd.f32 %v2850, %v2861
    %v2870 = vadd.f32 %v2857, %v2862
    %v2875 = vrot.slane %v2868, 7
    %vm2876 = vcmask 1041409
    %v2877 = vsel %vm2876, %v2875, %v2867
    %v2878 = vrot.slane %v2869, 6
    %vm2879 = vcmask 1042434
    %v2880 = vsel %vm2879, %v2878, %v2877
    %v2881 = vrot.slane %v2870, 5
    %vm2882 = vcmask 1043459
    %v2883 = vsel %vm2882, %v2881, %v2880
    %2885 = vst [vmem:[#allocation10] sm:$0xf] %v2883
    // Predicated region
    $region50: #{tpu_custom_call.1} parent=1 // pred_check
      _
    $region51: #{tpu_custom_call.1} parent=1 // pred_check_branch
      %2887 = sbr.rel (0) target = $region53
    $region52: #{tpu_custom_call.1} parent=1 // pred_region
      %2889 = vsyncadd [#allocation3], 0
      %s2891 = sshll.u32 [#allocation10], 4
      %s2892 = int_to_ptr.vmem [resolvable:$true] %s2891
      %s2893 = sshll.u32 %s8, 4
      %s2894 = int_to_ptr.hbm [resolvable:$true] %s2893
      %2896 = dma.vmem_to_hbm [thread:$0]  %s2892, 64, %s2894, [#allocation3]
    $region53: #{tpu_custom_call.1} parent=1 // pred_fallthru
      _
    // Predicated region
    $region54: #{tpu_custom_call.1} parent=1 // pred_check
      _
    $region55: #{tpu_custom_call.1} parent=1 // pred_check_branch
      %2898 = sbr.rel (0) target = $region57
    $region56: #{tpu_custom_call.1} parent=1 // pred_region
      %2900 = dma.done [#allocation3], 64
    $region57: #{tpu_custom_call.1} parent=1 // pred_fallthru
      _
    %2901 = vsyncpa [#allocation3], 1
    %2902 = vsyncpa [#allocation4], 1
    %2903 = vsyncpa [#allocation6], 1
    %2904 = vsyncpa [#allocation9], 1

</llo_original>
